<compile_context>
chip_gen: v5e
topology: v5e:2x2
jax: 0.10.0
libtpu: 0.0.40
codegen_flags: <defaults>
</compile_context>

<pallas_src>
import jax
import jax.numpy as jnp
from jax.experimental import pallas as pl
from jax.experimental.pallas import tpu as pltpu


def _round_up(v, m):
    return (v + m - 1) // m * m


def _make_kernel(col_groups, c_in, n_taps, wp, ow, span, g_imgs, dtype):
    """Fused im2col + single-matmul kernel.

    col_groups: tuple of (col_off, ((tap_index, row_off), ...)) with static
      Python ints.  row_off * wp is always a multiple of 128 (lane aligned).
    """
    kc = n_taps * c_in + 1          # contraction depth (+1 = bias ones-row)

    def kernel(x_ref, w_ref, o_ref, im_ref):
        # Bias enters through an all-ones contraction row (last im2col row).
        im_ref[kc - 1:kc, :] = jnp.ones((1, g_imgs * ow), dtype)
        for g in range(g_imgs):                       # static unroll (small G)
            base = g * ow
            for c_off, group in col_groups:
                # One lane-unaligned slab load per distinct column offset.
                xc = x_ref[g, :, c_off:c_off + span]          # (Cin, span)
                for t, r_off in group:
                    # r_off*wp % 128 == 0 -> lane-aligned window of the slab.
                    im_ref[t * c_in:(t + 1) * c_in, base:base + ow] = (
                        xc[:, r_off * wp:r_off * wp + ow])
        # Single fused (Cout, Kc) @ (Kc, G*ow) MXU matmul, f32 accumulation.
        res = jnp.dot(w_ref[...], im_ref[...],
                      preferred_element_type=jnp.float32)     # (Cout, G*ow)
        for g in range(g_imgs):
            o_ref[g] = res[:, g * ow:(g + 1) * ow].astype(o_ref.dtype)

    return kernel


def multidilated_conv_sum(x, weights, biases, dilations, *, kernel_size=3,
                          padding=1, images_per_step=1):
    """Pallas forward of MultidilatedConv with comb_mode='sum' (default path).

    x:         (N, Cin, H, W) float32, NCHW (PyTorch layout)
    weights:   list of (Cout, Cin, K, K) — one per dilation branch
    biases:    list of (Cout,)
    dilations: list of Python ints, e.g. [1, 2, 4]
    images_per_step: 1 -> grid=(N,) "parallel" (v7x, 2 TCs);
                     N -> whole batch in one grid step (v5e/v6e, 1 TC).
    """
    N, c_in, H, W = x.shape
    c_out = weights[0].shape[0]
    K = kernel_size
    half = K // 2
    pads = [padding * d for d in dilations]
    for d, p in zip(dilations, pads):
        # Every branch is a "same" conv in the default config (padding_i = d_i).
        assert 2 * p == d * (K - 1), (d, p, K)
    P = max(pads)

    G = images_per_step
    assert N % G == 0, (N, G)

    # Lane-aligned row stride: Wp is a multiple of 128 so row offsets of tap
    # shifts land on whole lane tiles; only column offsets need realignment.
    Wp = _round_up(W + 2 * P, 128)
    ow = H * Wp                                    # flat output width / image
    span = (H + 2 * P) * Wp                        # rows any tap window touches
    extra_rows = -(-2 * P // Wp)                   # keep col-shifted slabs in bounds
    Hp = H + 2 * P + extra_rows
    L = Hp * Wp

    # Zero-pad: P rows top, P(+extra) rows bottom, P cols left, rest right.
    x_pad = jnp.pad(x, ((0, 0), (0, 0), (P, P + extra_rows), (P, Wp - W - P)))
    x_flat = x_pad.reshape(N, c_in, L)

    # Enumerate all dilation*K*K taps; build the single lane-dense weight
    # matrix (Cout, T*Cin + 1) whose last column is the summed bias.
    taps, w_cols = [], []
    for w, d in zip(weights, dilations):
        for ki in range(K):
            for kj in range(K):
                taps.append((P + (ki - half) * d, P + (kj - half) * d))
                w_cols.append(w[:, :, ki, kj])                  # (Cout, Cin)
    n_taps = len(taps)
    w_cols.append(sum(biases).reshape(c_out, 1))                # bias column
    w2 = jnp.concatenate(w_cols, axis=1).astype(x.dtype)        # (Cout, Kc)
    Kc = n_taps * c_in + 1

    # Group taps by their (few, small) distinct column offsets.
    col_groups = tuple(
        (c_off, tuple((t, r) for t, (r, c) in enumerate(taps) if c == c_off))
        for c_off in sorted({c for _, c in taps}))

    kernel = _make_kernel(col_groups, c_in, n_taps, Wp, ow, span, G, x.dtype)

    out_wide = pl.pallas_call(
        kernel,
        out_shape=jax.ShapeDtypeStruct((N, c_out, ow), x.dtype),
        grid_spec=pltpu.PrefetchScalarGridSpec(
            num_scalar_prefetch=0,
            grid=(N // G,),
            in_specs=[
                pl.BlockSpec((G, c_in, L), lambda n: (n, 0, 0)),
                pl.BlockSpec((c_out, Kc), lambda n: (0, 0)),    # resident weights
            ],
            out_specs=pl.BlockSpec((G, c_out, ow), lambda n: (n, 0, 0)),
            scratch_shapes=[pltpu.VMEM((Kc, G * ow), x.dtype)], # im2col scratch
        ),
        compiler_params=pltpu.CompilerParams(
            dimension_semantics=("parallel",)),
    )(x_flat, w2)

    # Drop the junk columns: (N, Cout, H*Wp) -> (N, Cout, H, W).
    return out_wide.reshape(N, c_out, H, Wp)[:, :, :, :W]


def reference_forward(x, weights, biases, dilations, *, padding=1):
    """Plain-JAX reference matching the PyTorch module (comb_mode='sum')."""
    out = None
    for w, b, d in zip(weights, biases, dilations):
        p = padding * d
        y = jax.lax.conv_general_dilated(
            x, w, window_strides=(1, 1), padding=((p, p), (p, p)),
            rhs_dilation=(d, d),
            dimension_numbers=('NCHW', 'OIHW', 'NCHW'),
            precision=jax.lax.Precision.HIGHEST)
        y = y + b.reshape(1, -1, 1, 1)
        out = y if out is None else out + y
    return out


if __name__ == "__main__":
    # MultidilatedConv(in_dim=4, out_dim=4, kernel_size=3) with defaults:
    # dilation_num=3, comb_mode='sum', padding=1, min_dilation=1.
    N, c_in, H, W = 2, 4, 16, 16
    c_out, K = 4, 3
    dilation_num, min_dilation, padding = 3, 1, 1
    dilations = [min_dilation * (2 ** i) for i in range(dilation_num)]

    key = jax.random.PRNGKey(0)
    key, kx = jax.random.split(key)
    x = jax.random.normal(kx, (N, c_in, H, W), dtype=jnp.float32)

    weights, biases = [], []
    for _ in range(dilation_num):
        key, kw, kb = jax.random.split(key, 3)
        weights.append(0.1 * jax.random.normal(kw, (c_out, c_in, K, K),
                                               dtype=jnp.float32))
        biases.append(0.1 * jax.random.normal(kb, (c_out,), dtype=jnp.float32))

    y_ref = reference_forward(x, weights, biases, dilations, padding=padding)

    # Path 1 (v7x-friendly): one image per grid step, grid=(N,) "parallel".
    fwd_split = jax.jit(lambda xi: multidilated_conv_sum(
        xi, weights, biases, dilations, kernel_size=K, padding=padding,
        images_per_step=1))
    y1 = jax.block_until_ready(fwd_split(x))
    assert y1.shape == (N, c_out, H, W), y1.shape
    err1 = float(jnp.max(jnp.abs(y1 - y_ref)))
    assert jnp.allclose(y1, y_ref, atol=2e-3, rtol=2e-3), err1

    # Path 2 (v5e/v6e-friendly): whole batch folded into a single grid step.
    fwd_fold = jax.jit(lambda xi: multidilated_conv_sum(
        xi, weights, biases, dilations, kernel_size=K, padding=padding,
        images_per_step=N))
    y2 = jax.block_until_ready(fwd_fold(x))
    err2 = float(jnp.max(jnp.abs(y2 - y_ref)))
    assert jnp.allclose(y2, y_ref, atol=2e-3, rtol=2e-3), err2

    print("KERNEL_OK")
</pallas_src>

<mosaic_0001>
module attributes {stable_mosaic.version = 11 : i64} {
  func.func @kernel(%arg0: i32, %arg1: memref<1x4x3200xf32, #tpu.memory_space<vmem>>, %arg2: memref<4x109xf32, #tpu.memory_space<vmem>>, %arg3: memref<1x4x2048xf32, #tpu.memory_space<vmem>>, %arg4: memref<109x2048xf32, #tpu.memory_space<vmem>>) attributes {dimension_semantics = [#tpu.dimension_semantics<parallel>], iteration_bounds = array<i64: 2>, scalar_prefetch = 0 : i64, scratch_operands = 1 : i64, tpu.core_type = #tpu.core_type<tc>, window_params = [{transform_indices = @transform_0, window_bounds = array<i64: 1, 4, 3200>}, {pipeline_mode = #tpu.pipeline_mode<synchronous>, transform_indices = @transform_1, window_bounds = array<i64: 4, 109>}, {transform_indices = @transform_2, window_bounds = array<i64: 1, 4, 2048>}]} {
    %cst = arith.constant 1.000000e+00 : f32
    %0 = vector.broadcast %cst : f32 to vector<1x2048xf32>
    %c108 = arith.constant 108 : index
    %c0 = arith.constant 0 : index
    %1 = vector.load %arg4[%c108, %c0] : memref<109x2048xf32, #tpu.memory_space<vmem>>, vector<1x2048xf32>
    tpu.vector_store %arg4[%c108, %c0], %0 {strides = array<i32>} : memref<109x2048xf32, #tpu.memory_space<vmem>>, vector<1x2048xf32>,
    %c0_0 = arith.constant 0 : index
    %c0_1 = arith.constant 0 : index
    %c0_2 = arith.constant 0 : index
    %2 = vector.load %arg1[%c0_0, %c0_1, %c0_2] : memref<1x4x3200xf32, #tpu.memory_space<vmem>>, vector<1x4x3072xf32>
    %3 = vector.shape_cast %2 : vector<1x4x3072xf32> to vector<4x3072xf32>
    %4 = vector.extract_strided_slice %3 {offsets = [0, 0], sizes = [4, 2048], strides = [1, 1]} : vector<4x3072xf32> to vector<4x2048xf32>
    %c72 = arith.constant 72 : index
    %c0_3 = arith.constant 0 : index
    %5 = vector.load %arg4[%c72, %c0_3] : memref<109x2048xf32, #tpu.memory_space<vmem>>, vector<4x2048xf32>
    tpu.vector_store %arg4[%c72, %c0_3], %4 {strides = array<i32>} : memref<109x2048xf32, #tpu.memory_space<vmem>>, vector<4x2048xf32>,
    %6 = vector.extract_strided_slice %3 {offsets = [0, 512], sizes = [4, 2048], strides = [1, 1]} : vector<4x3072xf32> to vector<4x2048xf32>
    %c84 = arith.constant 84 : index
    %c0_4 = arith.constant 0 : index
    %7 = vector.load %arg4[%c84, %c0_4] : memref<109x2048xf32, #tpu.memory_space<vmem>>, vector<4x2048xf32>
    tpu.vector_store %arg4[%c84, %c0_4], %6 {strides = array<i32>} : memref<109x2048xf32, #tpu.memory_space<vmem>>, vector<4x2048xf32>,
    %8 = vector.extract_strided_slice %3 {offsets = [0, 1024], sizes = [4, 2048], strides = [1, 1]} : vector<4x3072xf32> to vector<4x2048xf32>
    %c96 = arith.constant 96 : index
    %c0_5 = arith.constant 0 : index
    %9 = vector.load %arg4[%c96, %c0_5] : memref<109x2048xf32, #tpu.memory_space<vmem>>, vector<4x2048xf32>
    tpu.vector_store %arg4[%c96, %c0_5], %8 {strides = array<i32>} : memref<109x2048xf32, #tpu.memory_space<vmem>>, vector<4x2048xf32>,
    %c0_6 = arith.constant 0 : index
    %c0_7 = arith.constant 0 : index
    %c2 = arith.constant 2 : index
    %10 = vector.load %arg1[%c0_6, %c0_7, %c2] : memref<1x4x3200xf32, #tpu.memory_space<vmem>>, vector<1x4x3072xf32>
    %11 = vector.shape_cast %10 : vector<1x4x3072xf32> to vector<4x3072xf32>
    %12 = vector.extract_strided_slice %11 {offsets = [0, 256], sizes = [4, 2048], strides = [1, 1]} : vector<4x3072xf32> to vector<4x2048xf32>
    %c36 = arith.constant 36 : index
    %c0_8 = arith.constant 0 : index
    %13 = vector.load %arg4[%c36, %c0_8] : memref<109x2048xf32, #tpu.memory_space<vmem>>, vector<4x2048xf32>
    tpu.vector_store %arg4[%c36, %c0_8], %12 {strides = array<i32>} : memref<109x2048xf32, #tpu.memory_space<vmem>>, vector<4x2048xf32>,
    %14 = vector.extract_strided_slice %11 {offsets = [0, 512], sizes = [4, 2048], strides = [1, 1]} : vector<4x3072xf32> to vector<4x2048xf32>
    %c48 = arith.constant 48 : index
    %c0_9 = arith.constant 0 : index
    %15 = vector.load %arg4[%c48, %c0_9] : memref<109x2048xf32, #tpu.memory_space<vmem>>, vector<4x2048xf32>
    tpu.vector_store %arg4[%c48, %c0_9], %14 {strides = array<i32>} : memref<109x2048xf32, #tpu.memory_space<vmem>>, vector<4x2048xf32>,
    %16 = vector.extract_strided_slice %11 {offsets = [0, 768], sizes = [4, 2048], strides = [1, 1]} : vector<4x3072xf32> to vector<4x2048xf32>
    %c60 = arith.constant 60 : index
    %c0_10 = arith.constant 0 : index
    %17 = vector.load %arg4[%c60, %c0_10] : memref<109x2048xf32, #tpu.memory_space<vmem>>, vector<4x2048xf32>
    tpu.vector_store %arg4[%c60, %c0_10], %16 {strides = array<i32>} : memref<109x2048xf32, #tpu.memory_space<vmem>>, vector<4x2048xf32>,
    %c0_11 = arith.constant 0 : index
    %c0_12 = arith.constant 0 : index
    %c3 = arith.constant 3 : index
    %18 = vector.load %arg1[%c0_11, %c0_12, %c3] : memref<1x4x3200xf32, #tpu.memory_space<vmem>>, vector<1x4x3072xf32>
    %19 = vector.shape_cast %18 : vector<1x4x3072xf32> to vector<4x3072xf32>
    %20 = vector.extract_strided_slice %19 {offsets = [0, 384], sizes = [4, 2048], strides = [1, 1]} : vector<4x3072xf32> to vector<4x2048xf32>
    %c0_13 = arith.constant 0 : index
    %c0_14 = arith.constant 0 : index
    %21 = vector.load %arg4[%c0_13, %c0_14] : memref<109x2048xf32, #tpu.memory_space<vmem>>, vector<4x2048xf32>
    tpu.vector_store %arg4[%c0_13, %c0_14], %20 {strides = array<i32>} : memref<109x2048xf32, #tpu.memory_space<vmem>>, vector<4x2048xf32>,
    %22 = vector.extract_strided_slice %19 {offsets = [0, 512], sizes = [4, 2048], strides = [1, 1]} : vector<4x3072xf32> to vector<4x2048xf32>
    %c12 = arith.constant 12 : index
    %c0_15 = arith.constant 0 : index
    %23 = vector.load %arg4[%c12, %c0_15] : memref<109x2048xf32, #tpu.memory_space<vmem>>, vector<4x2048xf32>
    tpu.vector_store %arg4[%c12, %c0_15], %22 {strides = array<i32>} : memref<109x2048xf32, #tpu.memory_space<vmem>>, vector<4x2048xf32>,
    %24 = vector.extract_strided_slice %19 {offsets = [0, 640], sizes = [4, 2048], strides = [1, 1]} : vector<4x3072xf32> to vector<4x2048xf32>
    %c24 = arith.constant 24 : index
    %c0_16 = arith.constant 0 : index
    %25 = vector.load %arg4[%c24, %c0_16] : memref<109x2048xf32, #tpu.memory_space<vmem>>, vector<4x2048xf32>
    tpu.vector_store %arg4[%c24, %c0_16], %24 {strides = array<i32>} : memref<109x2048xf32, #tpu.memory_space<vmem>>, vector<4x2048xf32>,
    %c0_17 = arith.constant 0 : index
    %c0_18 = arith.constant 0 : index
    %c4 = arith.constant 4 : index
    %26 = vector.load %arg1[%c0_17, %c0_18, %c4] : memref<1x4x3200xf32, #tpu.memory_space<vmem>>, vector<1x4x3072xf32>
    %27 = vector.shape_cast %26 : vector<1x4x3072xf32> to vector<4x3072xf32>
    %28 = vector.extract_strided_slice %27 {offsets = [0, 384], sizes = [4, 2048], strides = [1, 1]} : vector<4x3072xf32> to vector<4x2048xf32>
    %c4_19 = arith.constant 4 : index
    %c0_20 = arith.constant 0 : index
    %29 = vector.load %arg4[%c4_19, %c0_20] : memref<109x2048xf32, #tpu.memory_space<vmem>>, vector<4x2048xf32>
    tpu.vector_store %arg4[%c4_19, %c0_20], %28 {strides = array<i32>} : memref<109x2048xf32, #tpu.memory_space<vmem>>, vector<4x2048xf32>,
    %30 = vector.extract_strided_slice %27 {offsets = [0, 512], sizes = [4, 2048], strides = [1, 1]} : vector<4x3072xf32> to vector<4x2048xf32>
    %c16 = arith.constant 16 : index
    %c0_21 = arith.constant 0 : index
    %31 = vector.load %arg4[%c16, %c0_21] : memref<109x2048xf32, #tpu.memory_space<vmem>>, vector<4x2048xf32>
    tpu.vector_store %arg4[%c16, %c0_21], %30 {strides = array<i32>} : memref<109x2048xf32, #tpu.memory_space<vmem>>, vector<4x2048xf32>,
    %32 = vector.extract_strided_slice %27 {offsets = [0, 640], sizes = [4, 2048], strides = [1, 1]} : vector<4x3072xf32> to vector<4x2048xf32>
    %c28 = arith.constant 28 : index
    %c0_22 = arith.constant 0 : index
    %33 = vector.load %arg4[%c28, %c0_22] : memref<109x2048xf32, #tpu.memory_space<vmem>>, vector<4x2048xf32>
    tpu.vector_store %arg4[%c28, %c0_22], %32 {strides = array<i32>} : memref<109x2048xf32, #tpu.memory_space<vmem>>, vector<4x2048xf32>,
    %34 = vector.extract_strided_slice %27 {offsets = [0, 256], sizes = [4, 2048], strides = [1, 1]} : vector<4x3072xf32> to vector<4x2048xf32>
    %c40 = arith.constant 40 : index
    %c0_23 = arith.constant 0 : index
    %35 = vector.load %arg4[%c40, %c0_23] : memref<109x2048xf32, #tpu.memory_space<vmem>>, vector<4x2048xf32>
    tpu.vector_store %arg4[%c40, %c0_23], %34 {strides = array<i32>} : memref<109x2048xf32, #tpu.memory_space<vmem>>, vector<4x2048xf32>,
    %36 = vector.extract_strided_slice %27 {offsets = [0, 512], sizes = [4, 2048], strides = [1, 1]} : vector<4x3072xf32> to vector<4x2048xf32>
    %c52 = arith.constant 52 : index
    %c0_24 = arith.constant 0 : index
    %37 = vector.load %arg4[%c52, %c0_24] : memref<109x2048xf32, #tpu.memory_space<vmem>>, vector<4x2048xf32>
    tpu.vector_store %arg4[%c52, %c0_24], %36 {strides = array<i32>} : memref<109x2048xf32, #tpu.memory_space<vmem>>, vector<4x2048xf32>,
    %38 = vector.extract_strided_slice %27 {offsets = [0, 768], sizes = [4, 2048], strides = [1, 1]} : vector<4x3072xf32> to vector<4x2048xf32>
    %c64 = arith.constant 64 : index
    %c0_25 = arith.constant 0 : index
    %39 = vector.load %arg4[%c64, %c0_25] : memref<109x2048xf32, #tpu.memory_space<vmem>>, vector<4x2048xf32>
    tpu.vector_store %arg4[%c64, %c0_25], %38 {strides = array<i32>} : memref<109x2048xf32, #tpu.memory_space<vmem>>, vector<4x2048xf32>,
    %40 = vector.extract_strided_slice %27 {offsets = [0, 0], sizes = [4, 2048], strides = [1, 1]} : vector<4x3072xf32> to vector<4x2048xf32>
    %c76 = arith.constant 76 : index
    %c0_26 = arith.constant 0 : index
    %41 = vector.load %arg4[%c76, %c0_26] : memref<109x2048xf32, #tpu.memory_space<vmem>>, vector<4x2048xf32>
    tpu.vector_store %arg4[%c76, %c0_26], %40 {strides = array<i32>} : memref<109x2048xf32, #tpu.memory_space<vmem>>, vector<4x2048xf32>,
    %42 = vector.extract_strided_slice %27 {offsets = [0, 512], sizes = [4, 2048], strides = [1, 1]} : vector<4x3072xf32> to vector<4x2048xf32>
    %c88 = arith.constant 88 : index
    %c0_27 = arith.constant 0 : index
    %43 = vector.load %arg4[%c88, %c0_27] : memref<109x2048xf32, #tpu.memory_space<vmem>>, vector<4x2048xf32>
    tpu.vector_store %arg4[%c88, %c0_27], %42 {strides = array<i32>} : memref<109x2048xf32, #tpu.memory_space<vmem>>, vector<4x2048xf32>,
    %44 = vector.extract_strided_slice %27 {offsets = [0, 1024], sizes = [4, 2048], strides = [1, 1]} : vector<4x3072xf32> to vector<4x2048xf32>
    %c100 = arith.constant 100 : index
    %c0_28 = arith.constant 0 : index
    %45 = vector.load %arg4[%c100, %c0_28] : memref<109x2048xf32, #tpu.memory_space<vmem>>, vector<4x2048xf32>
    tpu.vector_store %arg4[%c100, %c0_28], %44 {strides = array<i32>} : memref<109x2048xf32, #tpu.memory_space<vmem>>, vector<4x2048xf32>,
    %c0_29 = arith.constant 0 : index
    %c0_30 = arith.constant 0 : index
    %c5 = arith.constant 5 : index
    %46 = vector.load %arg1[%c0_29, %c0_30, %c5] : memref<1x4x3200xf32, #tpu.memory_space<vmem>>, vector<1x4x3072xf32>
    %47 = vector.shape_cast %46 : vector<1x4x3072xf32> to vector<4x3072xf32>
    %48 = vector.extract_strided_slice %47 {offsets = [0, 384], sizes = [4, 2048], strides = [1, 1]} : vector<4x3072xf32> to vector<4x2048xf32>
    %c8 = arith.constant 8 : index
    %c0_31 = arith.constant 0 : index
    %49 = vector.load %arg4[%c8, %c0_31] : memref<109x2048xf32, #tpu.memory_space<vmem>>, vector<4x2048xf32>
    tpu.vector_store %arg4[%c8, %c0_31], %48 {strides = array<i32>} : memref<109x2048xf32, #tpu.memory_space<vmem>>, vector<4x2048xf32>,
    %50 = vector.extract_strided_slice %47 {offsets = [0, 512], sizes = [4, 2048], strides = [1, 1]} : vector<4x3072xf32> to vector<4x2048xf32>
    %c20 = arith.constant 20 : index
    %c0_32 = arith.constant 0 : index
    %51 = vector.load %arg4[%c20, %c0_32] : memref<109x2048xf32, #tpu.memory_space<vmem>>, vector<4x2048xf32>
    tpu.vector_store %arg4[%c20, %c0_32], %50 {strides = array<i32>} : memref<109x2048xf32, #tpu.memory_space<vmem>>, vector<4x2048xf32>,
    %52 = vector.extract_strided_slice %47 {offsets = [0, 640], sizes = [4, 2048], strides = [1, 1]} : vector<4x3072xf32> to vector<4x2048xf32>
    %c32 = arith.constant 32 : index
    %c0_33 = arith.constant 0 : index
    %53 = vector.load %arg4[%c32, %c0_33] : memref<109x2048xf32, #tpu.memory_space<vmem>>, vector<4x2048xf32>
    tpu.vector_store %arg4[%c32, %c0_33], %52 {strides = array<i32>} : memref<109x2048xf32, #tpu.memory_space<vmem>>, vector<4x2048xf32>,
    %c0_34 = arith.constant 0 : index
    %c0_35 = arith.constant 0 : index
    %c6 = arith.constant 6 : index
    %54 = vector.load %arg1[%c0_34, %c0_35, %c6] : memref<1x4x3200xf32, #tpu.memory_space<vmem>>, vector<1x4x3072xf32>
    %55 = vector.shape_cast %54 : vector<1x4x3072xf32> to vector<4x3072xf32>
    %56 = vector.extract_strided_slice %55 {offsets = [0, 256], sizes = [4, 2048], strides = [1, 1]} : vector<4x3072xf32> to vector<4x2048xf32>
    %c44 = arith.constant 44 : index
    %c0_36 = arith.constant 0 : index
    %57 = vector.load %arg4[%c44, %c0_36] : memref<109x2048xf32, #tpu.memory_space<vmem>>, vector<4x2048xf32>
    tpu.vector_store %arg4[%c44, %c0_36], %56 {strides = array<i32>} : memref<109x2048xf32, #tpu.memory_space<vmem>>, vector<4x2048xf32>,
    %58 = vector.extract_strided_slice %55 {offsets = [0, 512], sizes = [4, 2048], strides = [1, 1]} : vector<4x3072xf32> to vector<4x2048xf32>
    %c56 = arith.constant 56 : index
    %c0_37 = arith.constant 0 : index
    %59 = vector.load %arg4[%c56, %c0_37] : memref<109x2048xf32, #tpu.memory_space<vmem>>, vector<4x2048xf32>
    tpu.vector_store %arg4[%c56, %c0_37], %58 {strides = array<i32>} : memref<109x2048xf32, #tpu.memory_space<vmem>>, vector<4x2048xf32>,
    %60 = vector.extract_strided_slice %55 {offsets = [0, 768], sizes = [4, 2048], strides = [1, 1]} : vector<4x3072xf32> to vector<4x2048xf32>
    %c68 = arith.constant 68 : index
    %c0_38 = arith.constant 0 : index
    %61 = vector.load %arg4[%c68, %c0_38] : memref<109x2048xf32, #tpu.memory_space<vmem>>, vector<4x2048xf32>
    tpu.vector_store %arg4[%c68, %c0_38], %60 {strides = array<i32>} : memref<109x2048xf32, #tpu.memory_space<vmem>>, vector<4x2048xf32>,
    %c0_39 = arith.constant 0 : index
    %c0_40 = arith.constant 0 : index
    %c8_41 = arith.constant 8 : index
    %62 = vector.load %arg1[%c0_39, %c0_40, %c8_41] : memref<1x4x3200xf32, #tpu.memory_space<vmem>>, vector<1x4x3072xf32>
    %63 = vector.shape_cast %62 : vector<1x4x3072xf32> to vector<4x3072xf32>
    %64 = vector.extract_strided_slice %63 {offsets = [0, 0], sizes = [4, 2048], strides = [1, 1]} : vector<4x3072xf32> to vector<4x2048xf32>
    %c80 = arith.constant 80 : index
    %c0_42 = arith.constant 0 : index
    %65 = vector.load %arg4[%c80, %c0_42] : memref<109x2048xf32, #tpu.memory_space<vmem>>, vector<4x2048xf32>
    tpu.vector_store %arg4[%c80, %c0_42], %64 {strides = array<i32>} : memref<109x2048xf32, #tpu.memory_space<vmem>>, vector<4x2048xf32>,
    %66 = vector.extract_strided_slice %63 {offsets = [0, 512], sizes = [4, 2048], strides = [1, 1]} : vector<4x3072xf32> to vector<4x2048xf32>
    %c92 = arith.constant 92 : index
    %c0_43 = arith.constant 0 : index
    %67 = vector.load %arg4[%c92, %c0_43] : memref<109x2048xf32, #tpu.memory_space<vmem>>, vector<4x2048xf32>
    tpu.vector_store %arg4[%c92, %c0_43], %66 {strides = array<i32>} : memref<109x2048xf32, #tpu.memory_space<vmem>>, vector<4x2048xf32>,
    %68 = vector.extract_strided_slice %63 {offsets = [0, 1024], sizes = [4, 2048], strides = [1, 1]} : vector<4x3072xf32> to vector<4x2048xf32>
    %c104 = arith.constant 104 : index
    %c0_44 = arith.constant 0 : index
    %69 = vector.load %arg4[%c104, %c0_44] : memref<109x2048xf32, #tpu.memory_space<vmem>>, vector<4x2048xf32>
    tpu.vector_store %arg4[%c104, %c0_44], %68 {strides = array<i32>} : memref<109x2048xf32, #tpu.memory_space<vmem>>, vector<4x2048xf32>,
    %c0_45 = arith.constant 0 : index
    %c0_46 = arith.constant 0 : index
    %70 = vector.load %arg2[%c0_45, %c0_46] : memref<4x109xf32, #tpu.memory_space<vmem>>, vector<4x109xf32>
    %c0_47 = arith.constant 0 : index
    %c0_48 = arith.constant 0 : index
    %71 = vector.load %arg4[%c0_47, %c0_48] : memref<109x2048xf32, #tpu.memory_space<vmem>>, vector<109x2048xf32>
    %cst_49 = arith.constant dense<0.000000e+00> : vector<4x2048xf32>
    %72 = tpu.matmul %70, %71, %cst_49 {dimension_numbers = #tpu.dot_dimension_numbers<[1], [0], [0], [1], [0, 0, 1, 1], [], []>} : vector<4x109xf32>, vector<109x2048xf32>, vector<4x2048xf32> -> vector<4x2048xf32>
    %c0_50 = arith.constant 0 : index
    %c0_51 = arith.constant 0 : index
    %c0_52 = arith.constant 0 : index
    %73 = vector.load %arg3[%c0_50, %c0_51, %c0_52] : memref<1x4x2048xf32, #tpu.memory_space<vmem>>, vector<1x4x2048xf32>
    %74 = vector.shape_cast %73 : vector<1x4x2048xf32> to vector<4x2048xf32>
    %75 = vector.shape_cast %72 : vector<4x2048xf32> to vector<1x4x2048xf32>
    tpu.vector_store %arg3[%c0_50, %c0_51, %c0_52], %75 {strides = array<i32>} : memref<1x4x2048xf32, #tpu.memory_space<vmem>>, vector<1x4x2048xf32>,
    return
  }
  func.func @transform_0(%arg0: i32) -> (i32, i32, i32) {
    %c0_i32 = arith.constant 0 : i32
    %c0_i32_0 = arith.constant 0 : i32
    %c0_i32_1 = arith.constant 0 : i32
    return %arg0, %c0_i32, %c0_i32_0 : i32, i32, i32
  }
  func.func @transform_1(%arg0: i32) -> (i32, i32) {
    %c0_i32 = arith.constant 0 : i32
    %c0_i32_0 = arith.constant 0 : i32
    %c0_i32_1 = arith.constant 0 : i32
    return %c0_i32, %c0_i32_0 : i32, i32
  }
  func.func @transform_2(%arg0: i32) -> (i32, i32, i32) {
    %c0_i32 = arith.constant 0 : i32
    %c0_i32_0 = arith.constant 0 : i32
    %c0_i32_1 = arith.constant 0 : i32
    return %arg0, %c0_i32, %c0_i32_0 : i32, i32, i32
  }
}

</mosaic_0001>

<llo_original>
// kernel: _lambda_.1
$region0: #{_lambda_.1}
  #allocation0 [shape = 'u32[]', space=smem, size = 0x4, offset = 0x4, fixed_abs, tag = 'smem constant byte address 0x4 - core index']
  #allocation1 [shape = 'u32[72,128]{1,0:T(1,128)}', space=vmem, size = 0x9000, scoped, tag = 'internal scratch']
  #allocation2 [shape = 'f32[109,2048]{1,0:T(8,128)}', space=vmem, size = 0xe0000, scoped, tag = 'scratch operand']
  %s0 = inlined_call_operand.vmem [shape: f32[2,4,3200], index: 0, kind: input, shape index: {}]
  %s1 = inlined_call_operand.vmem [shape: f32[4,109], index: 1, kind: input, shape index: {}]
  %s2 = inlined_call_operand.vmem [shape: f32[2,4,2048], index: 2, kind: output, shape index: {}]
  %s3 = sld [smem:[#allocation0]]
  $region41: #{_lambda_.1} parent=0
    _
  %s5 = ssub.s32 1, %s3
  %s6 = scalar_select 0, %s5, %s3
  loop: start=0, step=1, limit=4
  $region2: #{_lambda_.1} parent=0 // loop_pre_header
    _
  $region3: #{_lambda_.1} parent=0 // loop_header
    %s8 = sphi 0, %s12
    %p9 = scmp.ge.s32.totalorder %s8, 4
    %s18 = sphi 0, %s20
    %s21 = sphi 0, %s18
    %s22 = sphi 0, %s21
    %s38 = sphi 0, %s22
    %s42 = sphi 0, %s42
    %s44 = sphi 0, %s42
    %s45 = sphi 0, %s44
    %s59 = sphi 0, %s45
    %s65 = sphi 0, %s67
    %s68 = sphi 0, %s65
    %s69 = sphi 0, %s68
    %s85 = sphi 0, %s69
  $region4: #{_lambda_.1} parent=0 // loop_header_branch
    %11 = sbr.rel (%p9) target = $region8
  $region5: #{_lambda_.1} parent=0 // loop_body
    %s13 = ssub.s32 %s8, 1
    %s14 = ssub.s32 %s8, 2
    %s15 = sadd.s32 %s8, 1
    %s16 = ssub.s32 %s8, %s15
    %p17 = scmp.eq.s32.totalorder %s16, 0
    %s19 = sadd.s32 %s18, 1
    %s20 = scalar_select %p17, %s18, %s19
    %p23 = pneg %p17
    %p24 = scmp.eq.s32.totalorder %s8, 1
    %p25 = por %p23, %p24
    %p26 = scmp.ne.s32.totalorder %s18, %s21
    %p27 = scmp.eq.s32.totalorder %s8, 0
    %p28 = por %p26, %p27
    %p29 = scmp.ne.s32.totalorder %s18, %s21
    %p30 = scmp.eq.s32.totalorder %s13, 1
    %p31 = por %p29, %p30
    %p32 = scmp.ne.s32.totalorder %s21, %s22
    %p33 = scmp.eq.s32.totalorder %s13, 0
    %p34 = por %p32, %p33
    %p35 = scmp.ne.s32.totalorder %s21, %s22
    %p36 = scmp.eq.s32.totalorder %s14, 1
    %p37 = por %p35, %p36
    %p39 = scmp.ne.s32.totalorder %s22, %s38
    %p40 = scmp.eq.s32.totalorder %s14, 0
    %p41 = por %p39, %p40
    %s43 = sadd.s32 %s42, 1
    %p46 = scmp.eq.s32.totalorder %s8, 1
    %p47 = scmp.ne.s32.totalorder %s42, %s44
    %p48 = scmp.eq.s32.totalorder %s8, 0
    %p49 = por %p47, %p48
    %p50 = scmp.ne.s32.totalorder %s42, %s44
    %p51 = scmp.eq.s32.totalorder %s13, 1
    %p52 = por %p50, %p51
    %p53 = scmp.ne.s32.totalorder %s44, %s45
    %p54 = scmp.eq.s32.totalorder %s13, 0
    %p55 = por %p53, %p54
    %p56 = scmp.ne.s32.totalorder %s44, %s45
    %p57 = scmp.eq.s32.totalorder %s14, 1
    %p58 = por %p56, %p57
    %p60 = scmp.ne.s32.totalorder %s45, %s59
    %p61 = scmp.eq.s32.totalorder %s14, 0
    %p62 = por %p60, %p61
    %s63 = ssub.s32 %s8, %s15
    %p64 = scmp.eq.s32.totalorder %s63, 0
    %s66 = sadd.s32 %s65, 1
    %s67 = scalar_select %p64, %s65, %s66
    %p70 = pneg %p64
    %p71 = scmp.eq.s32.totalorder %s8, 1
    %p72 = por %p70, %p71
    %p73 = scmp.ne.s32.totalorder %s65, %s68
    %p74 = scmp.eq.s32.totalorder %s8, 0
    %p75 = por %p73, %p74
    %p76 = scmp.ne.s32.totalorder %s65, %s68
    %p77 = scmp.eq.s32.totalorder %s13, 1
    %p78 = por %p76, %p77
    %p79 = scmp.ne.s32.totalorder %s68, %s69
    %p80 = scmp.eq.s32.totalorder %s13, 0
    %p81 = por %p79, %p80
    %p82 = scmp.ne.s32.totalorder %s68, %s69
    %p83 = scmp.eq.s32.totalorder %s14, 1
    %p84 = por %p82, %p83
    %p86 = scmp.ne.s32.totalorder %s69, %s85
    %p87 = scmp.eq.s32.totalorder %s14, 0
    %p88 = por %p86, %p87
    %p89 = scmp.le.s32.totalorder 1, %s8
    %p90 = scmp.lt.s32.totalorder %s8, 3
    %p91 = pnand %p89, %p90
    %p92 = pneg %p91
    // Predicated region
    $region9: #{_lambda_.1} parent=5 // pred_check
      _
    $region10: #{_lambda_.1} parent=5 // pred_check_branch
      %94 = sbr.rel (%p91) target = $region12
    $region11: #{_lambda_.1} parent=5 // pred_region
      %s95 = ssub.s32 %s8, 1
      // Predicated region
      $region13: #{_lambda_.1} parent=11 // pred_check
        %p96 = pneg %p55
      $region14: #{_lambda_.1} parent=11 // pred_check_branch
        %98 = sbr.rel (%p96) target = $region16
      $region15: #{_lambda_.1} parent=11 // pred_region
        _
      $region16: #{_lambda_.1} parent=11 // pred_fallthru
        _
    $region12: #{_lambda_.1} parent=5 // pred_fallthru
      _
    %p99 = scmp.lt.s32.totalorder %s8, 2
    // Predicated region
    $region17: #{_lambda_.1} parent=5 // pred_check
      %p100 = pneg %p99
    $region18: #{_lambda_.1} parent=5 // pred_check_branch
      %102 = sbr.rel (%p100) target = $region20
    $region19: #{_lambda_.1} parent=5 // pred_region
      // Predicated region
      $region21: #{_lambda_.1} parent=19 // pred_check
        %p103 = pneg %p28
      $region22: #{_lambda_.1} parent=19 // pred_check_branch
        %105 = sbr.rel (%p103) target = $region24
      $region23: #{_lambda_.1} parent=19 // pred_region
        %p106 = scmp.lt.s32.totalorder %s8, 1
        %s107 = scalar_select %p106, %s8, 1
        %s108 = smul.addr %s107, 25
        %s109 = smul.addr %s108, 4
        %s110 = scalar_lea.vmem %s0, %s109
      $region24: #{_lambda_.1} parent=19 // pred_fallthru
        _
    $region20: #{_lambda_.1} parent=5 // pred_fallthru
      _
    %p111 = scmp.le.s32.totalorder 1, %s8
    %p112 = scmp.lt.s32.totalorder %s8, 3
    %p113 = pnand %p111, %p112
    %p114 = pneg %p113
    // Predicated region
    $region25: #{_lambda_.1} parent=5 // pred_check
      _
    $region26: #{_lambda_.1} parent=5 // pred_check_branch
      %116 = sbr.rel (%p113) target = $region28
    $region27: #{_lambda_.1} parent=5 // pred_region
      %s117 = ssub.s32 %s8, 1
      %p118 = scmp.lt.s32.totalorder %s13, 1
      %s119 = scalar_select %p118, %s13, 1
      %s120 = smul.addr %s119, 25
      %s121 = smul.addr %s120, 4
      %s122 = scalar_lea.vmem %s0, %s121
      %p123 = pneg %p34
      %p124 = pneg %p31
      %p125 = pneg %p55
      %p126 = pneg %p52
      %p127 = pneg %p81
      %p128 = pneg %p78
      %p129 = scmp.lt.s32.totalorder %s13, 1
      %s130 = scalar_select %p129, %s13, 1
      %s131 = smul.addr %s130, 16
      %s132 = smul.addr %s131, 4
      %s133 = scalar_lea.vmem %s2, %s132
      %p134 = scmp.lt.s32.totalorder %s13, 1
      %s135 = scalar_select %p134, %s13, 1
      %s136 = smul.addr %s135, 25
      %s137 = smul.addr %s136, 4
      %s138 = scalar_lea.vmem %s0, %s137
      %p139 = scmp.lt.s32.totalorder %s13, 1
      %s140 = scalar_select %p139, %s13, 1
      %s141 = smul.addr %s140, 16
      %s142 = smul.addr %s141, 4
      %s143 = scalar_lea.vmem %s2, %s142
      %s144 = scalar_lea.vmem [#allocation2], 1668
      %145 = vst [vmem:[%s144] ss:$8 sm:$0xf] 1.0
      %146 = vst [vmem:[%s144] ss:$8 sm:$0xf0] 1.0
      %s147 = scalar_lea.vmem [#allocation2], 1732
      %148 = vst [vmem:[%s147] ss:$8 sm:$0xf] 1.0
      %149 = vst [vmem:[%s147] ss:$8 sm:$0xf0] 1.0
      %v150 = vld [vmem:[%s138] sm:$0xff]
      %v151 = vld [vmem:[%s138 + $0x8] sm:$0xff]
      %v152 = vld [vmem:[%s138 + $0x10] sm:$0xff]
      %v153 = vld [vmem:[%s138 + $0x18] sm:$0xff]
      %v154 = vld [vmem:[%s138 + $0x20] sm:$0xff]
      %v155 = vld [vmem:[%s138 + $0x28] sm:$0xff]
      %v156 = vld [vmem:[%s138 + $0x30] sm:$0xff]
      %v157 = vld [vmem:[%s138 + $0x38] sm:$0xff]
      %v158 = vld [vmem:[%s138 + $0x40] sm:$0xff]
      %v159 = vld [vmem:[%s138 + $0x48] sm:$0xff]
      %v160 = vld [vmem:[%s138 + $0x50] sm:$0xff]
      %v161 = vld [vmem:[%s138 + $0x58] sm:$0xff]
      %170 = vst [vmem:[#allocation1] ss:$2 sm:$0xff] %v150
      %s171 = scalar_lea.vmem [#allocation1], 16
      %172 = vst [vmem:[%s171] ss:$2 sm:$0xff] %v151
      %s173 = scalar_lea.vmem [#allocation1], 32
      %174 = vst [vmem:[%s173] ss:$2 sm:$0xff] %v152
      %s175 = scalar_lea.vmem [#allocation1], 48
      %176 = vst [vmem:[%s175] ss:$2 sm:$0xff] %v153
      %v177 = vld.sshfl [vmem:[#allocation1] sm:$0xff pattern:$0x75316420]
      %v178 = vld.sshfl [vmem:[#allocation1 + $0x8] sm:$0xff pattern:$0x75316420]
      %v179 = vld.sshfl [vmem:[#allocation1 + $0x10] sm:$0xff pattern:$0x75316420]
      %v180 = vld.sshfl [vmem:[#allocation1 + $0x18] sm:$0xff pattern:$0x75316420]
      %v181 = vld.sshfl [vmem:[#allocation1 + $0x20] sm:$0xff pattern:$0x75316420]
      %v182 = vld.sshfl [vmem:[#allocation1 + $0x28] sm:$0xff pattern:$0x75316420]
      %v183 = vld.sshfl [vmem:[#allocation1 + $0x30] sm:$0xff pattern:$0x75316420]
      %v184 = vld.sshfl [vmem:[#allocation1 + $0x38] sm:$0xff pattern:$0x75316420]
      %185 = vst [vmem:[#allocation1] ss:$2 sm:$0xff] %v154
      %186 = vst [vmem:[%s171] ss:$2 sm:$0xff] %v155
      %187 = vst [vmem:[%s173] ss:$2 sm:$0xff] %v156
      %188 = vst [vmem:[%s175] ss:$2 sm:$0xff] %v157
      %v189 = vld.sshfl [vmem:[#allocation1] sm:$0xff pattern:$0x75316420]
      %v190 = vld.sshfl [vmem:[#allocation1 + $0x8] sm:$0xff pattern:$0x75316420]
      %v191 = vld.sshfl [vmem:[#allocation1 + $0x10] sm:$0xff pattern:$0x75316420]
      %v192 = vld.sshfl [vmem:[#allocation1 + $0x18] sm:$0xff pattern:$0x75316420]
      %v193 = vld.sshfl [vmem:[#allocation1 + $0x20] sm:$0xff pattern:$0x75316420]
      %v194 = vld.sshfl [vmem:[#allocation1 + $0x28] sm:$0xff pattern:$0x75316420]
      %v195 = vld.sshfl [vmem:[#allocation1 + $0x30] sm:$0xff pattern:$0x75316420]
      %v196 = vld.sshfl [vmem:[#allocation1 + $0x38] sm:$0xff pattern:$0x75316420]
      %213 = vst [vmem:[#allocation2 + $0x480] sm:$0xf] %v177
      %214 = vst [vmem:[#allocation2 + $0x488] sm:$0xf] %v178
      %215 = vst [vmem:[#allocation2 + $0x490] sm:$0xf] %v179
      %216 = vst [vmem:[#allocation2 + $0x498] sm:$0xf] %v180
      %217 = vst [vmem:[#allocation2 + $0x4a0] sm:$0xf] %v181
      %218 = vst [vmem:[#allocation2 + $0x4a8] sm:$0xf] %v182
      %219 = vst [vmem:[#allocation2 + $0x4b0] sm:$0xf] %v183
      %220 = vst [vmem:[#allocation2 + $0x4b8] sm:$0xf] %v184
      %221 = vst [vmem:[#allocation2 + $0x4c0] sm:$0xf] %v189
      %222 = vst [vmem:[#allocation2 + $0x4c8] sm:$0xf] %v190
      %223 = vst [vmem:[#allocation2 + $0x4d0] sm:$0xf] %v191
      %224 = vst [vmem:[#allocation2 + $0x4d8] sm:$0xf] %v192
      %225 = vst [vmem:[#allocation2 + $0x4e0] sm:$0xf] %v193
      %226 = vst [vmem:[#allocation2 + $0x4e8] sm:$0xf] %v194
      %227 = vst [vmem:[#allocation2 + $0x4f0] sm:$0xf] %v195
      %228 = vst [vmem:[#allocation2 + $0x4f8] sm:$0xf] %v196
      %s231 = scalar_lea.vmem [#allocation1], 1
      %232 = vst [vmem:[%s231] ss:$2 sm:$0xff] %v152
      %s233 = scalar_lea.vmem [#allocation1], 17
      %234 = vst [vmem:[%s233] ss:$2 sm:$0xff] %v153
      %s235 = scalar_lea.vmem [#allocation1], 33
      %236 = vst [vmem:[%s235] ss:$2 sm:$0xff] %v154
      %s237 = scalar_lea.vmem [#allocation1], 49
      %238 = vst [vmem:[%s237] ss:$2 sm:$0xff] %v155
      %v239 = vld.sshfl [vmem:[#allocation1] sm:$0xff pattern:$0x75316420]
      %v240 = vld.sshfl [vmem:[#allocation1 + $0x8] sm:$0xff pattern:$0x75316420]
      %v241 = vld.sshfl [vmem:[#allocation1 + $0x10] sm:$0xff pattern:$0x75316420]
      %v242 = vld.sshfl [vmem:[#allocation1 + $0x18] sm:$0xff pattern:$0x75316420]
      %v243 = vld.sshfl [vmem:[#allocation1 + $0x20] sm:$0xff pattern:$0x75316420]
      %v244 = vld.sshfl [vmem:[#allocation1 + $0x28] sm:$0xff pattern:$0x75316420]
      %v245 = vld.sshfl [vmem:[#allocation1 + $0x30] sm:$0xff pattern:$0x75316420]
      %v246 = vld.sshfl [vmem:[#allocation1 + $0x38] sm:$0xff pattern:$0x75316420]
      %247 = vst [vmem:[%s231] ss:$2 sm:$0xff] %v156
      %248 = vst [vmem:[%s233] ss:$2 sm:$0xff] %v157
      %249 = vst [vmem:[%s235] ss:$2 sm:$0xff] %v158
      %250 = vst [vmem:[%s237] ss:$2 sm:$0xff] %v159
      %v251 = vld.sshfl [vmem:[#allocation1] sm:$0xff pattern:$0x75316420]
      %v252 = vld.sshfl [vmem:[#allocation1 + $0x8] sm:$0xff pattern:$0x75316420]
      %v253 = vld.sshfl [vmem:[#allocation1 + $0x10] sm:$0xff pattern:$0x75316420]
      %v254 = vld.sshfl [vmem:[#allocation1 + $0x18] sm:$0xff pattern:$0x75316420]
      %v255 = vld.sshfl [vmem:[#allocation1 + $0x20] sm:$0xff pattern:$0x75316420]
      %v256 = vld.sshfl [vmem:[#allocation1 + $0x28] sm:$0xff pattern:$0x75316420]
      %v257 = vld.sshfl [vmem:[#allocation1 + $0x30] sm:$0xff pattern:$0x75316420]
      %v258 = vld.sshfl [vmem:[#allocation1 + $0x38] sm:$0xff pattern:$0x75316420]
      %275 = vst [vmem:[#allocation2 + $0x500] sm:$0xf0] %v239
      %276 = vst [vmem:[#allocation2 + $0x508] sm:$0xf0] %v240
      %277 = vst [vmem:[#allocation2 + $0x510] sm:$0xf0] %v241
      %278 = vst [vmem:[#allocation2 + $0x518] sm:$0xf0] %v242
      %279 = vst [vmem:[#allocation2 + $0x520] sm:$0xf0] %v243
      %280 = vst [vmem:[#allocation2 + $0x528] sm:$0xf0] %v244
      %281 = vst [vmem:[#allocation2 + $0x530] sm:$0xf0] %v245
      %282 = vst [vmem:[#allocation2 + $0x538] sm:$0xf0] %v246
      %283 = vst [vmem:[#allocation2 + $0x540] sm:$0xf0] %v251
      %284 = vst [vmem:[#allocation2 + $0x548] sm:$0xf0] %v252
      %285 = vst [vmem:[#allocation2 + $0x550] sm:$0xf0] %v253
      %286 = vst [vmem:[#allocation2 + $0x558] sm:$0xf0] %v254
      %287 = vst [vmem:[#allocation2 + $0x560] sm:$0xf0] %v255
      %288 = vst [vmem:[#allocation2 + $0x568] sm:$0xf0] %v256
      %289 = vst [vmem:[#allocation2 + $0x570] sm:$0xf0] %v257
      %290 = vst [vmem:[#allocation2 + $0x578] sm:$0xf0] %v258
      %293 = vst [vmem:[#allocation1] ss:$2 sm:$0xff] %v154
      %s294 = scalar_lea.vmem [#allocation1], 16
      %295 = vst [vmem:[%s294] ss:$2 sm:$0xff] %v155
      %s296 = scalar_lea.vmem [#allocation1], 32
      %297 = vst [vmem:[%s296] ss:$2 sm:$0xff] %v156
      %s298 = scalar_lea.vmem [#allocation1], 48
      %299 = vst [vmem:[%s298] ss:$2 sm:$0xff] %v157
      %v300 = vld.sshfl [vmem:[#allocation1] sm:$0xff pattern:$0x75316420]
      %v301 = vld.sshfl [vmem:[#allocation1 + $0x8] sm:$0xff pattern:$0x75316420]
      %v302 = vld.sshfl [vmem:[#allocation1 + $0x10] sm:$0xff pattern:$0x75316420]
      %v303 = vld.sshfl [vmem:[#allocation1 + $0x18] sm:$0xff pattern:$0x75316420]
      %v304 = vld.sshfl [vmem:[#allocation1 + $0x20] sm:$0xff pattern:$0x75316420]
      %v305 = vld.sshfl [vmem:[#allocation1 + $0x28] sm:$0xff pattern:$0x75316420]
      %v306 = vld.sshfl [vmem:[#allocation1 + $0x30] sm:$0xff pattern:$0x75316420]
      %v307 = vld.sshfl [vmem:[#allocation1 + $0x38] sm:$0xff pattern:$0x75316420]
      %308 = vst [vmem:[#allocation1] ss:$2 sm:$0xff] %v158
      %309 = vst [vmem:[%s294] ss:$2 sm:$0xff] %v159
      %310 = vst [vmem:[%s296] ss:$2 sm:$0xff] %v160
      %311 = vst [vmem:[%s298] ss:$2 sm:$0xff] %v161
      %v312 = vld.sshfl [vmem:[#allocation1] sm:$0xff pattern:$0x75316420]
      %v313 = vld.sshfl [vmem:[#allocation1 + $0x8] sm:$0xff pattern:$0x75316420]
      %v314 = vld.sshfl [vmem:[#allocation1 + $0x10] sm:$0xff pattern:$0x75316420]
      %v315 = vld.sshfl [vmem:[#allocation1 + $0x18] sm:$0xff pattern:$0x75316420]
      %v316 = vld.sshfl [vmem:[#allocation1 + $0x20] sm:$0xff pattern:$0x75316420]
      %v317 = vld.sshfl [vmem:[#allocation1 + $0x28] sm:$0xff pattern:$0x75316420]
      %v318 = vld.sshfl [vmem:[#allocation1 + $0x30] sm:$0xff pattern:$0x75316420]
      %v319 = vld.sshfl [vmem:[#allocation1 + $0x38] sm:$0xff pattern:$0x75316420]
      %336 = vst [vmem:[#allocation2 + $0x600] sm:$0xf] %v300
      %337 = vst [vmem:[#allocation2 + $0x608] sm:$0xf] %v301
      %338 = vst [vmem:[#allocation2 + $0x610] sm:$0xf] %v302
      %339 = vst [vmem:[#allocation2 + $0x618] sm:$0xf] %v303
      %340 = vst [vmem:[#allocation2 + $0x620] sm:$0xf] %v304
      %341 = vst [vmem:[#allocation2 + $0x628] sm:$0xf] %v305
      %342 = vst [vmem:[#allocation2 + $0x630] sm:$0xf] %v306
      %343 = vst [vmem:[#allocation2 + $0x638] sm:$0xf] %v307
      %344 = vst [vmem:[#allocation2 + $0x640] sm:$0xf] %v312
      %345 = vst [vmem:[#allocation2 + $0x648] sm:$0xf] %v313
      %346 = vst [vmem:[#allocation2 + $0x650] sm:$0xf] %v314
      %347 = vst [vmem:[#allocation2 + $0x658] sm:$0xf] %v315
      %348 = vst [vmem:[#allocation2 + $0x660] sm:$0xf] %v316
      %349 = vst [vmem:[#allocation2 + $0x668] sm:$0xf] %v317
      %350 = vst [vmem:[#allocation2 + $0x670] sm:$0xf] %v318
      %351 = vst [vmem:[#allocation2 + $0x678] sm:$0xf] %v319
      %v352 = vld [vmem:[%s138 + $0x8] sm:$0xff]
      %v353 = vld [vmem:[%s138 + $0x10] sm:$0xff]
      %v354 = vld [vmem:[%s138 + $0x18] sm:$0xff]
      %v355 = vld [vmem:[%s138 + $0x20] sm:$0xff]
      %v356 = vld [vmem:[%s138 + $0x28] sm:$0xff]
      %v357 = vld [vmem:[%s138 + $0x30] sm:$0xff]
      %v358 = vld [vmem:[%s138 + $0x38] sm:$0xff]
      %v359 = vld [vmem:[%s138 + $0x40] sm:$0xff]
      %v360 = vld [vmem:[%s138 + $0x48] sm:$0xff]
      %v361 = vld [vmem:[%s138 + $0x50] sm:$0xff]
      %v362 = vld [vmem:[%s138 + $0x58] sm:$0xff]
      %s372 = scalar_lea.vmem [#allocation1], 1
      %373 = vst [vmem:[%s372] ss:$2 sm:$0xff] %v352
      %s374 = scalar_lea.vmem [#allocation1], 17
      %375 = vst [vmem:[%s374] ss:$2 sm:$0xff] %v353
      %s376 = scalar_lea.vmem [#allocation1], 33
      %377 = vst [vmem:[%s376] ss:$2 sm:$0xff] %v354
      %s378 = scalar_lea.vmem [#allocation1], 49
      %379 = vst [vmem:[%s378] ss:$2 sm:$0xff] %v355
      %v380 = vld.sshfl [vmem:[#allocation1] sm:$0xff pattern:$0x75316420]
      %v381 = vld.sshfl [vmem:[#allocation1 + $0x8] sm:$0xff pattern:$0x75316420]
      %v382 = vld.sshfl [vmem:[#allocation1 + $0x10] sm:$0xff pattern:$0x75316420]
      %v383 = vld.sshfl [vmem:[#allocation1 + $0x18] sm:$0xff pattern:$0x75316420]
      %v384 = vld.sshfl [vmem:[#allocation1 + $0x20] sm:$0xff pattern:$0x75316420]
      %v385 = vld.sshfl [vmem:[#allocation1 + $0x28] sm:$0xff pattern:$0x75316420]
      %v386 = vld.sshfl [vmem:[#allocation1 + $0x30] sm:$0xff pattern:$0x75316420]
      %v387 = vld.sshfl [vmem:[#allocation1 + $0x38] sm:$0xff pattern:$0x75316420]
      %388 = vst [vmem:[%s372] ss:$2 sm:$0xff] %v356
      %389 = vst [vmem:[%s374] ss:$2 sm:$0xff] %v357
      %390 = vst [vmem:[%s376] ss:$2 sm:$0xff] %v358
      %391 = vst [vmem:[%s378] ss:$2 sm:$0xff] %v359
      %v392 = vld.sshfl [vmem:[#allocation1] sm:$0xff pattern:$0x75316420]
      %v393 = vld.sshfl [vmem:[#allocation1 + $0x8] sm:$0xff pattern:$0x75316420]
      %v394 = vld.sshfl [vmem:[#allocation1 + $0x10] sm:$0xff pattern:$0x75316420]
      %v395 = vld.sshfl [vmem:[#allocation1 + $0x18] sm:$0xff pattern:$0x75316420]
      %v396 = vld.sshfl [vmem:[#allocation1 + $0x20] sm:$0xff pattern:$0x75316420]
      %v397 = vld.sshfl [vmem:[#allocation1 + $0x28] sm:$0xff pattern:$0x75316420]
      %v398 = vld.sshfl [vmem:[#allocation1 + $0x30] sm:$0xff pattern:$0x75316420]
      %v399 = vld.sshfl [vmem:[#allocation1 + $0x38] sm:$0xff pattern:$0x75316420]
      %400 = vst [vmem:[%s372] ss:$2 sm:$0xff] %v360
      %v401 = vld.sshfl [vmem:[#allocation1] sm:$0xff pattern:$0x75316420]
      %402 = vrot.lane.b32.xlu0 %v380, 126
      %v403 = vpop.permute.xlu0 %402
      %404 = vrot.lane.b32.xlu0 %v381, 126
      %v405 = vpop.permute.xlu0 %404
      %406 = vrot.lane.b32.xlu0 %v382, 126
      %v407 = vpop.permute.xlu0 %406
      %408 = vrot.lane.b32.xlu0 %v383, 126
      %v409 = vpop.permute.xlu0 %408
      %410 = vrot.lane.b32.xlu0 %v384, 126
      %v411 = vpop.permute.xlu0 %410
      %412 = vrot.lane.b32.xlu0 %v385, 126
      %v413 = vpop.permute.xlu0 %412
      %414 = vrot.lane.b32.xlu0 %v386, 126
      %v415 = vpop.permute.xlu0 %414
      %416 = vrot.lane.b32.xlu0 %v387, 126
      %v417 = vpop.permute.xlu0 %416
      %418 = vrot.lane.b32.xlu0 %v392, 126
      %v419 = vpop.permute.xlu0 %418
      %420 = vrot.lane.b32.xlu0 %v393, 126
      %v421 = vpop.permute.xlu0 %420
      %422 = vrot.lane.b32.xlu0 %v394, 126
      %v423 = vpop.permute.xlu0 %422
      %424 = vrot.lane.b32.xlu0 %v395, 126
      %v425 = vpop.permute.xlu0 %424
      %426 = vrot.lane.b32.xlu0 %v396, 126
      %v427 = vpop.permute.xlu0 %426
      %428 = vrot.lane.b32.xlu0 %v397, 126
      %v429 = vpop.permute.xlu0 %428
      %430 = vrot.lane.b32.xlu0 %v398, 126
      %v431 = vpop.permute.xlu0 %430
      %432 = vrot.lane.b32.xlu0 %v399, 126
      %v433 = vpop.permute.xlu0 %432
      %434 = vrot.lane.b32.xlu0 %v401, 126
      %v435 = vpop.permute.xlu0 %434
      %vm436 = vcmask 1031168
      %v437 = vsel %vm436, %v403, %v405
      %v438 = vsel %vm436, %v405, %v407
      %v439 = vsel %vm436, %v407, %v409
      %v440 = vsel %vm436, %v409, %v411
      %v441 = vsel %vm436, %v411, %v413
      %v442 = vsel %vm436, %v413, %v415
      %v443 = vsel %vm436, %v415, %v417
      %v444 = vsel %vm436, %v417, %v419
      %v445 = vsel %vm436, %v419, %v421
      %v446 = vsel %vm436, %v421, %v423
      %v447 = vsel %vm436, %v423, %v425
      %v448 = vsel %vm436, %v425, %v427
      %v449 = vsel %vm436, %v427, %v429
      %v450 = vsel %vm436, %v429, %v431
      %v451 = vsel %vm436, %v431, %v433
      %v452 = vsel %vm436, %v433, %v435
      %469 = vst [vmem:[#allocation2 + $0x200] sm:$0xf0] %v437
      %470 = vst [vmem:[#allocation2 + $0x208] sm:$0xf0] %v438
      %471 = vst [vmem:[#allocation2 + $0x210] sm:$0xf0] %v439
      %472 = vst [vmem:[#allocation2 + $0x218] sm:$0xf0] %v440
      %473 = vst [vmem:[#allocation2 + $0x220] sm:$0xf0] %v441
      %474 = vst [vmem:[#allocation2 + $0x228] sm:$0xf0] %v442
      %475 = vst [vmem:[#allocation2 + $0x230] sm:$0xf0] %v443
      %476 = vst [vmem:[#allocation2 + $0x238] sm:$0xf0] %v444
      %477 = vst [vmem:[#allocation2 + $0x240] sm:$0xf0] %v445
      %478 = vst [vmem:[#allocation2 + $0x248] sm:$0xf0] %v446
      %479 = vst [vmem:[#allocation2 + $0x250] sm:$0xf0] %v447
      %480 = vst [vmem:[#allocation2 + $0x258] sm:$0xf0] %v448
      %481 = vst [vmem:[#allocation2 + $0x260] sm:$0xf0] %v449
      %482 = vst [vmem:[#allocation2 + $0x268] sm:$0xf0] %v450
      %483 = vst [vmem:[#allocation2 + $0x270] sm:$0xf0] %v451
      %484 = vst [vmem:[#allocation2 + $0x278] sm:$0xf0] %v452
      %486 = vst [vmem:[#allocation1] ss:$2 sm:$0xff] %v353
      %s487 = scalar_lea.vmem [#allocation1], 16
      %488 = vst [vmem:[%s487] ss:$2 sm:$0xff] %v354
      %s489 = scalar_lea.vmem [#allocation1], 32
      %490 = vst [vmem:[%s489] ss:$2 sm:$0xff] %v355
      %s491 = scalar_lea.vmem [#allocation1], 48
      %492 = vst [vmem:[%s491] ss:$2 sm:$0xff] %v356
      %v493 = vld.sshfl [vmem:[#allocation1] sm:$0xff pattern:$0x75316420]
      %v494 = vld.sshfl [vmem:[#allocation1 + $0x8] sm:$0xff pattern:$0x75316420]
      %v495 = vld.sshfl [vmem:[#allocation1 + $0x10] sm:$0xff pattern:$0x75316420]
      %v496 = vld.sshfl [vmem:[#allocation1 + $0x18] sm:$0xff pattern:$0x75316420]
      %v497 = vld.sshfl [vmem:[#allocation1 + $0x20] sm:$0xff pattern:$0x75316420]
      %v498 = vld.sshfl [vmem:[#allocation1 + $0x28] sm:$0xff pattern:$0x75316420]
      %v499 = vld.sshfl [vmem:[#allocation1 + $0x30] sm:$0xff pattern:$0x75316420]
      %v500 = vld.sshfl [vmem:[#allocation1 + $0x38] sm:$0xff pattern:$0x75316420]
      %501 = vst [vmem:[#allocation1] ss:$2 sm:$0xff] %v357
      %502 = vst [vmem:[%s487] ss:$2 sm:$0xff] %v358
      %503 = vst [vmem:[%s489] ss:$2 sm:$0xff] %v359
      %504 = vst [vmem:[%s491] ss:$2 sm:$0xff] %v360
      %v505 = vld.sshfl [vmem:[#allocation1] sm:$0xff pattern:$0x75316420]
      %v506 = vld.sshfl [vmem:[#allocation1 + $0x8] sm:$0xff pattern:$0x75316420]
      %v507 = vld.sshfl [vmem:[#allocation1 + $0x10] sm:$0xff pattern:$0x75316420]
      %v508 = vld.sshfl [vmem:[#allocation1 + $0x18] sm:$0xff pattern:$0x75316420]
      %v509 = vld.sshfl [vmem:[#allocation1 + $0x20] sm:$0xff pattern:$0x75316420]
      %v510 = vld.sshfl [vmem:[#allocation1 + $0x28] sm:$0xff pattern:$0x75316420]
      %v511 = vld.sshfl [vmem:[#allocation1 + $0x30] sm:$0xff pattern:$0x75316420]
      %v512 = vld.sshfl [vmem:[#allocation1 + $0x38] sm:$0xff pattern:$0x75316420]
      %513 = vst [vmem:[#allocation1] ss:$2 sm:$0xff] %v361
      %v514 = vld.sshfl [vmem:[#allocation1] sm:$0xff pattern:$0x75316420]
      %515 = vrot.lane.b32.xlu0 %v493, 126
      %v516 = vpop.permute.xlu0 %515
      %517 = vrot.lane.b32.xlu0 %v494, 126
      %v518 = vpop.permute.xlu0 %517
      %519 = vrot.lane.b32.xlu0 %v495, 126
      %v520 = vpop.permute.xlu0 %519
      %521 = vrot.lane.b32.xlu0 %v496, 126
      %v522 = vpop.permute.xlu0 %521
      %523 = vrot.lane.b32.xlu0 %v497, 126
      %v524 = vpop.permute.xlu0 %523
      %525 = vrot.lane.b32.xlu0 %v498, 126
      %v526 = vpop.permute.xlu0 %525
      %527 = vrot.lane.b32.xlu0 %v499, 126
      %v528 = vpop.permute.xlu0 %527
      %529 = vrot.lane.b32.xlu0 %v500, 126
      %v530 = vpop.permute.xlu0 %529
      %531 = vrot.lane.b32.xlu0 %v505, 126
      %v532 = vpop.permute.xlu0 %531
      %533 = vrot.lane.b32.xlu0 %v506, 126
      %v534 = vpop.permute.xlu0 %533
      %535 = vrot.lane.b32.xlu0 %v507, 126
      %v536 = vpop.permute.xlu0 %535
      %537 = vrot.lane.b32.xlu0 %v508, 126
      %v538 = vpop.permute.xlu0 %537
      %539 = vrot.lane.b32.xlu0 %v509, 126
      %v540 = vpop.permute.xlu0 %539
      %541 = vrot.lane.b32.xlu0 %v510, 126
      %v542 = vpop.permute.xlu0 %541
      %543 = vrot.lane.b32.xlu0 %v511, 126
      %v544 = vpop.permute.xlu0 %543
      %545 = vrot.lane.b32.xlu0 %v512, 126
      %v546 = vpop.permute.xlu0 %545
      %547 = vrot.lane.b32.xlu0 %v514, 126
      %v548 = vpop.permute.xlu0 %547
      %v549 = vsel %vm436, %v516, %v518
      %v550 = vsel %vm436, %v518, %v520
      %v551 = vsel %vm436, %v520, %v522
      %v552 = vsel %vm436, %v522, %v524
      %v553 = vsel %vm436, %v524, %v526
      %v554 = vsel %vm436, %v526, %v528
      %v555 = vsel %vm436, %v528, %v530
      %v556 = vsel %vm436, %v530, %v532
      %v557 = vsel %vm436, %v532, %v534
      %v558 = vsel %vm436, %v534, %v536
      %v559 = vsel %vm436, %v536, %v538
      %v560 = vsel %vm436, %v538, %v540
      %v561 = vsel %vm436, %v540, %v542
      %v562 = vsel %vm436, %v542, %v544
      %v563 = vsel %vm436, %v544, %v546
      %v564 = vsel %vm436, %v546, %v548
      %581 = vst [vmem:[#allocation2 + $0x300] sm:$0xf] %v549
      %582 = vst [vmem:[#allocation2 + $0x308] sm:$0xf] %v550
      %583 = vst [vmem:[#allocation2 + $0x310] sm:$0xf] %v551
      %584 = vst [vmem:[#allocation2 + $0x318] sm:$0xf] %v552
      %585 = vst [vmem:[#allocation2 + $0x320] sm:$0xf] %v553
      %586 = vst [vmem:[#allocation2 + $0x328] sm:$0xf] %v554
      %587 = vst [vmem:[#allocation2 + $0x330] sm:$0xf] %v555
      %588 = vst [vmem:[#allocation2 + $0x338] sm:$0xf] %v556
      %589 = vst [vmem:[#allocation2 + $0x340] sm:$0xf] %v557
      %590 = vst [vmem:[#allocation2 + $0x348] sm:$0xf] %v558
      %591 = vst [vmem:[#allocation2 + $0x350] sm:$0xf] %v559
      %592 = vst [vmem:[#allocation2 + $0x358] sm:$0xf] %v560
      %593 = vst [vmem:[#allocation2 + $0x360] sm:$0xf] %v561
      %594 = vst [vmem:[#allocation2 + $0x368] sm:$0xf] %v562
      %595 = vst [vmem:[#allocation2 + $0x370] sm:$0xf] %v563
      %596 = vst [vmem:[#allocation2 + $0x378] sm:$0xf] %v564
      %s598 = scalar_lea.vmem [#allocation1], 1
      %599 = vst [vmem:[%s598] ss:$2 sm:$0xff] %v354
      %s600 = scalar_lea.vmem [#allocation1], 17
      %601 = vst [vmem:[%s600] ss:$2 sm:$0xff] %v355
      %s602 = scalar_lea.vmem [#allocation1], 33
      %603 = vst [vmem:[%s602] ss:$2 sm:$0xff] %v356
      %s604 = scalar_lea.vmem [#allocation1], 49
      %605 = vst [vmem:[%s604] ss:$2 sm:$0xff] %v357
      %v606 = vld.sshfl [vmem:[#allocation1] sm:$0xff pattern:$0x75316420]
      %v607 = vld.sshfl [vmem:[#allocation1 + $0x8] sm:$0xff pattern:$0x75316420]
      %v608 = vld.sshfl [vmem:[#allocation1 + $0x10] sm:$0xff pattern:$0x75316420]
      %v609 = vld.sshfl [vmem:[#allocation1 + $0x18] sm:$0xff pattern:$0x75316420]
      %v610 = vld.sshfl [vmem:[#allocation1 + $0x20] sm:$0xff pattern:$0x75316420]
      %v611 = vld.sshfl [vmem:[#allocation1 + $0x28] sm:$0xff pattern:$0x75316420]
      %v612 = vld.sshfl [vmem:[#allocation1 + $0x30] sm:$0xff pattern:$0x75316420]
      %v613 = vld.sshfl [vmem:[#allocation1 + $0x38] sm:$0xff pattern:$0x75316420]
      %614 = vst [vmem:[%s598] ss:$2 sm:$0xff] %v358
      %615 = vst [vmem:[%s600] ss:$2 sm:$0xff] %v359
      %616 = vst [vmem:[%s602] ss:$2 sm:$0xff] %v360
      %617 = vst [vmem:[%s604] ss:$2 sm:$0xff] %v361
      %v618 = vld.sshfl [vmem:[#allocation1] sm:$0xff pattern:$0x75316420]
      %v619 = vld.sshfl [vmem:[#allocation1 + $0x8] sm:$0xff pattern:$0x75316420]
      %v620 = vld.sshfl [vmem:[#allocation1 + $0x10] sm:$0xff pattern:$0x75316420]
      %v621 = vld.sshfl [vmem:[#allocation1 + $0x18] sm:$0xff pattern:$0x75316420]
      %v622 = vld.sshfl [vmem:[#allocation1 + $0x20] sm:$0xff pattern:$0x75316420]
      %v623 = vld.sshfl [vmem:[#allocation1 + $0x28] sm:$0xff pattern:$0x75316420]
      %v624 = vld.sshfl [vmem:[#allocation1 + $0x30] sm:$0xff pattern:$0x75316420]
      %v625 = vld.sshfl [vmem:[#allocation1 + $0x38] sm:$0xff pattern:$0x75316420]
      %626 = vst [vmem:[%s598] ss:$2 sm:$0xff] %v362
      %v627 = vld.sshfl [vmem:[#allocation1] sm:$0xff pattern:$0x75316420]
      %628 = vrot.lane.b32.xlu0 %v606, 126
      %v629 = vpop.permute.xlu0 %628
      %630 = vrot.lane.b32.xlu0 %v607, 126
      %v631 = vpop.permute.xlu0 %630
      %632 = vrot.lane.b32.xlu0 %v608, 126
      %v633 = vpop.permute.xlu0 %632
      %634 = vrot.lane.b32.xlu0 %v609, 126
      %v635 = vpop.permute.xlu0 %634
      %636 = vrot.lane.b32.xlu0 %v610, 126
      %v637 = vpop.permute.xlu0 %636
      %638 = vrot.lane.b32.xlu0 %v611, 126
      %v639 = vpop.permute.xlu0 %638
      %640 = vrot.lane.b32.xlu0 %v612, 126
      %v641 = vpop.permute.xlu0 %640
      %642 = vrot.lane.b32.xlu0 %v613, 126
      %v643 = vpop.permute.xlu0 %642
      %644 = vrot.lane.b32.xlu0 %v618, 126
      %v645 = vpop.permute.xlu0 %644
      %646 = vrot.lane.b32.xlu0 %v619, 126
      %v647 = vpop.permute.xlu0 %646
      %648 = vrot.lane.b32.xlu0 %v620, 126
      %v649 = vpop.permute.xlu0 %648
      %650 = vrot.lane.b32.xlu0 %v621, 126
      %v651 = vpop.permute.xlu0 %650
      %652 = vrot.lane.b32.xlu0 %v622, 126
      %v653 = vpop.permute.xlu0 %652
      %654 = vrot.lane.b32.xlu0 %v623, 126
      %v655 = vpop.permute.xlu0 %654
      %656 = vrot.lane.b32.xlu0 %v624, 126
      %v657 = vpop.permute.xlu0 %656
      %658 = vrot.lane.b32.xlu0 %v625, 126
      %v659 = vpop.permute.xlu0 %658
      %660 = vrot.lane.b32.xlu0 %v627, 126
      %v661 = vpop.permute.xlu0 %660
      %v662 = vsel %vm436, %v629, %v631
      %v663 = vsel %vm436, %v631, %v633
      %v664 = vsel %vm436, %v633, %v635
      %v665 = vsel %vm436, %v635, %v637
      %v666 = vsel %vm436, %v637, %v639
      %v667 = vsel %vm436, %v639, %v641
      %v668 = vsel %vm436, %v641, %v643
      %v669 = vsel %vm436, %v643, %v645
      %v670 = vsel %vm436, %v645, %v647
      %v671 = vsel %vm436, %v647, %v649
      %v672 = vsel %vm436, %v649, %v651
      %v673 = vsel %vm436, %v651, %v653
      %v674 = vsel %vm436, %v653, %v655
      %v675 = vsel %vm436, %v655, %v657
      %v676 = vsel %vm436, %v657, %v659
      %v677 = vsel %vm436, %v659, %v661
      %694 = vst [vmem:[#allocation2 + $0x380] sm:$0xf0] %v662
      %695 = vst [vmem:[#allocation2 + $0x388] sm:$0xf0] %v663
      %696 = vst [vmem:[#allocation2 + $0x390] sm:$0xf0] %v664
      %697 = vst [vmem:[#allocation2 + $0x398] sm:$0xf0] %v665
      %698 = vst [vmem:[#allocation2 + $0x3a0] sm:$0xf0] %v666
      %699 = vst [vmem:[#allocation2 + $0x3a8] sm:$0xf0] %v667
      %700 = vst [vmem:[#allocation2 + $0x3b0] sm:$0xf0] %v668
      %701 = vst [vmem:[#allocation2 + $0x3b8] sm:$0xf0] %v669
      %702 = vst [vmem:[#allocation2 + $0x3c0] sm:$0xf0] %v670
      %703 = vst [vmem:[#allocation2 + $0x3c8] sm:$0xf0] %v671
      %704 = vst [vmem:[#allocation2 + $0x3d0] sm:$0xf0] %v672
      %705 = vst [vmem:[#allocation2 + $0x3d8] sm:$0xf0] %v673
      %706 = vst [vmem:[#allocation2 + $0x3e0] sm:$0xf0] %v674
      %707 = vst [vmem:[#allocation2 + $0x3e8] sm:$0xf0] %v675
      %708 = vst [vmem:[#allocation2 + $0x3f0] sm:$0xf0] %v676
      %709 = vst [vmem:[#allocation2 + $0x3f8] sm:$0xf0] %v677
      %v710 = vld [vmem:[%s138 + $0x8] sm:$0xff]
      %v711 = vld [vmem:[%s138 + $0x10] sm:$0xff]
      %v712 = vld [vmem:[%s138 + $0x18] sm:$0xff]
      %v713 = vld [vmem:[%s138 + $0x20] sm:$0xff]
      %v714 = vld [vmem:[%s138 + $0x28] sm:$0xff]
      %v715 = vld [vmem:[%s138 + $0x30] sm:$0xff]
      %v716 = vld [vmem:[%s138 + $0x38] sm:$0xff]
      %v717 = vld [vmem:[%s138 + $0x40] sm:$0xff]
      %v718 = vld [vmem:[%s138 + $0x48] sm:$0xff]
      %v719 = vld [vmem:[%s138 + $0x50] sm:$0xff]
      %729 = vst [vmem:[#allocation1] ss:$2 sm:$0xff] %v710
      %s730 = scalar_lea.vmem [#allocation1], 16
      %731 = vst [vmem:[%s730] ss:$2 sm:$0xff] %v711
      %s732 = scalar_lea.vmem [#allocation1], 32
      %733 = vst [vmem:[%s732] ss:$2 sm:$0xff] %v712
      %s734 = scalar_lea.vmem [#allocation1], 48
      %735 = vst [vmem:[%s734] ss:$2 sm:$0xff] %v713
      %v736 = vld.sshfl [vmem:[#allocation1 + $0x8] sm:$0xff pattern:$0x75316420]
      %v737 = vld.sshfl [vmem:[#allocation1 + $0x10] sm:$0xff pattern:$0x75316420]
      %v738 = vld.sshfl [vmem:[#allocation1 + $0x18] sm:$0xff pattern:$0x75316420]
      %v739 = vld.sshfl [vmem:[#allocation1 + $0x20] sm:$0xff pattern:$0x75316420]
      %v740 = vld.sshfl [vmem:[#allocation1 + $0x28] sm:$0xff pattern:$0x75316420]
      %v741 = vld.sshfl [vmem:[#allocation1 + $0x30] sm:$0xff pattern:$0x75316420]
      %v742 = vld.sshfl [vmem:[#allocation1 + $0x38] sm:$0xff pattern:$0x75316420]
      %743 = vst [vmem:[#allocation1] ss:$2 sm:$0xff] %v714
      %744 = vst [vmem:[%s730] ss:$2 sm:$0xff] %v715
      %745 = vst [vmem:[%s732] ss:$2 sm:$0xff] %v716
      %746 = vst [vmem:[%s734] ss:$2 sm:$0xff] %v717
      %v747 = vld.sshfl [vmem:[#allocation1] sm:$0xff pattern:$0x75316420]
      %v748 = vld.sshfl [vmem:[#allocation1 + $0x8] sm:$0xff pattern:$0x75316420]
      %v749 = vld.sshfl [vmem:[#allocation1 + $0x10] sm:$0xff pattern:$0x75316420]
      %v750 = vld.sshfl [vmem:[#allocation1 + $0x18] sm:$0xff pattern:$0x75316420]
      %v751 = vld.sshfl [vmem:[#allocation1 + $0x20] sm:$0xff pattern:$0x75316420]
      %v752 = vld.sshfl [vmem:[#allocation1 + $0x28] sm:$0xff pattern:$0x75316420]
      %v753 = vld.sshfl [vmem:[#allocation1 + $0x30] sm:$0xff pattern:$0x75316420]
      %v754 = vld.sshfl [vmem:[#allocation1 + $0x38] sm:$0xff pattern:$0x75316420]
      %755 = vst [vmem:[#allocation1] ss:$2 sm:$0xff] %v718
      %v756 = vld.sshfl [vmem:[#allocation1] sm:$0xff pattern:$0x75316420]
      %v757 = vld.sshfl [vmem:[#allocation1 + $0x8] sm:$0xff pattern:$0x75316420]
      %758 = vrot.lane.b32.xlu0 %v736, 125
      %v759 = vpop.permute.xlu0 %758
      %760 = vrot.lane.b32.xlu0 %v737, 125
      %v761 = vpop.permute.xlu0 %760
      %762 = vrot.lane.b32.xlu0 %v738, 125
      %v763 = vpop.permute.xlu0 %762
      %764 = vrot.lane.b32.xlu0 %v739, 125
      %v765 = vpop.permute.xlu0 %764
      %766 = vrot.lane.b32.xlu0 %v740, 125
      %v767 = vpop.permute.xlu0 %766
      %768 = vrot.lane.b32.xlu0 %v741, 125
      %v769 = vpop.permute.xlu0 %768
      %770 = vrot.lane.b32.xlu0 %v742, 125
      %v771 = vpop.permute.xlu0 %770
      %772 = vrot.lane.b32.xlu0 %v747, 125
      %v773 = vpop.permute.xlu0 %772
      %774 = vrot.lane.b32.xlu0 %v748, 125
      %v775 = vpop.permute.xlu0 %774
      %776 = vrot.lane.b32.xlu0 %v749, 125
      %v777 = vpop.permute.xlu0 %776
      %778 = vrot.lane.b32.xlu0 %v750, 125
      %v779 = vpop.permute.xlu0 %778
      %780 = vrot.lane.b32.xlu0 %v751, 125
      %v781 = vpop.permute.xlu0 %780
      %782 = vrot.lane.b32.xlu0 %v752, 125
      %v783 = vpop.permute.xlu0 %782
      %784 = vrot.lane.b32.xlu0 %v753, 125
      %v785 = vpop.permute.xlu0 %784
      %786 = vrot.lane.b32.xlu0 %v754, 125
      %v787 = vpop.permute.xlu0 %786
      %788 = vrot.lane.b32.xlu0 %v756, 125
      %v789 = vpop.permute.xlu0 %788
      %790 = vrot.lane.b32.xlu0 %v757, 125
      %v791 = vpop.permute.xlu0 %790
      %vm792 = vcmask 1022976
      %v793 = vsel %vm792, %v759, %v761
      %v794 = vsel %vm792, %v761, %v763
      %v795 = vsel %vm792, %v763, %v765
      %v796 = vsel %vm792, %v765, %v767
      %v797 = vsel %vm792, %v767, %v769
      %v798 = vsel %vm792, %v769, %v771
      %v799 = vsel %vm792, %v771, %v773
      %v800 = vsel %vm792, %v773, %v775
      %v801 = vsel %vm792, %v775, %v777
      %v802 = vsel %vm792, %v777, %v779
      %v803 = vsel %vm792, %v779, %v781
      %v804 = vsel %vm792, %v781, %v783
      %v805 = vsel %vm792, %v783, %v785
      %v806 = vsel %vm792, %v785, %v787
      %v807 = vsel %vm792, %v787, %v789
      %v808 = vsel %vm792, %v789, %v791
      %825 = vst [vmem:[#allocation2] sm:$0xf] %v793
      %826 = vst [vmem:[#allocation2 + $0x8] sm:$0xf] %v794
      %827 = vst [vmem:[#allocation2 + $0x10] sm:$0xf] %v795
      %828 = vst [vmem:[#allocation2 + $0x18] sm:$0xf] %v796
      %829 = vst [vmem:[#allocation2 + $0x20] sm:$0xf] %v797
      %830 = vst [vmem:[#allocation2 + $0x28] sm:$0xf] %v798
      %831 = vst [vmem:[#allocation2 + $0x30] sm:$0xf] %v799
      %832 = vst [vmem:[#allocation2 + $0x38] sm:$0xf] %v800
      %833 = vst [vmem:[#allocation2 + $0x40] sm:$0xf] %v801
      %834 = vst [vmem:[#allocation2 + $0x48] sm:$0xf] %v802
      %835 = vst [vmem:[#allocation2 + $0x50] sm:$0xf] %v803
      %836 = vst [vmem:[#allocation2 + $0x58] sm:$0xf] %v804
      %837 = vst [vmem:[#allocation2 + $0x60] sm:$0xf] %v805
      %838 = vst [vmem:[#allocation2 + $0x68] sm:$0xf] %v806
      %839 = vst [vmem:[#allocation2 + $0x70] sm:$0xf] %v807
      %840 = vst [vmem:[#allocation2 + $0x78] sm:$0xf] %v808
      %s842 = scalar_lea.vmem [#allocation1], 1
      %843 = vst [vmem:[%s842] ss:$2 sm:$0xff] %v711
      %s844 = scalar_lea.vmem [#allocation1], 17
      %845 = vst [vmem:[%s844] ss:$2 sm:$0xff] %v712
      %s846 = scalar_lea.vmem [#allocation1], 33
      %847 = vst [vmem:[%s846] ss:$2 sm:$0xff] %v713
      %s848 = scalar_lea.vmem [#allocation1], 49
      %849 = vst [vmem:[%s848] ss:$2 sm:$0xff] %v714
      %v850 = vld.sshfl [vmem:[#allocation1] sm:$0xff pattern:$0x75316420]
      %v851 = vld.sshfl [vmem:[#allocation1 + $0x8] sm:$0xff pattern:$0x75316420]
      %v852 = vld.sshfl [vmem:[#allocation1 + $0x10] sm:$0xff pattern:$0x75316420]
      %v853 = vld.sshfl [vmem:[#allocation1 + $0x18] sm:$0xff pattern:$0x75316420]
      %v854 = vld.sshfl [vmem:[#allocation1 + $0x20] sm:$0xff pattern:$0x75316420]
      %v855 = vld.sshfl [vmem:[#allocation1 + $0x28] sm:$0xff pattern:$0x75316420]
      %v856 = vld.sshfl [vmem:[#allocation1 + $0x30] sm:$0xff pattern:$0x75316420]
      %v857 = vld.sshfl [vmem:[#allocation1 + $0x38] sm:$0xff pattern:$0x75316420]
      %858 = vst [vmem:[%s842] ss:$2 sm:$0xff] %v715
      %859 = vst [vmem:[%s844] ss:$2 sm:$0xff] %v716
      %860 = vst [vmem:[%s846] ss:$2 sm:$0xff] %v717
      %861 = vst [vmem:[%s848] ss:$2 sm:$0xff] %v718
      %v862 = vld.sshfl [vmem:[#allocation1] sm:$0xff pattern:$0x75316420]
      %v863 = vld.sshfl [vmem:[#allocation1 + $0x8] sm:$0xff pattern:$0x75316420]
      %v864 = vld.sshfl [vmem:[#allocation1 + $0x10] sm:$0xff pattern:$0x75316420]
      %v865 = vld.sshfl [vmem:[#allocation1 + $0x18] sm:$0xff pattern:$0x75316420]
      %v866 = vld.sshfl [vmem:[#allocation1 + $0x20] sm:$0xff pattern:$0x75316420]
      %v867 = vld.sshfl [vmem:[#allocation1 + $0x28] sm:$0xff pattern:$0x75316420]
      %v868 = vld.sshfl [vmem:[#allocation1 + $0x30] sm:$0xff pattern:$0x75316420]
      %v869 = vld.sshfl [vmem:[#allocation1 + $0x38] sm:$0xff pattern:$0x75316420]
      %870 = vst [vmem:[%s842] ss:$2 sm:$0xff] %v719
      %v871 = vld.sshfl [vmem:[#allocation1] sm:$0xff pattern:$0x75316420]
      %872 = vrot.lane.b32.xlu0 %v850, 125
      %v873 = vpop.permute.xlu0 %872
      %874 = vrot.lane.b32.xlu0 %v851, 125
      %v875 = vpop.permute.xlu0 %874
      %876 = vrot.lane.b32.xlu0 %v852, 125
      %v877 = vpop.permute.xlu0 %876
      %878 = vrot.lane.b32.xlu0 %v853, 125
      %v879 = vpop.permute.xlu0 %878
      %880 = vrot.lane.b32.xlu0 %v854, 125
      %v881 = vpop.permute.xlu0 %880
      %882 = vrot.lane.b32.xlu0 %v855, 125
      %v883 = vpop.permute.xlu0 %882
      %884 = vrot.lane.b32.xlu0 %v856, 125
      %v885 = vpop.permute.xlu0 %884
      %886 = vrot.lane.b32.xlu0 %v857, 125
      %v887 = vpop.permute.xlu0 %886
      %888 = vrot.lane.b32.xlu0 %v862, 125
      %v889 = vpop.permute.xlu0 %888
      %890 = vrot.lane.b32.xlu0 %v863, 125
      %v891 = vpop.permute.xlu0 %890
      %892 = vrot.lane.b32.xlu0 %v864, 125
      %v893 = vpop.permute.xlu0 %892
      %894 = vrot.lane.b32.xlu0 %v865, 125
      %v895 = vpop.permute.xlu0 %894
      %896 = vrot.lane.b32.xlu0 %v866, 125
      %v897 = vpop.permute.xlu0 %896
      %898 = vrot.lane.b32.xlu0 %v867, 125
      %v899 = vpop.permute.xlu0 %898
      %900 = vrot.lane.b32.xlu0 %v868, 125
      %v901 = vpop.permute.xlu0 %900
      %902 = vrot.lane.b32.xlu0 %v869, 125
      %v903 = vpop.permute.xlu0 %902
      %904 = vrot.lane.b32.xlu0 %v871, 125
      %v905 = vpop.permute.xlu0 %904
      %v906 = vsel %vm792, %v873, %v875
      %v907 = vsel %vm792, %v875, %v877
      %v908 = vsel %vm792, %v877, %v879
      %v909 = vsel %vm792, %v879, %v881
      %v910 = vsel %vm792, %v881, %v883
      %v911 = vsel %vm792, %v883, %v885
      %v912 = vsel %vm792, %v885, %v887
      %v913 = vsel %vm792, %v887, %v889
      %v914 = vsel %vm792, %v889, %v891
      %v915 = vsel %vm792, %v891, %v893
      %v916 = vsel %vm792, %v893, %v895
      %v917 = vsel %vm792, %v895, %v897
      %v918 = vsel %vm792, %v897, %v899
      %v919 = vsel %vm792, %v899, %v901
      %v920 = vsel %vm792, %v901, %v903
      %v921 = vsel %vm792, %v903, %v905
      %938 = vst [vmem:[#allocation2 + $0x80] sm:$0xf0] %v906
      %939 = vst [vmem:[#allocation2 + $0x88] sm:$0xf0] %v907
      %940 = vst [vmem:[#allocation2 + $0x90] sm:$0xf0] %v908
      %941 = vst [vmem:[#allocation2 + $0x98] sm:$0xf0] %v909
      %942 = vst [vmem:[#allocation2 + $0xa0] sm:$0xf0] %v910
      %943 = vst [vmem:[#allocation2 + $0xa8] sm:$0xf0] %v911
      %944 = vst [vmem:[#allocation2 + $0xb0] sm:$0xf0] %v912
      %945 = vst [vmem:[#allocation2 + $0xb8] sm:$0xf0] %v913
      %946 = vst [vmem:[#allocation2 + $0xc0] sm:$0xf0] %v914
      %947 = vst [vmem:[#allocation2 + $0xc8] sm:$0xf0] %v915
      %948 = vst [vmem:[#allocation2 + $0xd0] sm:$0xf0] %v916
      %949 = vst [vmem:[#allocation2 + $0xd8] sm:$0xf0] %v917
      %950 = vst [vmem:[#allocation2 + $0xe0] sm:$0xf0] %v918
      %951 = vst [vmem:[#allocation2 + $0xe8] sm:$0xf0] %v919
      %952 = vst [vmem:[#allocation2 + $0xf0] sm:$0xf0] %v920
      %953 = vst [vmem:[#allocation2 + $0xf8] sm:$0xf0] %v921
      %954 = vst [vmem:[#allocation1] ss:$2 sm:$0xff] %v711
      %s955 = scalar_lea.vmem [#allocation1], 16
      %956 = vst [vmem:[%s955] ss:$2 sm:$0xff] %v712
      %s957 = scalar_lea.vmem [#allocation1], 32
      %958 = vst [vmem:[%s957] ss:$2 sm:$0xff] %v713
      %s959 = scalar_lea.vmem [#allocation1], 48
      %960 = vst [vmem:[%s959] ss:$2 sm:$0xff] %v714
      %v961 = vld.sshfl [vmem:[#allocation1 + $0x8] sm:$0xff pattern:$0x75316420]
      %v962 = vld.sshfl [vmem:[#allocation1 + $0x10] sm:$0xff pattern:$0x75316420]
      %v963 = vld.sshfl [vmem:[#allocation1 + $0x18] sm:$0xff pattern:$0x75316420]
      %v964 = vld.sshfl [vmem:[#allocation1 + $0x20] sm:$0xff pattern:$0x75316420]
      %v965 = vld.sshfl [vmem:[#allocation1 + $0x28] sm:$0xff pattern:$0x75316420]
      %v966 = vld.sshfl [vmem:[#allocation1 + $0x30] sm:$0xff pattern:$0x75316420]
      %v967 = vld.sshfl [vmem:[#allocation1 + $0x38] sm:$0xff pattern:$0x75316420]
      %968 = vst [vmem:[#allocation1] ss:$2 sm:$0xff] %v715
      %969 = vst [vmem:[%s955] ss:$2 sm:$0xff] %v716
      %970 = vst [vmem:[%s957] ss:$2 sm:$0xff] %v717
      %971 = vst [vmem:[%s959] ss:$2 sm:$0xff] %v718
      %v972 = vld.sshfl [vmem:[#allocation1] sm:$0xff pattern:$0x75316420]
      %v973 = vld.sshfl [vmem:[#allocation1 + $0x8] sm:$0xff pattern:$0x75316420]
      %v974 = vld.sshfl [vmem:[#allocation1 + $0x10] sm:$0xff pattern:$0x75316420]
      %v975 = vld.sshfl [vmem:[#allocation1 + $0x18] sm:$0xff pattern:$0x75316420]
      %v976 = vld.sshfl [vmem:[#allocation1 + $0x20] sm:$0xff pattern:$0x75316420]
      %v977 = vld.sshfl [vmem:[#allocation1 + $0x28] sm:$0xff pattern:$0x75316420]
      %v978 = vld.sshfl [vmem:[#allocation1 + $0x30] sm:$0xff pattern:$0x75316420]
      %v979 = vld.sshfl [vmem:[#allocation1 + $0x38] sm:$0xff pattern:$0x75316420]
      %980 = vst [vmem:[#allocation1] ss:$2 sm:$0xff] %v719
      %v981 = vld.sshfl [vmem:[#allocation1] sm:$0xff pattern:$0x75316420]
      %v982 = vld.sshfl [vmem:[#allocation1 + $0x8] sm:$0xff pattern:$0x75316420]
      %983 = vrot.lane.b32.xlu0 %v961, 125
      %v984 = vpop.permute.xlu0 %983
      %985 = vrot.lane.b32.xlu0 %v962, 125
      %v986 = vpop.permute.xlu0 %985
      %987 = vrot.lane.b32.xlu0 %v963, 125
      %v988 = vpop.permute.xlu0 %987
      %989 = vrot.lane.b32.xlu0 %v964, 125
      %v990 = vpop.permute.xlu0 %989
      %991 = vrot.lane.b32.xlu0 %v965, 125
      %v992 = vpop.permute.xlu0 %991
      %993 = vrot.lane.b32.xlu0 %v966, 125
      %v994 = vpop.permute.xlu0 %993
      %995 = vrot.lane.b32.xlu0 %v967, 125
      %v996 = vpop.permute.xlu0 %995
      %997 = vrot.lane.b32.xlu0 %v972, 125
      %v998 = vpop.permute.xlu0 %997
      %999 = vrot.lane.b32.xlu0 %v973, 125
      %v1000 = vpop.permute.xlu0 %999
      %1001 = vrot.lane.b32.xlu0 %v974, 125
      %v1002 = vpop.permute.xlu0 %1001
      %1003 = vrot.lane.b32.xlu0 %v975, 125
      %v1004 = vpop.permute.xlu0 %1003
      %1005 = vrot.lane.b32.xlu0 %v976, 125
      %v1006 = vpop.permute.xlu0 %1005
      %1007 = vrot.lane.b32.xlu0 %v977, 125
      %v1008 = vpop.permute.xlu0 %1007
      %1009 = vrot.lane.b32.xlu0 %v978, 125
      %v1010 = vpop.permute.xlu0 %1009
      %1011 = vrot.lane.b32.xlu0 %v979, 125
      %v1012 = vpop.permute.xlu0 %1011
      %1013 = vrot.lane.b32.xlu0 %v981, 125
      %v1014 = vpop.permute.xlu0 %1013
      %1015 = vrot.lane.b32.xlu0 %v982, 125
      %v1016 = vpop.permute.xlu0 %1015
      %v1017 = vsel %vm792, %v984, %v986
      %v1018 = vsel %vm792, %v986, %v988
      %v1019 = vsel %vm792, %v988, %v990
      %v1020 = vsel %vm792, %v990, %v992
      %v1021 = vsel %vm792, %v992, %v994
      %v1022 = vsel %vm792, %v994, %v996
      %v1023 = vsel %vm792, %v996, %v998
      %v1024 = vsel %vm792, %v998, %v1000
      %v1025 = vsel %vm792, %v1000, %v1002
      %v1026 = vsel %vm792, %v1002, %v1004
      %v1027 = vsel %vm792, %v1004, %v1006
      %v1028 = vsel %vm792, %v1006, %v1008
      %v1029 = vsel %vm792, %v1008, %v1010
      %v1030 = vsel %vm792, %v1010, %v1012
      %v1031 = vsel %vm792, %v1012, %v1014
      %v1032 = vsel %vm792, %v1014, %v1016
      %1049 = vst [vmem:[#allocation2 + $0x180] sm:$0xf] %v1017
      %1050 = vst [vmem:[#allocation2 + $0x188] sm:$0xf] %v1018
      %1051 = vst [vmem:[#allocation2 + $0x190] sm:$0xf] %v1019
      %1052 = vst [vmem:[#allocation2 + $0x198] sm:$0xf] %v1020
      %1053 = vst [vmem:[#allocation2 + $0x1a0] sm:$0xf] %v1021
      %1054 = vst [vmem:[#allocation2 + $0x1a8] sm:$0xf] %v1022
      %1055 = vst [vmem:[#allocation2 + $0x1b0] sm:$0xf] %v1023
      %1056 = vst [vmem:[#allocation2 + $0x1b8] sm:$0xf] %v1024
      %1057 = vst [vmem:[#allocation2 + $0x1c0] sm:$0xf] %v1025
      %1058 = vst [vmem:[#allocation2 + $0x1c8] sm:$0xf] %v1026
      %1059 = vst [vmem:[#allocation2 + $0x1d0] sm:$0xf] %v1027
      %1060 = vst [vmem:[#allocation2 + $0x1d8] sm:$0xf] %v1028
      %1061 = vst [vmem:[#allocation2 + $0x1e0] sm:$0xf] %v1029
      %1062 = vst [vmem:[#allocation2 + $0x1e8] sm:$0xf] %v1030
      %1063 = vst [vmem:[#allocation2 + $0x1f0] sm:$0xf] %v1031
      %1064 = vst [vmem:[#allocation2 + $0x1f8] sm:$0xf] %v1032
      %v1065 = vld [vmem:[%s138] sm:$0xff]
      %v1066 = vld [vmem:[%s138 + $0x8] sm:$0xff]
      %v1067 = vld [vmem:[%s138 + $0x10] sm:$0xff]
      %v1068 = vld [vmem:[%s138 + $0x18] sm:$0xff]
      %v1069 = vld [vmem:[%s138 + $0x20] sm:$0xff]
      %v1070 = vld [vmem:[%s138 + $0x28] sm:$0xff]
      %v1071 = vld [vmem:[%s138 + $0x30] sm:$0xff]
      %v1072 = vld [vmem:[%s138 + $0x38] sm:$0xff]
      %v1073 = vld [vmem:[%s138 + $0x40] sm:$0xff]
      %v1074 = vld [vmem:[%s138 + $0x48] sm:$0xff]
      %v1075 = vld [vmem:[%s138 + $0x50] sm:$0xff]
      %v1076 = vld [vmem:[%s138 + $0x58] sm:$0xff]
      %v1077 = vld [vmem:[%s138 + $0x60] sm:$0xf]
      %s1087 = scalar_lea.vmem [#allocation1], 1
      %1088 = vst [vmem:[%s1087] ss:$2 sm:$0xff] %v1066
      %s1089 = scalar_lea.vmem [#allocation1], 17
      %1090 = vst [vmem:[%s1089] ss:$2 sm:$0xff] %v1067
      %s1091 = scalar_lea.vmem [#allocation1], 33
      %1092 = vst [vmem:[%s1091] ss:$2 sm:$0xff] %v1068
      %s1093 = scalar_lea.vmem [#allocation1], 49
      %1094 = vst [vmem:[%s1093] ss:$2 sm:$0xff] %v1069
      %v1095 = vld.sshfl [vmem:[#allocation1 + $0x8] sm:$0xff pattern:$0x75316420]
      %v1096 = vld.sshfl [vmem:[#allocation1 + $0x10] sm:$0xff pattern:$0x75316420]
      %v1097 = vld.sshfl [vmem:[#allocation1 + $0x18] sm:$0xff pattern:$0x75316420]
      %v1098 = vld.sshfl [vmem:[#allocation1 + $0x20] sm:$0xff pattern:$0x75316420]
      %v1099 = vld.sshfl [vmem:[#allocation1 + $0x28] sm:$0xff pattern:$0x75316420]
      %v1100 = vld.sshfl [vmem:[#allocation1 + $0x30] sm:$0xff pattern:$0x75316420]
      %v1101 = vld.sshfl [vmem:[#allocation1 + $0x38] sm:$0xff pattern:$0x75316420]
      %1102 = vst [vmem:[%s1087] ss:$2 sm:$0xff] %v1070
      %1103 = vst [vmem:[%s1089] ss:$2 sm:$0xff] %v1071
      %1104 = vst [vmem:[%s1091] ss:$2 sm:$0xff] %v1072
      %1105 = vst [vmem:[%s1093] ss:$2 sm:$0xff] %v1073
      %v1106 = vld.sshfl [vmem:[#allocation1] sm:$0xff pattern:$0x75316420]
      %v1107 = vld.sshfl [vmem:[#allocation1 + $0x8] sm:$0xff pattern:$0x75316420]
      %v1108 = vld.sshfl [vmem:[#allocation1 + $0x10] sm:$0xff pattern:$0x75316420]
      %v1109 = vld.sshfl [vmem:[#allocation1 + $0x18] sm:$0xff pattern:$0x75316420]
      %v1110 = vld.sshfl [vmem:[#allocation1 + $0x20] sm:$0xff pattern:$0x75316420]
      %v1111 = vld.sshfl [vmem:[#allocation1 + $0x28] sm:$0xff pattern:$0x75316420]
      %v1112 = vld.sshfl [vmem:[#allocation1 + $0x30] sm:$0xff pattern:$0x75316420]
      %v1113 = vld.sshfl [vmem:[#allocation1 + $0x38] sm:$0xff pattern:$0x75316420]
      %1114 = vst [vmem:[%s1087] ss:$2 sm:$0xff] %v1074
      %v1115 = vld.sshfl [vmem:[#allocation1] sm:$0xff pattern:$0x75316420]
      %v1116 = vld.sshfl [vmem:[#allocation1 + $0x8] sm:$0xff pattern:$0x75316420]
      %1117 = vrot.lane.b32.xlu0 %v1095, 124
      %v1118 = vpop.permute.xlu0 %1117
      %1119 = vrot.lane.b32.xlu0 %v1096, 124
      %v1120 = vpop.permute.xlu0 %1119
      %1121 = vrot.lane.b32.xlu0 %v1097, 124
      %v1122 = vpop.permute.xlu0 %1121
      %1123 = vrot.lane.b32.xlu0 %v1098, 124
      %v1124 = vpop.permute.xlu0 %1123
      %1125 = vrot.lane.b32.xlu0 %v1099, 124
      %v1126 = vpop.permute.xlu0 %1125
      %1127 = vrot.lane.b32.xlu0 %v1100, 124
      %v1128 = vpop.permute.xlu0 %1127
      %1129 = vrot.lane.b32.xlu0 %v1101, 124
      %v1130 = vpop.permute.xlu0 %1129
      %1131 = vrot.lane.b32.xlu0 %v1106, 124
      %v1132 = vpop.permute.xlu0 %1131
      %1133 = vrot.lane.b32.xlu0 %v1107, 124
      %v1134 = vpop.permute.xlu0 %1133
      %1135 = vrot.lane.b32.xlu0 %v1108, 124
      %v1136 = vpop.permute.xlu0 %1135
      %1137 = vrot.lane.b32.xlu0 %v1109, 124
      %v1138 = vpop.permute.xlu0 %1137
      %1139 = vrot.lane.b32.xlu0 %v1110, 124
      %v1140 = vpop.permute.xlu0 %1139
      %1141 = vrot.lane.b32.xlu0 %v1111, 124
      %v1142 = vpop.permute.xlu0 %1141
      %1143 = vrot.lane.b32.xlu0 %v1112, 124
      %v1144 = vpop.permute.xlu0 %1143
      %1145 = vrot.lane.b32.xlu0 %v1113, 124
      %v1146 = vpop.permute.xlu0 %1145
      %1147 = vrot.lane.b32.xlu0 %v1115, 124
      %v1148 = vpop.permute.xlu0 %1147
      %1149 = vrot.lane.b32.xlu0 %v1116, 124
      %v1150 = vpop.permute.xlu0 %1149
      %vm1151 = vcmask 1014784
      %v1152 = vsel %vm1151, %v1118, %v1120
      %v1153 = vsel %vm1151, %v1120, %v1122
      %v1154 = vsel %vm1151, %v1122, %v1124
      %v1155 = vsel %vm1151, %v1124, %v1126
      %v1156 = vsel %vm1151, %v1126, %v1128
      %v1157 = vsel %vm1151, %v1128, %v1130
      %v1158 = vsel %vm1151, %v1130, %v1132
      %v1159 = vsel %vm1151, %v1132, %v1134
      %v1160 = vsel %vm1151, %v1134, %v1136
      %v1161 = vsel %vm1151, %v1136, %v1138
      %v1162 = vsel %vm1151, %v1138, %v1140
      %v1163 = vsel %vm1151, %v1140, %v1142
      %v1164 = vsel %vm1151, %v1142, %v1144
      %v1165 = vsel %vm1151, %v1144, %v1146
      %v1166 = vsel %vm1151, %v1146, %v1148
      %v1167 = vsel %vm1151, %v1148, %v1150
      %1184 = vst [vmem:[#allocation2] sm:$0xf0] %v1152
      %1185 = vst [vmem:[#allocation2 + $0x8] sm:$0xf0] %v1153
      %1186 = vst [vmem:[#allocation2 + $0x10] sm:$0xf0] %v1154
      %1187 = vst [vmem:[#allocation2 + $0x18] sm:$0xf0] %v1155
      %1188 = vst [vmem:[#allocation2 + $0x20] sm:$0xf0] %v1156
      %1189 = vst [vmem:[#allocation2 + $0x28] sm:$0xf0] %v1157
      %1190 = vst [vmem:[#allocation2 + $0x30] sm:$0xf0] %v1158
      %1191 = vst [vmem:[#allocation2 + $0x38] sm:$0xf0] %v1159
      %1192 = vst [vmem:[#allocation2 + $0x40] sm:$0xf0] %v1160
      %1193 = vst [vmem:[#allocation2 + $0x48] sm:$0xf0] %v1161
      %1194 = vst [vmem:[#allocation2 + $0x50] sm:$0xf0] %v1162
      %1195 = vst [vmem:[#allocation2 + $0x58] sm:$0xf0] %v1163
      %1196 = vst [vmem:[#allocation2 + $0x60] sm:$0xf0] %v1164
      %1197 = vst [vmem:[#allocation2 + $0x68] sm:$0xf0] %v1165
      %1198 = vst [vmem:[#allocation2 + $0x70] sm:$0xf0] %v1166
      %1199 = vst [vmem:[#allocation2 + $0x78] sm:$0xf0] %v1167
      %1201 = vst [vmem:[#allocation1] ss:$2 sm:$0xff] %v1067
      %s1202 = scalar_lea.vmem [#allocation1], 16
      %1203 = vst [vmem:[%s1202] ss:$2 sm:$0xff] %v1068
      %s1204 = scalar_lea.vmem [#allocation1], 32
      %1205 = vst [vmem:[%s1204] ss:$2 sm:$0xff] %v1069
      %s1206 = scalar_lea.vmem [#allocation1], 48
      %1207 = vst [vmem:[%s1206] ss:$2 sm:$0xff] %v1070
      %v1208 = vld.sshfl [vmem:[#allocation1] sm:$0xff pattern:$0x75316420]
      %v1209 = vld.sshfl [vmem:[#allocation1 + $0x8] sm:$0xff pattern:$0x75316420]
      %v1210 = vld.sshfl [vmem:[#allocation1 + $0x10] sm:$0xff pattern:$0x75316420]
      %v1211 = vld.sshfl [vmem:[#allocation1 + $0x18] sm:$0xff pattern:$0x75316420]
      %v1212 = vld.sshfl [vmem:[#allocation1 + $0x20] sm:$0xff pattern:$0x75316420]
      %v1213 = vld.sshfl [vmem:[#allocation1 + $0x28] sm:$0xff pattern:$0x75316420]
      %v1214 = vld.sshfl [vmem:[#allocation1 + $0x30] sm:$0xff pattern:$0x75316420]
      %v1215 = vld.sshfl [vmem:[#allocation1 + $0x38] sm:$0xff pattern:$0x75316420]
      %1216 = vst [vmem:[#allocation1] ss:$2 sm:$0xff] %v1071
      %1217 = vst [vmem:[%s1202] ss:$2 sm:$0xff] %v1072
      %1218 = vst [vmem:[%s1204] ss:$2 sm:$0xff] %v1073
      %1219 = vst [vmem:[%s1206] ss:$2 sm:$0xff] %v1074
      %v1220 = vld.sshfl [vmem:[#allocation1] sm:$0xff pattern:$0x75316420]
      %v1221 = vld.sshfl [vmem:[#allocation1 + $0x8] sm:$0xff pattern:$0x75316420]
      %v1222 = vld.sshfl [vmem:[#allocation1 + $0x10] sm:$0xff pattern:$0x75316420]
      %v1223 = vld.sshfl [vmem:[#allocation1 + $0x18] sm:$0xff pattern:$0x75316420]
      %v1224 = vld.sshfl [vmem:[#allocation1 + $0x20] sm:$0xff pattern:$0x75316420]
      %v1225 = vld.sshfl [vmem:[#allocation1 + $0x28] sm:$0xff pattern:$0x75316420]
      %v1226 = vld.sshfl [vmem:[#allocation1 + $0x30] sm:$0xff pattern:$0x75316420]
      %v1227 = vld.sshfl [vmem:[#allocation1 + $0x38] sm:$0xff pattern:$0x75316420]
      %1228 = vst [vmem:[#allocation1] ss:$2 sm:$0xff] %v1075
      %v1229 = vld.sshfl [vmem:[#allocation1] sm:$0xff pattern:$0x75316420]
      %1230 = vrot.lane.b32.xlu0 %v1208, 124
      %v1231 = vpop.permute.xlu0 %1230
      %1232 = vrot.lane.b32.xlu0 %v1209, 124
      %v1233 = vpop.permute.xlu0 %1232
      %1234 = vrot.lane.b32.xlu0 %v1210, 124
      %v1235 = vpop.permute.xlu0 %1234
      %1236 = vrot.lane.b32.xlu0 %v1211, 124
      %v1237 = vpop.permute.xlu0 %1236
      %1238 = vrot.lane.b32.xlu0 %v1212, 124
      %v1239 = vpop.permute.xlu0 %1238
      %1240 = vrot.lane.b32.xlu0 %v1213, 124
      %v1241 = vpop.permute.xlu0 %1240
      %1242 = vrot.lane.b32.xlu0 %v1214, 124
      %v1243 = vpop.permute.xlu0 %1242
      %1244 = vrot.lane.b32.xlu0 %v1215, 124
      %v1245 = vpop.permute.xlu0 %1244
      %1246 = vrot.lane.b32.xlu0 %v1220, 124
      %v1247 = vpop.permute.xlu0 %1246
      %1248 = vrot.lane.b32.xlu0 %v1221, 124
      %v1249 = vpop.permute.xlu0 %1248
      %1250 = vrot.lane.b32.xlu0 %v1222, 124
      %v1251 = vpop.permute.xlu0 %1250
      %1252 = vrot.lane.b32.xlu0 %v1223, 124
      %v1253 = vpop.permute.xlu0 %1252
      %1254 = vrot.lane.b32.xlu0 %v1224, 124
      %v1255 = vpop.permute.xlu0 %1254
      %1256 = vrot.lane.b32.xlu0 %v1225, 124
      %v1257 = vpop.permute.xlu0 %1256
      %1258 = vrot.lane.b32.xlu0 %v1226, 124
      %v1259 = vpop.permute.xlu0 %1258
      %1260 = vrot.lane.b32.xlu0 %v1227, 124
      %v1261 = vpop.permute.xlu0 %1260
      %1262 = vrot.lane.b32.xlu0 %v1229, 124
      %v1263 = vpop.permute.xlu0 %1262
      %v1264 = vsel %vm1151, %v1231, %v1233
      %v1265 = vsel %vm1151, %v1233, %v1235
      %v1266 = vsel %vm1151, %v1235, %v1237
      %v1267 = vsel %vm1151, %v1237, %v1239
      %v1268 = vsel %vm1151, %v1239, %v1241
      %v1269 = vsel %vm1151, %v1241, %v1243
      %v1270 = vsel %vm1151, %v1243, %v1245
      %v1271 = vsel %vm1151, %v1245, %v1247
      %v1272 = vsel %vm1151, %v1247, %v1249
      %v1273 = vsel %vm1151, %v1249, %v1251
      %v1274 = vsel %vm1151, %v1251, %v1253
      %v1275 = vsel %vm1151, %v1253, %v1255
      %v1276 = vsel %vm1151, %v1255, %v1257
      %v1277 = vsel %vm1151, %v1257, %v1259
      %v1278 = vsel %vm1151, %v1259, %v1261
      %v1279 = vsel %vm1151, %v1261, %v1263
      %1296 = vst [vmem:[#allocation2 + $0x100] sm:$0xf] %v1264
      %1297 = vst [vmem:[#allocation2 + $0x108] sm:$0xf] %v1265
      %1298 = vst [vmem:[#allocation2 + $0x110] sm:$0xf] %v1266
      %1299 = vst [vmem:[#allocation2 + $0x118] sm:$0xf] %v1267
      %1300 = vst [vmem:[#allocation2 + $0x120] sm:$0xf] %v1268
      %1301 = vst [vmem:[#allocation2 + $0x128] sm:$0xf] %v1269
      %1302 = vst [vmem:[#allocation2 + $0x130] sm:$0xf] %v1270
      %1303 = vst [vmem:[#allocation2 + $0x138] sm:$0xf] %v1271
      %1304 = vst [vmem:[#allocation2 + $0x140] sm:$0xf] %v1272
      %1305 = vst [vmem:[#allocation2 + $0x148] sm:$0xf] %v1273
      %1306 = vst [vmem:[#allocation2 + $0x150] sm:$0xf] %v1274
      %1307 = vst [vmem:[#allocation2 + $0x158] sm:$0xf] %v1275
      %1308 = vst [vmem:[#allocation2 + $0x160] sm:$0xf] %v1276
      %1309 = vst [vmem:[#allocation2 + $0x168] sm:$0xf] %v1277
      %1310 = vst [vmem:[#allocation2 + $0x170] sm:$0xf] %v1278
      %1311 = vst [vmem:[#allocation2 + $0x178] sm:$0xf] %v1279
      %s1312 = scalar_lea.vmem [#allocation1], 1
      %1313 = vst [vmem:[%s1312] ss:$2 sm:$0xff] %v1067
      %s1314 = scalar_lea.vmem [#allocation1], 17
      %1315 = vst [vmem:[%s1314] ss:$2 sm:$0xff] %v1068
      %s1316 = scalar_lea.vmem [#allocation1], 33
      %1317 = vst [vmem:[%s1316] ss:$2 sm:$0xff] %v1069
      %s1318 = scalar_lea.vmem [#allocation1], 49
      %1319 = vst [vmem:[%s1318] ss:$2 sm:$0xff] %v1070
      %v1320 = vld.sshfl [vmem:[#allocation1 + $0x8] sm:$0xff pattern:$0x75316420]
      %v1321 = vld.sshfl [vmem:[#allocation1 + $0x10] sm:$0xff pattern:$0x75316420]
      %v1322 = vld.sshfl [vmem:[#allocation1 + $0x18] sm:$0xff pattern:$0x75316420]
      %v1323 = vld.sshfl [vmem:[#allocation1 + $0x20] sm:$0xff pattern:$0x75316420]
      %v1324 = vld.sshfl [vmem:[#allocation1 + $0x28] sm:$0xff pattern:$0x75316420]
      %v1325 = vld.sshfl [vmem:[#allocation1 + $0x30] sm:$0xff pattern:$0x75316420]
      %v1326 = vld.sshfl [vmem:[#allocation1 + $0x38] sm:$0xff pattern:$0x75316420]
      %1327 = vst [vmem:[%s1312] ss:$2 sm:$0xff] %v1071
      %1328 = vst [vmem:[%s1314] ss:$2 sm:$0xff] %v1072
      %1329 = vst [vmem:[%s1316] ss:$2 sm:$0xff] %v1073
      %1330 = vst [vmem:[%s1318] ss:$2 sm:$0xff] %v1074
      %v1331 = vld.sshfl [vmem:[#allocation1] sm:$0xff pattern:$0x75316420]
      %v1332 = vld.sshfl [vmem:[#allocation1 + $0x8] sm:$0xff pattern:$0x75316420]
      %v1333 = vld.sshfl [vmem:[#allocation1 + $0x10] sm:$0xff pattern:$0x75316420]
      %v1334 = vld.sshfl [vmem:[#allocation1 + $0x18] sm:$0xff pattern:$0x75316420]
      %v1335 = vld.sshfl [vmem:[#allocation1 + $0x20] sm:$0xff pattern:$0x75316420]
      %v1336 = vld.sshfl [vmem:[#allocation1 + $0x28] sm:$0xff pattern:$0x75316420]
      %v1337 = vld.sshfl [vmem:[#allocation1 + $0x30] sm:$0xff pattern:$0x75316420]
      %v1338 = vld.sshfl [vmem:[#allocation1 + $0x38] sm:$0xff pattern:$0x75316420]
      %1339 = vst [vmem:[%s1312] ss:$2 sm:$0xff] %v1075
      %v1340 = vld.sshfl [vmem:[#allocation1] sm:$0xff pattern:$0x75316420]
      %v1341 = vld.sshfl [vmem:[#allocation1 + $0x8] sm:$0xff pattern:$0x75316420]
      %1342 = vrot.lane.b32.xlu0 %v1320, 124
      %v1343 = vpop.permute.xlu0 %1342
      %1344 = vrot.lane.b32.xlu0 %v1321, 124
      %v1345 = vpop.permute.xlu0 %1344
      %1346 = vrot.lane.b32.xlu0 %v1322, 124
      %v1347 = vpop.permute.xlu0 %1346
      %1348 = vrot.lane.b32.xlu0 %v1323, 124
      %v1349 = vpop.permute.xlu0 %1348
      %1350 = vrot.lane.b32.xlu0 %v1324, 124
      %v1351 = vpop.permute.xlu0 %1350
      %1352 = vrot.lane.b32.xlu0 %v1325, 124
      %v1353 = vpop.permute.xlu0 %1352
      %1354 = vrot.lane.b32.xlu0 %v1326, 124
      %v1355 = vpop.permute.xlu0 %1354
      %1356 = vrot.lane.b32.xlu0 %v1331, 124
      %v1357 = vpop.permute.xlu0 %1356
      %1358 = vrot.lane.b32.xlu0 %v1332, 124
      %v1359 = vpop.permute.xlu0 %1358
      %1360 = vrot.lane.b32.xlu0 %v1333, 124
      %v1361 = vpop.permute.xlu0 %1360
      %1362 = vrot.lane.b32.xlu0 %v1334, 124
      %v1363 = vpop.permute.xlu0 %1362
      %1364 = vrot.lane.b32.xlu0 %v1335, 124
      %v1365 = vpop.permute.xlu0 %1364
      %1366 = vrot.lane.b32.xlu0 %v1336, 124
      %v1367 = vpop.permute.xlu0 %1366
      %1368 = vrot.lane.b32.xlu0 %v1337, 124
      %v1369 = vpop.permute.xlu0 %1368
      %1370 = vrot.lane.b32.xlu0 %v1338, 124
      %v1371 = vpop.permute.xlu0 %1370
      %1372 = vrot.lane.b32.xlu0 %v1340, 124
      %v1373 = vpop.permute.xlu0 %1372
      %1374 = vrot.lane.b32.xlu0 %v1341, 124
      %v1375 = vpop.permute.xlu0 %1374
      %v1376 = vsel %vm1151, %v1343, %v1345
      %v1377 = vsel %vm1151, %v1345, %v1347
      %v1378 = vsel %vm1151, %v1347, %v1349
      %v1379 = vsel %vm1151, %v1349, %v1351
      %v1380 = vsel %vm1151, %v1351, %v1353
      %v1381 = vsel %vm1151, %v1353, %v1355
      %v1382 = vsel %vm1151, %v1355, %v1357
      %v1383 = vsel %vm1151, %v1357, %v1359
      %v1384 = vsel %vm1151, %v1359, %v1361
      %v1385 = vsel %vm1151, %v1361, %v1363
      %v1386 = vsel %vm1151, %v1363, %v1365
      %v1387 = vsel %vm1151, %v1365, %v1367
      %v1388 = vsel %vm1151, %v1367, %v1369
      %v1389 = vsel %vm1151, %v1369, %v1371
      %v1390 = vsel %vm1151, %v1371, %v1373
      %v1391 = vsel %vm1151, %v1373, %v1375
      %1408 = vst [vmem:[#allocation2 + $0x180] sm:$0xf0] %v1376
      %1409 = vst [vmem:[#allocation2 + $0x188] sm:$0xf0] %v1377
      %1410 = vst [vmem:[#allocation2 + $0x190] sm:$0xf0] %v1378
      %1411 = vst [vmem:[#allocation2 + $0x198] sm:$0xf0] %v1379
      %1412 = vst [vmem:[#allocation2 + $0x1a0] sm:$0xf0] %v1380
      %1413 = vst [vmem:[#allocation2 + $0x1a8] sm:$0xf0] %v1381
      %1414 = vst [vmem:[#allocation2 + $0x1b0] sm:$0xf0] %v1382
      %1415 = vst [vmem:[#allocation2 + $0x1b8] sm:$0xf0] %v1383
      %1416 = vst [vmem:[#allocation2 + $0x1c0] sm:$0xf0] %v1384
      %1417 = vst [vmem:[#allocation2 + $0x1c8] sm:$0xf0] %v1385
      %1418 = vst [vmem:[#allocation2 + $0x1d0] sm:$0xf0] %v1386
      %1419 = vst [vmem:[#allocation2 + $0x1d8] sm:$0xf0] %v1387
      %1420 = vst [vmem:[#allocation2 + $0x1e0] sm:$0xf0] %v1388
      %1421 = vst [vmem:[#allocation2 + $0x1e8] sm:$0xf0] %v1389
      %1422 = vst [vmem:[#allocation2 + $0x1f0] sm:$0xf0] %v1390
      %1423 = vst [vmem:[#allocation2 + $0x1f8] sm:$0xf0] %v1391
      %1424 = vst [vmem:[#allocation1] ss:$2 sm:$0xff] %v1066
      %s1425 = scalar_lea.vmem [#allocation1], 16
      %1426 = vst [vmem:[%s1425] ss:$2 sm:$0xff] %v1067
      %s1427 = scalar_lea.vmem [#allocation1], 32
      %1428 = vst [vmem:[%s1427] ss:$2 sm:$0xff] %v1068
      %s1429 = scalar_lea.vmem [#allocation1], 48
      %1430 = vst [vmem:[%s1429] ss:$2 sm:$0xff] %v1069
      %v1431 = vld.sshfl [vmem:[#allocation1] sm:$0xff pattern:$0x75316420]
      %v1432 = vld.sshfl [vmem:[#allocation1 + $0x8] sm:$0xff pattern:$0x75316420]
      %v1433 = vld.sshfl [vmem:[#allocation1 + $0x10] sm:$0xff pattern:$0x75316420]
      %v1434 = vld.sshfl [vmem:[#allocation1 + $0x18] sm:$0xff pattern:$0x75316420]
      %v1435 = vld.sshfl [vmem:[#allocation1 + $0x20] sm:$0xff pattern:$0x75316420]
      %v1436 = vld.sshfl [vmem:[#allocation1 + $0x28] sm:$0xff pattern:$0x75316420]
      %v1437 = vld.sshfl [vmem:[#allocation1 + $0x30] sm:$0xff pattern:$0x75316420]
      %v1438 = vld.sshfl [vmem:[#allocation1 + $0x38] sm:$0xff pattern:$0x75316420]
      %1439 = vst [vmem:[#allocation1] ss:$2 sm:$0xff] %v1070
      %1440 = vst [vmem:[%s1425] ss:$2 sm:$0xff] %v1071
      %1441 = vst [vmem:[%s1427] ss:$2 sm:$0xff] %v1072
      %1442 = vst [vmem:[%s1429] ss:$2 sm:$0xff] %v1073
      %v1443 = vld.sshfl [vmem:[#allocation1] sm:$0xff pattern:$0x75316420]
      %v1444 = vld.sshfl [vmem:[#allocation1 + $0x8] sm:$0xff pattern:$0x75316420]
      %v1445 = vld.sshfl [vmem:[#allocation1 + $0x10] sm:$0xff pattern:$0x75316420]
      %v1446 = vld.sshfl [vmem:[#allocation1 + $0x18] sm:$0xff pattern:$0x75316420]
      %v1447 = vld.sshfl [vmem:[#allocation1 + $0x20] sm:$0xff pattern:$0x75316420]
      %v1448 = vld.sshfl [vmem:[#allocation1 + $0x28] sm:$0xff pattern:$0x75316420]
      %v1449 = vld.sshfl [vmem:[#allocation1 + $0x30] sm:$0xff pattern:$0x75316420]
      %v1450 = vld.sshfl [vmem:[#allocation1 + $0x38] sm:$0xff pattern:$0x75316420]
      %1451 = vst [vmem:[#allocation1] ss:$2 sm:$0xff] %v1074
      %v1452 = vld.sshfl [vmem:[#allocation1] sm:$0xff pattern:$0x75316420]
      %1453 = vrot.lane.b32.xlu0 %v1431, 124
      %v1454 = vpop.permute.xlu0 %1453
      %1455 = vrot.lane.b32.xlu0 %v1432, 124
      %v1456 = vpop.permute.xlu0 %1455
      %1457 = vrot.lane.b32.xlu0 %v1433, 124
      %v1458 = vpop.permute.xlu0 %1457
      %1459 = vrot.lane.b32.xlu0 %v1434, 124
      %v1460 = vpop.permute.xlu0 %1459
      %1461 = vrot.lane.b32.xlu0 %v1435, 124
      %v1462 = vpop.permute.xlu0 %1461
      %1463 = vrot.lane.b32.xlu0 %v1436, 124
      %v1464 = vpop.permute.xlu0 %1463
      %1465 = vrot.lane.b32.xlu0 %v1437, 124
      %v1466 = vpop.permute.xlu0 %1465
      %1467 = vrot.lane.b32.xlu0 %v1438, 124
      %v1468 = vpop.permute.xlu0 %1467
      %1469 = vrot.lane.b32.xlu0 %v1443, 124
      %v1470 = vpop.permute.xlu0 %1469
      %1471 = vrot.lane.b32.xlu0 %v1444, 124
      %v1472 = vpop.permute.xlu0 %1471
      %1473 = vrot.lane.b32.xlu0 %v1445, 124
      %v1474 = vpop.permute.xlu0 %1473
      %1475 = vrot.lane.b32.xlu0 %v1446, 124
      %v1476 = vpop.permute.xlu0 %1475
      %1477 = vrot.lane.b32.xlu0 %v1447, 124
      %v1478 = vpop.permute.xlu0 %1477
      %1479 = vrot.lane.b32.xlu0 %v1448, 124
      %v1480 = vpop.permute.xlu0 %1479
      %1481 = vrot.lane.b32.xlu0 %v1449, 124
      %v1482 = vpop.permute.xlu0 %1481
      %1483 = vrot.lane.b32.xlu0 %v1450, 124
      %v1484 = vpop.permute.xlu0 %1483
      %1485 = vrot.lane.b32.xlu0 %v1452, 124
      %v1486 = vpop.permute.xlu0 %1485
      %v1487 = vsel %vm1151, %v1454, %v1456
      %v1488 = vsel %vm1151, %v1456, %v1458
      %v1489 = vsel %vm1151, %v1458, %v1460
      %v1490 = vsel %vm1151, %v1460, %v1462
      %v1491 = vsel %vm1151, %v1462, %v1464
      %v1492 = vsel %vm1151, %v1464, %v1466
      %v1493 = vsel %vm1151, %v1466, %v1468
      %v1494 = vsel %vm1151, %v1468, %v1470
      %v1495 = vsel %vm1151, %v1470, %v1472
      %v1496 = vsel %vm1151, %v1472, %v1474
      %v1497 = vsel %vm1151, %v1474, %v1476
      %v1498 = vsel %vm1151, %v1476, %v1478
      %v1499 = vsel %vm1151, %v1478, %v1480
      %v1500 = vsel %vm1151, %v1480, %v1482
      %v1501 = vsel %vm1151, %v1482, %v1484
      %v1502 = vsel %vm1151, %v1484, %v1486
      %1519 = vst [vmem:[#allocation2 + $0x280] sm:$0xf] %v1487
      %1520 = vst [vmem:[#allocation2 + $0x288] sm:$0xf] %v1488
      %1521 = vst [vmem:[#allocation2 + $0x290] sm:$0xf] %v1489
      %1522 = vst [vmem:[#allocation2 + $0x298] sm:$0xf] %v1490
      %1523 = vst [vmem:[#allocation2 + $0x2a0] sm:$0xf] %v1491
      %1524 = vst [vmem:[#allocation2 + $0x2a8] sm:$0xf] %v1492
      %1525 = vst [vmem:[#allocation2 + $0x2b0] sm:$0xf] %v1493
      %1526 = vst [vmem:[#allocation2 + $0x2b8] sm:$0xf] %v1494
      %1527 = vst [vmem:[#allocation2 + $0x2c0] sm:$0xf] %v1495
      %1528 = vst [vmem:[#allocation2 + $0x2c8] sm:$0xf] %v1496
      %1529 = vst [vmem:[#allocation2 + $0x2d0] sm:$0xf] %v1497
      %1530 = vst [vmem:[#allocation2 + $0x2d8] sm:$0xf] %v1498
      %1531 = vst [vmem:[#allocation2 + $0x2e0] sm:$0xf] %v1499
      %1532 = vst [vmem:[#allocation2 + $0x2e8] sm:$0xf] %v1500
      %1533 = vst [vmem:[#allocation2 + $0x2f0] sm:$0xf] %v1501
      %1534 = vst [vmem:[#allocation2 + $0x2f8] sm:$0xf] %v1502
      %s1535 = scalar_lea.vmem [#allocation1], 1
      %1536 = vst [vmem:[%s1535] ss:$2 sm:$0xff] %v1067
      %s1537 = scalar_lea.vmem [#allocation1], 17
      %1538 = vst [vmem:[%s1537] ss:$2 sm:$0xff] %v1068
      %s1539 = scalar_lea.vmem [#allocation1], 33
      %1540 = vst [vmem:[%s1539] ss:$2 sm:$0xff] %v1069
      %s1541 = scalar_lea.vmem [#allocation1], 49
      %1542 = vst [vmem:[%s1541] ss:$2 sm:$0xff] %v1070
      %v1543 = vld.sshfl [vmem:[#allocation1] sm:$0xff pattern:$0x75316420]
      %v1544 = vld.sshfl [vmem:[#allocation1 + $0x8] sm:$0xff pattern:$0x75316420]
      %v1545 = vld.sshfl [vmem:[#allocation1 + $0x10] sm:$0xff pattern:$0x75316420]
      %v1546 = vld.sshfl [vmem:[#allocation1 + $0x18] sm:$0xff pattern:$0x75316420]
      %v1547 = vld.sshfl [vmem:[#allocation1 + $0x20] sm:$0xff pattern:$0x75316420]
      %v1548 = vld.sshfl [vmem:[#allocation1 + $0x28] sm:$0xff pattern:$0x75316420]
      %v1549 = vld.sshfl [vmem:[#allocation1 + $0x30] sm:$0xff pattern:$0x75316420]
      %v1550 = vld.sshfl [vmem:[#allocation1 + $0x38] sm:$0xff pattern:$0x75316420]
      %1551 = vst [vmem:[%s1535] ss:$2 sm:$0xff] %v1071
      %1552 = vst [vmem:[%s1537] ss:$2 sm:$0xff] %v1072
      %1553 = vst [vmem:[%s1539] ss:$2 sm:$0xff] %v1073
      %1554 = vst [vmem:[%s1541] ss:$2 sm:$0xff] %v1074
      %v1555 = vld.sshfl [vmem:[#allocation1] sm:$0xff pattern:$0x75316420]
      %v1556 = vld.sshfl [vmem:[#allocation1 + $0x8] sm:$0xff pattern:$0x75316420]
      %v1557 = vld.sshfl [vmem:[#allocation1 + $0x10] sm:$0xff pattern:$0x75316420]
      %v1558 = vld.sshfl [vmem:[#allocation1 + $0x18] sm:$0xff pattern:$0x75316420]
      %v1559 = vld.sshfl [vmem:[#allocation1 + $0x20] sm:$0xff pattern:$0x75316420]
      %v1560 = vld.sshfl [vmem:[#allocation1 + $0x28] sm:$0xff pattern:$0x75316420]
      %v1561 = vld.sshfl [vmem:[#allocation1 + $0x30] sm:$0xff pattern:$0x75316420]
      %v1562 = vld.sshfl [vmem:[#allocation1 + $0x38] sm:$0xff pattern:$0x75316420]
      %1563 = vst [vmem:[%s1535] ss:$2 sm:$0xff] %v1075
      %v1564 = vld.sshfl [vmem:[#allocation1] sm:$0xff pattern:$0x75316420]
      %1565 = vrot.lane.b32.xlu0 %v1543, 124
      %v1566 = vpop.permute.xlu0 %1565
      %1567 = vrot.lane.b32.xlu0 %v1544, 124
      %v1568 = vpop.permute.xlu0 %1567
      %1569 = vrot.lane.b32.xlu0 %v1545, 124
      %v1570 = vpop.permute.xlu0 %1569
      %1571 = vrot.lane.b32.xlu0 %v1546, 124
      %v1572 = vpop.permute.xlu0 %1571
      %1573 = vrot.lane.b32.xlu0 %v1547, 124
      %v1574 = vpop.permute.xlu0 %1573
      %1575 = vrot.lane.b32.xlu0 %v1548, 124
      %v1576 = vpop.permute.xlu0 %1575
      %1577 = vrot.lane.b32.xlu0 %v1549, 124
      %v1578 = vpop.permute.xlu0 %1577
      %1579 = vrot.lane.b32.xlu0 %v1550, 124
      %v1580 = vpop.permute.xlu0 %1579
      %1581 = vrot.lane.b32.xlu0 %v1555, 124
      %v1582 = vpop.permute.xlu0 %1581
      %1583 = vrot.lane.b32.xlu0 %v1556, 124
      %v1584 = vpop.permute.xlu0 %1583
      %1585 = vrot.lane.b32.xlu0 %v1557, 124
      %v1586 = vpop.permute.xlu0 %1585
      %1587 = vrot.lane.b32.xlu0 %v1558, 124
      %v1588 = vpop.permute.xlu0 %1587
      %1589 = vrot.lane.b32.xlu0 %v1559, 124
      %v1590 = vpop.permute.xlu0 %1589
      %1591 = vrot.lane.b32.xlu0 %v1560, 124
      %v1592 = vpop.permute.xlu0 %1591
      %1593 = vrot.lane.b32.xlu0 %v1561, 124
      %v1594 = vpop.permute.xlu0 %1593
      %1595 = vrot.lane.b32.xlu0 %v1562, 124
      %v1596 = vpop.permute.xlu0 %1595
      %1597 = vrot.lane.b32.xlu0 %v1564, 124
      %v1598 = vpop.permute.xlu0 %1597
      %v1599 = vsel %vm1151, %v1566, %v1568
      %v1600 = vsel %vm1151, %v1568, %v1570
      %v1601 = vsel %vm1151, %v1570, %v1572
      %v1602 = vsel %vm1151, %v1572, %v1574
      %v1603 = vsel %vm1151, %v1574, %v1576
      %v1604 = vsel %vm1151, %v1576, %v1578
      %v1605 = vsel %vm1151, %v1578, %v1580
      %v1606 = vsel %vm1151, %v1580, %v1582
      %v1607 = vsel %vm1151, %v1582, %v1584
      %v1608 = vsel %vm1151, %v1584, %v1586
      %v1609 = vsel %vm1151, %v1586, %v1588
      %v1610 = vsel %vm1151, %v1588, %v1590
      %v1611 = vsel %vm1151, %v1590, %v1592
      %v1612 = vsel %vm1151, %v1592, %v1594
      %v1613 = vsel %vm1151, %v1594, %v1596
      %v1614 = vsel %vm1151, %v1596, %v1598
      %1631 = vst [vmem:[#allocation2 + $0x300] sm:$0xf0] %v1599
      %1632 = vst [vmem:[#allocation2 + $0x308] sm:$0xf0] %v1600
      %1633 = vst [vmem:[#allocation2 + $0x310] sm:$0xf0] %v1601
      %1634 = vst [vmem:[#allocation2 + $0x318] sm:$0xf0] %v1602
      %1635 = vst [vmem:[#allocation2 + $0x320] sm:$0xf0] %v1603
      %1636 = vst [vmem:[#allocation2 + $0x328] sm:$0xf0] %v1604
      %1637 = vst [vmem:[#allocation2 + $0x330] sm:$0xf0] %v1605
      %1638 = vst [vmem:[#allocation2 + $0x338] sm:$0xf0] %v1606
      %1639 = vst [vmem:[#allocation2 + $0x340] sm:$0xf0] %v1607
      %1640 = vst [vmem:[#allocation2 + $0x348] sm:$0xf0] %v1608
      %1641 = vst [vmem:[#allocation2 + $0x350] sm:$0xf0] %v1609
      %1642 = vst [vmem:[#allocation2 + $0x358] sm:$0xf0] %v1610
      %1643 = vst [vmem:[#allocation2 + $0x360] sm:$0xf0] %v1611
      %1644 = vst [vmem:[#allocation2 + $0x368] sm:$0xf0] %v1612
      %1645 = vst [vmem:[#allocation2 + $0x370] sm:$0xf0] %v1613
      %1646 = vst [vmem:[#allocation2 + $0x378] sm:$0xf0] %v1614
      %1648 = vst [vmem:[#allocation1] ss:$2 sm:$0xff] %v1068
      %s1649 = scalar_lea.vmem [#allocation1], 16
      %1650 = vst [vmem:[%s1649] ss:$2 sm:$0xff] %v1069
      %s1651 = scalar_lea.vmem [#allocation1], 32
      %1652 = vst [vmem:[%s1651] ss:$2 sm:$0xff] %v1070
      %s1653 = scalar_lea.vmem [#allocation1], 48
      %1654 = vst [vmem:[%s1653] ss:$2 sm:$0xff] %v1071
      %v1655 = vld.sshfl [vmem:[#allocation1] sm:$0xff pattern:$0x75316420]
      %v1656 = vld.sshfl [vmem:[#allocation1 + $0x8] sm:$0xff pattern:$0x75316420]
      %v1657 = vld.sshfl [vmem:[#allocation1 + $0x10] sm:$0xff pattern:$0x75316420]
      %v1658 = vld.sshfl [vmem:[#allocation1 + $0x18] sm:$0xff pattern:$0x75316420]
      %v1659 = vld.sshfl [vmem:[#allocation1 + $0x20] sm:$0xff pattern:$0x75316420]
      %v1660 = vld.sshfl [vmem:[#allocation1 + $0x28] sm:$0xff pattern:$0x75316420]
      %v1661 = vld.sshfl [vmem:[#allocation1 + $0x30] sm:$0xff pattern:$0x75316420]
      %v1662 = vld.sshfl [vmem:[#allocation1 + $0x38] sm:$0xff pattern:$0x75316420]
      %1663 = vst [vmem:[#allocation1] ss:$2 sm:$0xff] %v1072
      %1664 = vst [vmem:[%s1649] ss:$2 sm:$0xff] %v1073
      %1665 = vst [vmem:[%s1651] ss:$2 sm:$0xff] %v1074
      %1666 = vst [vmem:[%s1653] ss:$2 sm:$0xff] %v1075
      %v1667 = vld.sshfl [vmem:[#allocation1] sm:$0xff pattern:$0x75316420]
      %v1668 = vld.sshfl [vmem:[#allocation1 + $0x8] sm:$0xff pattern:$0x75316420]
      %v1669 = vld.sshfl [vmem:[#allocation1 + $0x10] sm:$0xff pattern:$0x75316420]
      %v1670 = vld.sshfl [vmem:[#allocation1 + $0x18] sm:$0xff pattern:$0x75316420]
      %v1671 = vld.sshfl [vmem:[#allocation1 + $0x20] sm:$0xff pattern:$0x75316420]
      %v1672 = vld.sshfl [vmem:[#allocation1 + $0x28] sm:$0xff pattern:$0x75316420]
      %v1673 = vld.sshfl [vmem:[#allocation1 + $0x30] sm:$0xff pattern:$0x75316420]
      %v1674 = vld.sshfl [vmem:[#allocation1 + $0x38] sm:$0xff pattern:$0x75316420]
      %1675 = vst [vmem:[#allocation1] ss:$2 sm:$0xff] %v1076
      %v1676 = vld.sshfl [vmem:[#allocation1] sm:$0xff pattern:$0x75316420]
      %1677 = vrot.lane.b32.xlu0 %v1655, 124
      %v1678 = vpop.permute.xlu0 %1677
      %1679 = vrot.lane.b32.xlu0 %v1656, 124
      %v1680 = vpop.permute.xlu0 %1679
      %1681 = vrot.lane.b32.xlu0 %v1657, 124
      %v1682 = vpop.permute.xlu0 %1681
      %1683 = vrot.lane.b32.xlu0 %v1658, 124
      %v1684 = vpop.permute.xlu0 %1683
      %1685 = vrot.lane.b32.xlu0 %v1659, 124
      %v1686 = vpop.permute.xlu0 %1685
      %1687 = vrot.lane.b32.xlu0 %v1660, 124
      %v1688 = vpop.permute.xlu0 %1687
      %1689 = vrot.lane.b32.xlu0 %v1661, 124
      %v1690 = vpop.permute.xlu0 %1689
      %1691 = vrot.lane.b32.xlu0 %v1662, 124
      %v1692 = vpop.permute.xlu0 %1691
      %1693 = vrot.lane.b32.xlu0 %v1667, 124
      %v1694 = vpop.permute.xlu0 %1693
      %1695 = vrot.lane.b32.xlu0 %v1668, 124
      %v1696 = vpop.permute.xlu0 %1695
      %1697 = vrot.lane.b32.xlu0 %v1669, 124
      %v1698 = vpop.permute.xlu0 %1697
      %1699 = vrot.lane.b32.xlu0 %v1670, 124
      %v1700 = vpop.permute.xlu0 %1699
      %1701 = vrot.lane.b32.xlu0 %v1671, 124
      %v1702 = vpop.permute.xlu0 %1701
      %1703 = vrot.lane.b32.xlu0 %v1672, 124
      %v1704 = vpop.permute.xlu0 %1703
      %1705 = vrot.lane.b32.xlu0 %v1673, 124
      %v1706 = vpop.permute.xlu0 %1705
      %1707 = vrot.lane.b32.xlu0 %v1674, 124
      %v1708 = vpop.permute.xlu0 %1707
      %1709 = vrot.lane.b32.xlu0 %v1676, 124
      %v1710 = vpop.permute.xlu0 %1709
      %v1711 = vsel %vm1151, %v1678, %v1680
      %v1712 = vsel %vm1151, %v1680, %v1682
      %v1713 = vsel %vm1151, %v1682, %v1684
      %v1714 = vsel %vm1151, %v1684, %v1686
      %v1715 = vsel %vm1151, %v1686, %v1688
      %v1716 = vsel %vm1151, %v1688, %v1690
      %v1717 = vsel %vm1151, %v1690, %v1692
      %v1718 = vsel %vm1151, %v1692, %v1694
      %v1719 = vsel %vm1151, %v1694, %v1696
      %v1720 = vsel %vm1151, %v1696, %v1698
      %v1721 = vsel %vm1151, %v1698, %v1700
      %v1722 = vsel %vm1151, %v1700, %v1702
      %v1723 = vsel %vm1151, %v1702, %v1704
      %v1724 = vsel %vm1151, %v1704, %v1706
      %v1725 = vsel %vm1151, %v1706, %v1708
      %v1726 = vsel %vm1151, %v1708, %v1710
      %1743 = vst [vmem:[#allocation2 + $0x400] sm:$0xf] %v1711
      %1744 = vst [vmem:[#allocation2 + $0x408] sm:$0xf] %v1712
      %1745 = vst [vmem:[#allocation2 + $0x410] sm:$0xf] %v1713
      %1746 = vst [vmem:[#allocation2 + $0x418] sm:$0xf] %v1714
      %1747 = vst [vmem:[#allocation2 + $0x420] sm:$0xf] %v1715
      %1748 = vst [vmem:[#allocation2 + $0x428] sm:$0xf] %v1716
      %1749 = vst [vmem:[#allocation2 + $0x430] sm:$0xf] %v1717
      %1750 = vst [vmem:[#allocation2 + $0x438] sm:$0xf] %v1718
      %1751 = vst [vmem:[#allocation2 + $0x440] sm:$0xf] %v1719
      %1752 = vst [vmem:[#allocation2 + $0x448] sm:$0xf] %v1720
      %1753 = vst [vmem:[#allocation2 + $0x450] sm:$0xf] %v1721
      %1754 = vst [vmem:[#allocation2 + $0x458] sm:$0xf] %v1722
      %1755 = vst [vmem:[#allocation2 + $0x460] sm:$0xf] %v1723
      %1756 = vst [vmem:[#allocation2 + $0x468] sm:$0xf] %v1724
      %1757 = vst [vmem:[#allocation2 + $0x470] sm:$0xf] %v1725
      %1758 = vst [vmem:[#allocation2 + $0x478] sm:$0xf] %v1726
      %s1760 = scalar_lea.vmem [#allocation1], 1
      %1761 = vst [vmem:[%s1760] ss:$2 sm:$0xff] %v1065
      %s1762 = scalar_lea.vmem [#allocation1], 17
      %1763 = vst [vmem:[%s1762] ss:$2 sm:$0xff] %v1066
      %s1764 = scalar_lea.vmem [#allocation1], 33
      %1765 = vst [vmem:[%s1764] ss:$2 sm:$0xff] %v1067
      %s1766 = scalar_lea.vmem [#allocation1], 49
      %1767 = vst [vmem:[%s1766] ss:$2 sm:$0xff] %v1068
      %v1768 = vld.sshfl [vmem:[#allocation1] sm:$0xff pattern:$0x75316420]
      %v1769 = vld.sshfl [vmem:[#allocation1 + $0x8] sm:$0xff pattern:$0x75316420]
      %v1770 = vld.sshfl [vmem:[#allocation1 + $0x10] sm:$0xff pattern:$0x75316420]
      %v1771 = vld.sshfl [vmem:[#allocation1 + $0x18] sm:$0xff pattern:$0x75316420]
      %v1772 = vld.sshfl [vmem:[#allocation1 + $0x20] sm:$0xff pattern:$0x75316420]
      %v1773 = vld.sshfl [vmem:[#allocation1 + $0x28] sm:$0xff pattern:$0x75316420]
      %v1774 = vld.sshfl [vmem:[#allocation1 + $0x30] sm:$0xff pattern:$0x75316420]
      %v1775 = vld.sshfl [vmem:[#allocation1 + $0x38] sm:$0xff pattern:$0x75316420]
      %1776 = vst [vmem:[%s1760] ss:$2 sm:$0xff] %v1069
      %1777 = vst [vmem:[%s1762] ss:$2 sm:$0xff] %v1070
      %1778 = vst [vmem:[%s1764] ss:$2 sm:$0xff] %v1071
      %1779 = vst [vmem:[%s1766] ss:$2 sm:$0xff] %v1072
      %v1780 = vld.sshfl [vmem:[#allocation1] sm:$0xff pattern:$0x75316420]
      %v1781 = vld.sshfl [vmem:[#allocation1 + $0x8] sm:$0xff pattern:$0x75316420]
      %v1782 = vld.sshfl [vmem:[#allocation1 + $0x10] sm:$0xff pattern:$0x75316420]
      %v1783 = vld.sshfl [vmem:[#allocation1 + $0x18] sm:$0xff pattern:$0x75316420]
      %v1784 = vld.sshfl [vmem:[#allocation1 + $0x20] sm:$0xff pattern:$0x75316420]
      %v1785 = vld.sshfl [vmem:[#allocation1 + $0x28] sm:$0xff pattern:$0x75316420]
      %v1786 = vld.sshfl [vmem:[#allocation1 + $0x30] sm:$0xff pattern:$0x75316420]
      %v1787 = vld.sshfl [vmem:[#allocation1 + $0x38] sm:$0xff pattern:$0x75316420]
      %1788 = vst [vmem:[%s1760] ss:$2 sm:$0xff] %v1073
      %v1789 = vld.sshfl [vmem:[#allocation1] sm:$0xff pattern:$0x75316420]
      %1790 = vrot.lane.b32.xlu0 %v1768, 124
      %v1791 = vpop.permute.xlu0 %1790
      %1792 = vrot.lane.b32.xlu0 %v1769, 124
      %v1793 = vpop.permute.xlu0 %1792
      %1794 = vrot.lane.b32.xlu0 %v1770, 124
      %v1795 = vpop.permute.xlu0 %1794
      %1796 = vrot.lane.b32.xlu0 %v1771, 124
      %v1797 = vpop.permute.xlu0 %1796
      %1798 = vrot.lane.b32.xlu0 %v1772, 124
      %v1799 = vpop.permute.xlu0 %1798
      %1800 = vrot.lane.b32.xlu0 %v1773, 124
      %v1801 = vpop.permute.xlu0 %1800
      %1802 = vrot.lane.b32.xlu0 %v1774, 124
      %v1803 = vpop.permute.xlu0 %1802
      %1804 = vrot.lane.b32.xlu0 %v1775, 124
      %v1805 = vpop.permute.xlu0 %1804
      %1806 = vrot.lane.b32.xlu0 %v1780, 124
      %v1807 = vpop.permute.xlu0 %1806
      %1808 = vrot.lane.b32.xlu0 %v1781, 124
      %v1809 = vpop.permute.xlu0 %1808
      %1810 = vrot.lane.b32.xlu0 %v1782, 124
      %v1811 = vpop.permute.xlu0 %1810
      %1812 = vrot.lane.b32.xlu0 %v1783, 124
      %v1813 = vpop.permute.xlu0 %1812
      %1814 = vrot.lane.b32.xlu0 %v1784, 124
      %v1815 = vpop.permute.xlu0 %1814
      %1816 = vrot.lane.b32.xlu0 %v1785, 124
      %v1817 = vpop.permute.xlu0 %1816
      %1818 = vrot.lane.b32.xlu0 %v1786, 124
      %v1819 = vpop.permute.xlu0 %1818
      %1820 = vrot.lane.b32.xlu0 %v1787, 124
      %v1821 = vpop.permute.xlu0 %1820
      %1822 = vrot.lane.b32.xlu0 %v1789, 124
      %v1823 = vpop.permute.xlu0 %1822
      %v1824 = vsel %vm1151, %v1791, %v1793
      %v1825 = vsel %vm1151, %v1793, %v1795
      %v1826 = vsel %vm1151, %v1795, %v1797
      %v1827 = vsel %vm1151, %v1797, %v1799
      %v1828 = vsel %vm1151, %v1799, %v1801
      %v1829 = vsel %vm1151, %v1801, %v1803
      %v1830 = vsel %vm1151, %v1803, %v1805
      %v1831 = vsel %vm1151, %v1805, %v1807
      %v1832 = vsel %vm1151, %v1807, %v1809
      %v1833 = vsel %vm1151, %v1809, %v1811
      %v1834 = vsel %vm1151, %v1811, %v1813
      %v1835 = vsel %vm1151, %v1813, %v1815
      %v1836 = vsel %vm1151, %v1815, %v1817
      %v1837 = vsel %vm1151, %v1817, %v1819
      %v1838 = vsel %vm1151, %v1819, %v1821
      %v1839 = vsel %vm1151, %v1821, %v1823
      %1856 = vst [vmem:[#allocation2 + $0x480] sm:$0xf0] %v1824
      %1857 = vst [vmem:[#allocation2 + $0x488] sm:$0xf0] %v1825
      %1858 = vst [vmem:[#allocation2 + $0x490] sm:$0xf0] %v1826
      %1859 = vst [vmem:[#allocation2 + $0x498] sm:$0xf0] %v1827
      %1860 = vst [vmem:[#allocation2 + $0x4a0] sm:$0xf0] %v1828
      %1861 = vst [vmem:[#allocation2 + $0x4a8] sm:$0xf0] %v1829
      %1862 = vst [vmem:[#allocation2 + $0x4b0] sm:$0xf0] %v1830
      %1863 = vst [vmem:[#allocation2 + $0x4b8] sm:$0xf0] %v1831
      %1864 = vst [vmem:[#allocation2 + $0x4c0] sm:$0xf0] %v1832
      %1865 = vst [vmem:[#allocation2 + $0x4c8] sm:$0xf0] %v1833
      %1866 = vst [vmem:[#allocation2 + $0x4d0] sm:$0xf0] %v1834
      %1867 = vst [vmem:[#allocation2 + $0x4d8] sm:$0xf0] %v1835
      %1868 = vst [vmem:[#allocation2 + $0x4e0] sm:$0xf0] %v1836
      %1869 = vst [vmem:[#allocation2 + $0x4e8] sm:$0xf0] %v1837
      %1870 = vst [vmem:[#allocation2 + $0x4f0] sm:$0xf0] %v1838
      %1871 = vst [vmem:[#allocation2 + $0x4f8] sm:$0xf0] %v1839
      %1872 = vst [vmem:[#allocation1] ss:$2 sm:$0xff] %v1067
      %s1873 = scalar_lea.vmem [#allocation1], 16
      %1874 = vst [vmem:[%s1873] ss:$2 sm:$0xff] %v1068
      %s1875 = scalar_lea.vmem [#allocation1], 32
      %1876 = vst [vmem:[%s1875] ss:$2 sm:$0xff] %v1069
      %s1877 = scalar_lea.vmem [#allocation1], 48
      %1878 = vst [vmem:[%s1877] ss:$2 sm:$0xff] %v1070
      %v1879 = vld.sshfl [vmem:[#allocation1] sm:$0xff pattern:$0x75316420]
      %v1880 = vld.sshfl [vmem:[#allocation1 + $0x8] sm:$0xff pattern:$0x75316420]
      %v1881 = vld.sshfl [vmem:[#allocation1 + $0x10] sm:$0xff pattern:$0x75316420]
      %v1882 = vld.sshfl [vmem:[#allocation1 + $0x18] sm:$0xff pattern:$0x75316420]
      %v1883 = vld.sshfl [vmem:[#allocation1 + $0x20] sm:$0xff pattern:$0x75316420]
      %v1884 = vld.sshfl [vmem:[#allocation1 + $0x28] sm:$0xff pattern:$0x75316420]
      %v1885 = vld.sshfl [vmem:[#allocation1 + $0x30] sm:$0xff pattern:$0x75316420]
      %v1886 = vld.sshfl [vmem:[#allocation1 + $0x38] sm:$0xff pattern:$0x75316420]
      %1887 = vst [vmem:[#allocation1] ss:$2 sm:$0xff] %v1071
      %1888 = vst [vmem:[%s1873] ss:$2 sm:$0xff] %v1072
      %1889 = vst [vmem:[%s1875] ss:$2 sm:$0xff] %v1073
      %1890 = vst [vmem:[%s1877] ss:$2 sm:$0xff] %v1074
      %v1891 = vld.sshfl [vmem:[#allocation1] sm:$0xff pattern:$0x75316420]
      %v1892 = vld.sshfl [vmem:[#allocation1 + $0x8] sm:$0xff pattern:$0x75316420]
      %v1893 = vld.sshfl [vmem:[#allocation1 + $0x10] sm:$0xff pattern:$0x75316420]
      %v1894 = vld.sshfl [vmem:[#allocation1 + $0x18] sm:$0xff pattern:$0x75316420]
      %v1895 = vld.sshfl [vmem:[#allocation1 + $0x20] sm:$0xff pattern:$0x75316420]
      %v1896 = vld.sshfl [vmem:[#allocation1 + $0x28] sm:$0xff pattern:$0x75316420]
      %v1897 = vld.sshfl [vmem:[#allocation1 + $0x30] sm:$0xff pattern:$0x75316420]
      %v1898 = vld.sshfl [vmem:[#allocation1 + $0x38] sm:$0xff pattern:$0x75316420]
      %1899 = vst [vmem:[#allocation1] ss:$2 sm:$0xff] %v1075
      %v1900 = vld.sshfl [vmem:[#allocation1] sm:$0xff pattern:$0x75316420]
      %1901 = vrot.lane.b32.xlu0 %v1879, 124
      %v1902 = vpop.permute.xlu0 %1901
      %1903 = vrot.lane.b32.xlu0 %v1880, 124
      %v1904 = vpop.permute.xlu0 %1903
      %1905 = vrot.lane.b32.xlu0 %v1881, 124
      %v1906 = vpop.permute.xlu0 %1905
      %1907 = vrot.lane.b32.xlu0 %v1882, 124
      %v1908 = vpop.permute.xlu0 %1907
      %1909 = vrot.lane.b32.xlu0 %v1883, 124
      %v1910 = vpop.permute.xlu0 %1909
      %1911 = vrot.lane.b32.xlu0 %v1884, 124
      %v1912 = vpop.permute.xlu0 %1911
      %1913 = vrot.lane.b32.xlu0 %v1885, 124
      %v1914 = vpop.permute.xlu0 %1913
      %1915 = vrot.lane.b32.xlu0 %v1886, 124
      %v1916 = vpop.permute.xlu0 %1915
      %1917 = vrot.lane.b32.xlu0 %v1891, 124
      %v1918 = vpop.permute.xlu0 %1917
      %1919 = vrot.lane.b32.xlu0 %v1892, 124
      %v1920 = vpop.permute.xlu0 %1919
      %1921 = vrot.lane.b32.xlu0 %v1893, 124
      %v1922 = vpop.permute.xlu0 %1921
      %1923 = vrot.lane.b32.xlu0 %v1894, 124
      %v1924 = vpop.permute.xlu0 %1923
      %1925 = vrot.lane.b32.xlu0 %v1895, 124
      %v1926 = vpop.permute.xlu0 %1925
      %1927 = vrot.lane.b32.xlu0 %v1896, 124
      %v1928 = vpop.permute.xlu0 %1927
      %1929 = vrot.lane.b32.xlu0 %v1897, 124
      %v1930 = vpop.permute.xlu0 %1929
      %1931 = vrot.lane.b32.xlu0 %v1898, 124
      %v1932 = vpop.permute.xlu0 %1931
      %1933 = vrot.lane.b32.xlu0 %v1900, 124
      %v1934 = vpop.permute.xlu0 %1933
      %v1935 = vsel %vm1151, %v1902, %v1904
      %v1936 = vsel %vm1151, %v1904, %v1906
      %v1937 = vsel %vm1151, %v1906, %v1908
      %v1938 = vsel %vm1151, %v1908, %v1910
      %v1939 = vsel %vm1151, %v1910, %v1912
      %v1940 = vsel %vm1151, %v1912, %v1914
      %v1941 = vsel %vm1151, %v1914, %v1916
      %v1942 = vsel %vm1151, %v1916, %v1918
      %v1943 = vsel %vm1151, %v1918, %v1920
      %v1944 = vsel %vm1151, %v1920, %v1922
      %v1945 = vsel %vm1151, %v1922, %v1924
      %v1946 = vsel %vm1151, %v1924, %v1926
      %v1947 = vsel %vm1151, %v1926, %v1928
      %v1948 = vsel %vm1151, %v1928, %v1930
      %v1949 = vsel %vm1151, %v1930, %v1932
      %v1950 = vsel %vm1151, %v1932, %v1934
      %1967 = vst [vmem:[#allocation2 + $0x580] sm:$0xf] %v1935
      %1968 = vst [vmem:[#allocation2 + $0x588] sm:$0xf] %v1936
      %1969 = vst [vmem:[#allocation2 + $0x590] sm:$0xf] %v1937
      %1970 = vst [vmem:[#allocation2 + $0x598] sm:$0xf] %v1938
      %1971 = vst [vmem:[#allocation2 + $0x5a0] sm:$0xf] %v1939
      %1972 = vst [vmem:[#allocation2 + $0x5a8] sm:$0xf] %v1940
      %1973 = vst [vmem:[#allocation2 + $0x5b0] sm:$0xf] %v1941
      %1974 = vst [vmem:[#allocation2 + $0x5b8] sm:$0xf] %v1942
      %1975 = vst [vmem:[#allocation2 + $0x5c0] sm:$0xf] %v1943
      %1976 = vst [vmem:[#allocation2 + $0x5c8] sm:$0xf] %v1944
      %1977 = vst [vmem:[#allocation2 + $0x5d0] sm:$0xf] %v1945
      %1978 = vst [vmem:[#allocation2 + $0x5d8] sm:$0xf] %v1946
      %1979 = vst [vmem:[#allocation2 + $0x5e0] sm:$0xf] %v1947
      %1980 = vst [vmem:[#allocation2 + $0x5e8] sm:$0xf] %v1948
      %1981 = vst [vmem:[#allocation2 + $0x5f0] sm:$0xf] %v1949
      %1982 = vst [vmem:[#allocation2 + $0x5f8] sm:$0xf] %v1950
      %s1984 = scalar_lea.vmem [#allocation1], 1
      %1985 = vst [vmem:[%s1984] ss:$2 sm:$0xff] %v1069
      %s1986 = scalar_lea.vmem [#allocation1], 17
      %1987 = vst [vmem:[%s1986] ss:$2 sm:$0xff] %v1070
      %s1988 = scalar_lea.vmem [#allocation1], 33
      %1989 = vst [vmem:[%s1988] ss:$2 sm:$0xff] %v1071
      %s1990 = scalar_lea.vmem [#allocation1], 49
      %1991 = vst [vmem:[%s1990] ss:$2 sm:$0xff] %v1072
      %v1992 = vld.sshfl [vmem:[#allocation1] sm:$0xff pattern:$0x75316420]
      %v1993 = vld.sshfl [vmem:[#allocation1 + $0x8] sm:$0xff pattern:$0x75316420]
      %v1994 = vld.sshfl [vmem:[#allocation1 + $0x10] sm:$0xff pattern:$0x75316420]
      %v1995 = vld.sshfl [vmem:[#allocation1 + $0x18] sm:$0xff pattern:$0x75316420]
      %v1996 = vld.sshfl [vmem:[#allocation1 + $0x20] sm:$0xff pattern:$0x75316420]
      %v1997 = vld.sshfl [vmem:[#allocation1 + $0x28] sm:$0xff pattern:$0x75316420]
      %v1998 = vld.sshfl [vmem:[#allocation1 + $0x30] sm:$0xff pattern:$0x75316420]
      %v1999 = vld.sshfl [vmem:[#allocation1 + $0x38] sm:$0xff pattern:$0x75316420]
      %2000 = vst [vmem:[%s1984] ss:$2 sm:$0xff] %v1073
      %2001 = vst [vmem:[%s1986] ss:$2 sm:$0xff] %v1074
      %2002 = vst [vmem:[%s1988] ss:$2 sm:$0xff] %v1075
      %2003 = vst [vmem:[%s1990] ss:$2 sm:$0xff] %v1076
      %v2004 = vld.sshfl [vmem:[#allocation1] sm:$0xff pattern:$0x75316420]
      %v2005 = vld.sshfl [vmem:[#allocation1 + $0x8] sm:$0xff pattern:$0x75316420]
      %v2006 = vld.sshfl [vmem:[#allocation1 + $0x10] sm:$0xff pattern:$0x75316420]
      %v2007 = vld.sshfl [vmem:[#allocation1 + $0x18] sm:$0xff pattern:$0x75316420]
      %v2008 = vld.sshfl [vmem:[#allocation1 + $0x20] sm:$0xff pattern:$0x75316420]
      %v2009 = vld.sshfl [vmem:[#allocation1 + $0x28] sm:$0xff pattern:$0x75316420]
      %v2010 = vld.sshfl [vmem:[#allocation1 + $0x30] sm:$0xff pattern:$0x75316420]
      %v2011 = vld.sshfl [vmem:[#allocation1 + $0x38] sm:$0xff pattern:$0x75316420]
      %2012 = vst [vmem:[%s1984] ss:$2 sm:$0xff] %v1077
      %v2013 = vld.sshfl [vmem:[#allocation1] sm:$0xff pattern:$0x75316420]
      %2014 = vrot.lane.b32.xlu0 %v1992, 124
      %v2015 = vpop.permute.xlu0 %2014
      %2016 = vrot.lane.b32.xlu0 %v1993, 124
      %v2017 = vpop.permute.xlu0 %2016
      %2018 = vrot.lane.b32.xlu0 %v1994, 124
      %v2019 = vpop.permute.xlu0 %2018
      %2020 = vrot.lane.b32.xlu0 %v1995, 124
      %v2021 = vpop.permute.xlu0 %2020
      %2022 = vrot.lane.b32.xlu0 %v1996, 124
      %v2023 = vpop.permute.xlu0 %2022
      %2024 = vrot.lane.b32.xlu0 %v1997, 124
      %v2025 = vpop.permute.xlu0 %2024
      %2026 = vrot.lane.b32.xlu0 %v1998, 124
      %v2027 = vpop.permute.xlu0 %2026
      %2028 = vrot.lane.b32.xlu0 %v1999, 124
      %v2029 = vpop.permute.xlu0 %2028
      %2030 = vrot.lane.b32.xlu0 %v2004, 124
      %v2031 = vpop.permute.xlu0 %2030
      %2032 = vrot.lane.b32.xlu0 %v2005, 124
      %v2033 = vpop.permute.xlu0 %2032
      %2034 = vrot.lane.b32.xlu0 %v2006, 124
      %v2035 = vpop.permute.xlu0 %2034
      %2036 = vrot.lane.b32.xlu0 %v2007, 124
      %v2037 = vpop.permute.xlu0 %2036
      %2038 = vrot.lane.b32.xlu0 %v2008, 124
      %v2039 = vpop.permute.xlu0 %2038
      %2040 = vrot.lane.b32.xlu0 %v2009, 124
      %v2041 = vpop.permute.xlu0 %2040
      %2042 = vrot.lane.b32.xlu0 %v2010, 124
      %v2043 = vpop.permute.xlu0 %2042
      %2044 = vrot.lane.b32.xlu0 %v2011, 124
      %v2045 = vpop.permute.xlu0 %2044
      %2046 = vrot.lane.b32.xlu0 %v2013, 124
      %v2047 = vpop.permute.xlu0 %2046
      %v2048 = vsel %vm1151, %v2015, %v2017
      %v2049 = vsel %vm1151, %v2017, %v2019
      %v2050 = vsel %vm1151, %v2019, %v2021
      %v2051 = vsel %vm1151, %v2021, %v2023
      %v2052 = vsel %vm1151, %v2023, %v2025
      %v2053 = vsel %vm1151, %v2025, %v2027
      %v2054 = vsel %vm1151, %v2027, %v2029
      %v2055 = vsel %vm1151, %v2029, %v2031
      %v2056 = vsel %vm1151, %v2031, %v2033
      %v2057 = vsel %vm1151, %v2033, %v2035
      %v2058 = vsel %vm1151, %v2035, %v2037
      %v2059 = vsel %vm1151, %v2037, %v2039
      %v2060 = vsel %vm1151, %v2039, %v2041
      %v2061 = vsel %vm1151, %v2041, %v2043
      %v2062 = vsel %vm1151, %v2043, %v2045
      %v2063 = vsel %vm1151, %v2045, %v2047
      %2080 = vst [vmem:[#allocation2 + $0x600] sm:$0xf0] %v2048
      %2081 = vst [vmem:[#allocation2 + $0x608] sm:$0xf0] %v2049
      %2082 = vst [vmem:[#allocation2 + $0x610] sm:$0xf0] %v2050
      %2083 = vst [vmem:[#allocation2 + $0x618] sm:$0xf0] %v2051
      %2084 = vst [vmem:[#allocation2 + $0x620] sm:$0xf0] %v2052
      %2085 = vst [vmem:[#allocation2 + $0x628] sm:$0xf0] %v2053
      %2086 = vst [vmem:[#allocation2 + $0x630] sm:$0xf0] %v2054
      %2087 = vst [vmem:[#allocation2 + $0x638] sm:$0xf0] %v2055
      %2088 = vst [vmem:[#allocation2 + $0x640] sm:$0xf0] %v2056
      %2089 = vst [vmem:[#allocation2 + $0x648] sm:$0xf0] %v2057
      %2090 = vst [vmem:[#allocation2 + $0x650] sm:$0xf0] %v2058
      %2091 = vst [vmem:[#allocation2 + $0x658] sm:$0xf0] %v2059
      %2092 = vst [vmem:[#allocation2 + $0x660] sm:$0xf0] %v2060
      %2093 = vst [vmem:[#allocation2 + $0x668] sm:$0xf0] %v2061
      %2094 = vst [vmem:[#allocation2 + $0x670] sm:$0xf0] %v2062
      %2095 = vst [vmem:[#allocation2 + $0x678] sm:$0xf0] %v2063
      %v2096 = vld [vmem:[%s138 + $0x8] sm:$0xff]
      %v2097 = vld [vmem:[%s138 + $0x10] sm:$0xff]
      %v2098 = vld [vmem:[%s138 + $0x18] sm:$0xff]
      %v2099 = vld [vmem:[%s138 + $0x20] sm:$0xff]
      %v2100 = vld [vmem:[%s138 + $0x28] sm:$0xff]
      %v2101 = vld [vmem:[%s138 + $0x30] sm:$0xff]
      %v2102 = vld [vmem:[%s138 + $0x38] sm:$0xff]
      %v2103 = vld [vmem:[%s138 + $0x40] sm:$0xff]
      %v2104 = vld [vmem:[%s138 + $0x48] sm:$0xff]
      %v2105 = vld [vmem:[%s138 + $0x50] sm:$0xff]
      %2115 = vst [vmem:[#allocation1] ss:$2 sm:$0xff] %v2096
      %s2116 = scalar_lea.vmem [#allocation1], 16
      %2117 = vst [vmem:[%s2116] ss:$2 sm:$0xff] %v2097
      %s2118 = scalar_lea.vmem [#allocation1], 32
      %2119 = vst [vmem:[%s2118] ss:$2 sm:$0xff] %v2098
      %s2120 = scalar_lea.vmem [#allocation1], 48
      %2121 = vst [vmem:[%s2120] ss:$2 sm:$0xff] %v2099
      %v2122 = vld.sshfl [vmem:[#allocation1 + $0x8] sm:$0xff pattern:$0x75316420]
      %v2123 = vld.sshfl [vmem:[#allocation1 + $0x10] sm:$0xff pattern:$0x75316420]
      %v2124 = vld.sshfl [vmem:[#allocation1 + $0x18] sm:$0xff pattern:$0x75316420]
      %v2125 = vld.sshfl [vmem:[#allocation1 + $0x20] sm:$0xff pattern:$0x75316420]
      %v2126 = vld.sshfl [vmem:[#allocation1 + $0x28] sm:$0xff pattern:$0x75316420]
      %v2127 = vld.sshfl [vmem:[#allocation1 + $0x30] sm:$0xff pattern:$0x75316420]
      %v2128 = vld.sshfl [vmem:[#allocation1 + $0x38] sm:$0xff pattern:$0x75316420]
      %2129 = vst [vmem:[#allocation1] ss:$2 sm:$0xff] %v2100
      %2130 = vst [vmem:[%s2116] ss:$2 sm:$0xff] %v2101
      %2131 = vst [vmem:[%s2118] ss:$2 sm:$0xff] %v2102
      %2132 = vst [vmem:[%s2120] ss:$2 sm:$0xff] %v2103
      %v2133 = vld.sshfl [vmem:[#allocation1] sm:$0xff pattern:$0x75316420]
      %v2134 = vld.sshfl [vmem:[#allocation1 + $0x8] sm:$0xff pattern:$0x75316420]
      %v2135 = vld.sshfl [vmem:[#allocation1 + $0x10] sm:$0xff pattern:$0x75316420]
      %v2136 = vld.sshfl [vmem:[#allocation1 + $0x18] sm:$0xff pattern:$0x75316420]
      %v2137 = vld.sshfl [vmem:[#allocation1 + $0x20] sm:$0xff pattern:$0x75316420]
      %v2138 = vld.sshfl [vmem:[#allocation1 + $0x28] sm:$0xff pattern:$0x75316420]
      %v2139 = vld.sshfl [vmem:[#allocation1 + $0x30] sm:$0xff pattern:$0x75316420]
      %v2140 = vld.sshfl [vmem:[#allocation1 + $0x38] sm:$0xff pattern:$0x75316420]
      %2141 = vst [vmem:[#allocation1] ss:$2 sm:$0xff] %v2104
      %v2142 = vld.sshfl [vmem:[#allocation1] sm:$0xff pattern:$0x75316420]
      %v2143 = vld.sshfl [vmem:[#allocation1 + $0x8] sm:$0xff pattern:$0x75316420]
      %2144 = vrot.lane.b32.xlu0 %v2122, 123
      %v2145 = vpop.permute.xlu0 %2144
      %2146 = vrot.lane.b32.xlu0 %v2123, 123
      %v2147 = vpop.permute.xlu0 %2146
      %2148 = vrot.lane.b32.xlu0 %v2124, 123
      %v2149 = vpop.permute.xlu0 %2148
      %2150 = vrot.lane.b32.xlu0 %v2125, 123
      %v2151 = vpop.permute.xlu0 %2150
      %2152 = vrot.lane.b32.xlu0 %v2126, 123
      %v2153 = vpop.permute.xlu0 %2152
      %2154 = vrot.lane.b32.xlu0 %v2127, 123
      %v2155 = vpop.permute.xlu0 %2154
      %2156 = vrot.lane.b32.xlu0 %v2128, 123
      %v2157 = vpop.permute.xlu0 %2156
      %2158 = vrot.lane.b32.xlu0 %v2133, 123
      %v2159 = vpop.permute.xlu0 %2158
      %2160 = vrot.lane.b32.xlu0 %v2134, 123
      %v2161 = vpop.permute.xlu0 %2160
      %2162 = vrot.lane.b32.xlu0 %v2135, 123
      %v2163 = vpop.permute.xlu0 %2162
      %2164 = vrot.lane.b32.xlu0 %v2136, 123
      %v2165 = vpop.permute.xlu0 %2164
      %2166 = vrot.lane.b32.xlu0 %v2137, 123
      %v2167 = vpop.permute.xlu0 %2166
      %2168 = vrot.lane.b32.xlu0 %v2138, 123
      %v2169 = vpop.permute.xlu0 %2168
      %2170 = vrot.lane.b32.xlu0 %v2139, 123
      %v2171 = vpop.permute.xlu0 %2170
      %2172 = vrot.lane.b32.xlu0 %v2140, 123
      %v2173 = vpop.permute.xlu0 %2172
      %2174 = vrot.lane.b32.xlu0 %v2142, 123
      %v2175 = vpop.permute.xlu0 %2174
      %2176 = vrot.lane.b32.xlu0 %v2143, 123
      %v2177 = vpop.permute.xlu0 %2176
      %vm2178 = vcmask 1006592
      %v2179 = vsel %vm2178, %v2145, %v2147
      %v2180 = vsel %vm2178, %v2147, %v2149
      %v2181 = vsel %vm2178, %v2149, %v2151
      %v2182 = vsel %vm2178, %v2151, %v2153
      %v2183 = vsel %vm2178, %v2153, %v2155
      %v2184 = vsel %vm2178, %v2155, %v2157
      %v2185 = vsel %vm2178, %v2157, %v2159
      %v2186 = vsel %vm2178, %v2159, %v2161
      %v2187 = vsel %vm2178, %v2161, %v2163
      %v2188 = vsel %vm2178, %v2163, %v2165
      %v2189 = vsel %vm2178, %v2165, %v2167
      %v2190 = vsel %vm2178, %v2167, %v2169
      %v2191 = vsel %vm2178, %v2169, %v2171
      %v2192 = vsel %vm2178, %v2171, %v2173
      %v2193 = vsel %vm2178, %v2173, %v2175
      %v2194 = vsel %vm2178, %v2175, %v2177
      %2211 = vst [vmem:[#allocation2 + $0x80] sm:$0xf] %v2179
      %2212 = vst [vmem:[#allocation2 + $0x88] sm:$0xf] %v2180
      %2213 = vst [vmem:[#allocation2 + $0x90] sm:$0xf] %v2181
      %2214 = vst [vmem:[#allocation2 + $0x98] sm:$0xf] %v2182
      %2215 = vst [vmem:[#allocation2 + $0xa0] sm:$0xf] %v2183
      %2216 = vst [vmem:[#allocation2 + $0xa8] sm:$0xf] %v2184
      %2217 = vst [vmem:[#allocation2 + $0xb0] sm:$0xf] %v2185
      %2218 = vst [vmem:[#allocation2 + $0xb8] sm:$0xf] %v2186
      %2219 = vst [vmem:[#allocation2 + $0xc0] sm:$0xf] %v2187
      %2220 = vst [vmem:[#allocation2 + $0xc8] sm:$0xf] %v2188
      %2221 = vst [vmem:[#allocation2 + $0xd0] sm:$0xf] %v2189
      %2222 = vst [vmem:[#allocation2 + $0xd8] sm:$0xf] %v2190
      %2223 = vst [vmem:[#allocation2 + $0xe0] sm:$0xf] %v2191
      %2224 = vst [vmem:[#allocation2 + $0xe8] sm:$0xf] %v2192
      %2225 = vst [vmem:[#allocation2 + $0xf0] sm:$0xf] %v2193
      %2226 = vst [vmem:[#allocation2 + $0xf8] sm:$0xf] %v2194
      %s2228 = scalar_lea.vmem [#allocation1], 1
      %2229 = vst [vmem:[%s2228] ss:$2 sm:$0xff] %v2097
      %s2230 = scalar_lea.vmem [#allocation1], 17
      %2231 = vst [vmem:[%s2230] ss:$2 sm:$0xff] %v2098
      %s2232 = scalar_lea.vmem [#allocation1], 33
      %2233 = vst [vmem:[%s2232] ss:$2 sm:$0xff] %v2099
      %s2234 = scalar_lea.vmem [#allocation1], 49
      %2235 = vst [vmem:[%s2234] ss:$2 sm:$0xff] %v2100
      %v2236 = vld.sshfl [vmem:[#allocation1] sm:$0xff pattern:$0x75316420]
      %v2237 = vld.sshfl [vmem:[#allocation1 + $0x8] sm:$0xff pattern:$0x75316420]
      %v2238 = vld.sshfl [vmem:[#allocation1 + $0x10] sm:$0xff pattern:$0x75316420]
      %v2239 = vld.sshfl [vmem:[#allocation1 + $0x18] sm:$0xff pattern:$0x75316420]
      %v2240 = vld.sshfl [vmem:[#allocation1 + $0x20] sm:$0xff pattern:$0x75316420]
      %v2241 = vld.sshfl [vmem:[#allocation1 + $0x28] sm:$0xff pattern:$0x75316420]
      %v2242 = vld.sshfl [vmem:[#allocation1 + $0x30] sm:$0xff pattern:$0x75316420]
      %v2243 = vld.sshfl [vmem:[#allocation1 + $0x38] sm:$0xff pattern:$0x75316420]
      %2244 = vst [vmem:[%s2228] ss:$2 sm:$0xff] %v2101
      %2245 = vst [vmem:[%s2230] ss:$2 sm:$0xff] %v2102
      %2246 = vst [vmem:[%s2232] ss:$2 sm:$0xff] %v2103
      %2247 = vst [vmem:[%s2234] ss:$2 sm:$0xff] %v2104
      %v2248 = vld.sshfl [vmem:[#allocation1] sm:$0xff pattern:$0x75316420]
      %v2249 = vld.sshfl [vmem:[#allocation1 + $0x8] sm:$0xff pattern:$0x75316420]
      %v2250 = vld.sshfl [vmem:[#allocation1 + $0x10] sm:$0xff pattern:$0x75316420]
      %v2251 = vld.sshfl [vmem:[#allocation1 + $0x18] sm:$0xff pattern:$0x75316420]
      %v2252 = vld.sshfl [vmem:[#allocation1 + $0x20] sm:$0xff pattern:$0x75316420]
      %v2253 = vld.sshfl [vmem:[#allocation1 + $0x28] sm:$0xff pattern:$0x75316420]
      %v2254 = vld.sshfl [vmem:[#allocation1 + $0x30] sm:$0xff pattern:$0x75316420]
      %v2255 = vld.sshfl [vmem:[#allocation1 + $0x38] sm:$0xff pattern:$0x75316420]
      %2256 = vst [vmem:[%s2228] ss:$2 sm:$0xff] %v2105
      %v2257 = vld.sshfl [vmem:[#allocation1] sm:$0xff pattern:$0x75316420]
      %2258 = vrot.lane.b32.xlu0 %v2236, 123
      %v2259 = vpop.permute.xlu0 %2258
      %2260 = vrot.lane.b32.xlu0 %v2237, 123
      %v2261 = vpop.permute.xlu0 %2260
      %2262 = vrot.lane.b32.xlu0 %v2238, 123
      %v2263 = vpop.permute.xlu0 %2262
      %2264 = vrot.lane.b32.xlu0 %v2239, 123
      %v2265 = vpop.permute.xlu0 %2264
      %2266 = vrot.lane.b32.xlu0 %v2240, 123
      %v2267 = vpop.permute.xlu0 %2266
      %2268 = vrot.lane.b32.xlu0 %v2241, 123
      %v2269 = vpop.permute.xlu0 %2268
      %2270 = vrot.lane.b32.xlu0 %v2242, 123
      %v2271 = vpop.permute.xlu0 %2270
      %2272 = vrot.lane.b32.xlu0 %v2243, 123
      %v2273 = vpop.permute.xlu0 %2272
      %2274 = vrot.lane.b32.xlu0 %v2248, 123
      %v2275 = vpop.permute.xlu0 %2274
      %2276 = vrot.lane.b32.xlu0 %v2249, 123
      %v2277 = vpop.permute.xlu0 %2276
      %2278 = vrot.lane.b32.xlu0 %v2250, 123
      %v2279 = vpop.permute.xlu0 %2278
      %2280 = vrot.lane.b32.xlu0 %v2251, 123
      %v2281 = vpop.permute.xlu0 %2280
      %2282 = vrot.lane.b32.xlu0 %v2252, 123
      %v2283 = vpop.permute.xlu0 %2282
      %2284 = vrot.lane.b32.xlu0 %v2253, 123
      %v2285 = vpop.permute.xlu0 %2284
      %2286 = vrot.lane.b32.xlu0 %v2254, 123
      %v2287 = vpop.permute.xlu0 %2286
      %2288 = vrot.lane.b32.xlu0 %v2255, 123
      %v2289 = vpop.permute.xlu0 %2288
      %2290 = vrot.lane.b32.xlu0 %v2257, 123
      %v2291 = vpop.permute.xlu0 %2290
      %v2292 = vsel %vm2178, %v2259, %v2261
      %v2293 = vsel %vm2178, %v2261, %v2263
      %v2294 = vsel %vm2178, %v2263, %v2265
      %v2295 = vsel %vm2178, %v2265, %v2267
      %v2296 = vsel %vm2178, %v2267, %v2269
      %v2297 = vsel %vm2178, %v2269, %v2271
      %v2298 = vsel %vm2178, %v2271, %v2273
      %v2299 = vsel %vm2178, %v2273, %v2275
      %v2300 = vsel %vm2178, %v2275, %v2277
      %v2301 = vsel %vm2178, %v2277, %v2279
      %v2302 = vsel %vm2178, %v2279, %v2281
      %v2303 = vsel %vm2178, %v2281, %v2283
      %v2304 = vsel %vm2178, %v2283, %v2285
      %v2305 = vsel %vm2178, %v2285, %v2287
      %v2306 = vsel %vm2178, %v2287, %v2289
      %v2307 = vsel %vm2178, %v2289, %v2291
      %2324 = vst [vmem:[#allocation2 + $0x100] sm:$0xf0] %v2292
      %2325 = vst [vmem:[#allocation2 + $0x108] sm:$0xf0] %v2293
      %2326 = vst [vmem:[#allocation2 + $0x110] sm:$0xf0] %v2294
      %2327 = vst [vmem:[#allocation2 + $0x118] sm:$0xf0] %v2295
      %2328 = vst [vmem:[#allocation2 + $0x120] sm:$0xf0] %v2296
      %2329 = vst [vmem:[#allocation2 + $0x128] sm:$0xf0] %v2297
      %2330 = vst [vmem:[#allocation2 + $0x130] sm:$0xf0] %v2298
      %2331 = vst [vmem:[#allocation2 + $0x138] sm:$0xf0] %v2299
      %2332 = vst [vmem:[#allocation2 + $0x140] sm:$0xf0] %v2300
      %2333 = vst [vmem:[#allocation2 + $0x148] sm:$0xf0] %v2301
      %2334 = vst [vmem:[#allocation2 + $0x150] sm:$0xf0] %v2302
      %2335 = vst [vmem:[#allocation2 + $0x158] sm:$0xf0] %v2303
      %2336 = vst [vmem:[#allocation2 + $0x160] sm:$0xf0] %v2304
      %2337 = vst [vmem:[#allocation2 + $0x168] sm:$0xf0] %v2305
      %2338 = vst [vmem:[#allocation2 + $0x170] sm:$0xf0] %v2306
      %2339 = vst [vmem:[#allocation2 + $0x178] sm:$0xf0] %v2307
      %2340 = vst [vmem:[#allocation1] ss:$2 sm:$0xff] %v2097
      %s2341 = scalar_lea.vmem [#allocation1], 16
      %2342 = vst [vmem:[%s2341] ss:$2 sm:$0xff] %v2098
      %s2343 = scalar_lea.vmem [#allocation1], 32
      %2344 = vst [vmem:[%s2343] ss:$2 sm:$0xff] %v2099
      %s2345 = scalar_lea.vmem [#allocation1], 48
      %2346 = vst [vmem:[%s2345] ss:$2 sm:$0xff] %v2100
      %v2347 = vld.sshfl [vmem:[#allocation1 + $0x8] sm:$0xff pattern:$0x75316420]
      %v2348 = vld.sshfl [vmem:[#allocation1 + $0x10] sm:$0xff pattern:$0x75316420]
      %v2349 = vld.sshfl [vmem:[#allocation1 + $0x18] sm:$0xff pattern:$0x75316420]
      %v2350 = vld.sshfl [vmem:[#allocation1 + $0x20] sm:$0xff pattern:$0x75316420]
      %v2351 = vld.sshfl [vmem:[#allocation1 + $0x28] sm:$0xff pattern:$0x75316420]
      %v2352 = vld.sshfl [vmem:[#allocation1 + $0x30] sm:$0xff pattern:$0x75316420]
      %v2353 = vld.sshfl [vmem:[#allocation1 + $0x38] sm:$0xff pattern:$0x75316420]
      %2354 = vst [vmem:[#allocation1] ss:$2 sm:$0xff] %v2101
      %2355 = vst [vmem:[%s2341] ss:$2 sm:$0xff] %v2102
      %2356 = vst [vmem:[%s2343] ss:$2 sm:$0xff] %v2103
      %2357 = vst [vmem:[%s2345] ss:$2 sm:$0xff] %v2104
      %v2358 = vld.sshfl [vmem:[#allocation1] sm:$0xff pattern:$0x75316420]
      %v2359 = vld.sshfl [vmem:[#allocation1 + $0x8] sm:$0xff pattern:$0x75316420]
      %v2360 = vld.sshfl [vmem:[#allocation1 + $0x10] sm:$0xff pattern:$0x75316420]
      %v2361 = vld.sshfl [vmem:[#allocation1 + $0x18] sm:$0xff pattern:$0x75316420]
      %v2362 = vld.sshfl [vmem:[#allocation1 + $0x20] sm:$0xff pattern:$0x75316420]
      %v2363 = vld.sshfl [vmem:[#allocation1 + $0x28] sm:$0xff pattern:$0x75316420]
      %v2364 = vld.sshfl [vmem:[#allocation1 + $0x30] sm:$0xff pattern:$0x75316420]
      %v2365 = vld.sshfl [vmem:[#allocation1 + $0x38] sm:$0xff pattern:$0x75316420]
      %2366 = vst [vmem:[#allocation1] ss:$2 sm:$0xff] %v2105
      %v2367 = vld.sshfl [vmem:[#allocation1] sm:$0xff pattern:$0x75316420]
      %v2368 = vld.sshfl [vmem:[#allocation1 + $0x8] sm:$0xff pattern:$0x75316420]
      %2369 = vrot.lane.b32.xlu0 %v2347, 123
      %v2370 = vpop.permute.xlu0 %2369
      %2371 = vrot.lane.b32.xlu0 %v2348, 123
      %v2372 = vpop.permute.xlu0 %2371
      %2373 = vrot.lane.b32.xlu0 %v2349, 123
      %v2374 = vpop.permute.xlu0 %2373
      %2375 = vrot.lane.b32.xlu0 %v2350, 123
      %v2376 = vpop.permute.xlu0 %2375
      %2377 = vrot.lane.b32.xlu0 %v2351, 123
      %v2378 = vpop.permute.xlu0 %2377
      %2379 = vrot.lane.b32.xlu0 %v2352, 123
      %v2380 = vpop.permute.xlu0 %2379
      %2381 = vrot.lane.b32.xlu0 %v2353, 123
      %v2382 = vpop.permute.xlu0 %2381
      %2383 = vrot.lane.b32.xlu0 %v2358, 123
      %v2384 = vpop.permute.xlu0 %2383
      %2385 = vrot.lane.b32.xlu0 %v2359, 123
      %v2386 = vpop.permute.xlu0 %2385
      %2387 = vrot.lane.b32.xlu0 %v2360, 123
      %v2388 = vpop.permute.xlu0 %2387
      %2389 = vrot.lane.b32.xlu0 %v2361, 123
      %v2390 = vpop.permute.xlu0 %2389
      %2391 = vrot.lane.b32.xlu0 %v2362, 123
      %v2392 = vpop.permute.xlu0 %2391
      %2393 = vrot.lane.b32.xlu0 %v2363, 123
      %v2394 = vpop.permute.xlu0 %2393
      %2395 = vrot.lane.b32.xlu0 %v2364, 123
      %v2396 = vpop.permute.xlu0 %2395
      %2397 = vrot.lane.b32.xlu0 %v2365, 123
      %v2398 = vpop.permute.xlu0 %2397
      %2399 = vrot.lane.b32.xlu0 %v2367, 123
      %v2400 = vpop.permute.xlu0 %2399
      %2401 = vrot.lane.b32.xlu0 %v2368, 123
      %v2402 = vpop.permute.xlu0 %2401
      %v2403 = vsel %vm2178, %v2370, %v2372
      %v2404 = vsel %vm2178, %v2372, %v2374
      %v2405 = vsel %vm2178, %v2374, %v2376
      %v2406 = vsel %vm2178, %v2376, %v2378
      %v2407 = vsel %vm2178, %v2378, %v2380
      %v2408 = vsel %vm2178, %v2380, %v2382
      %v2409 = vsel %vm2178, %v2382, %v2384
      %v2410 = vsel %vm2178, %v2384, %v2386
      %v2411 = vsel %vm2178, %v2386, %v2388
      %v2412 = vsel %vm2178, %v2388, %v2390
      %v2413 = vsel %vm2178, %v2390, %v2392
      %v2414 = vsel %vm2178, %v2392, %v2394
      %v2415 = vsel %vm2178, %v2394, %v2396
      %v2416 = vsel %vm2178, %v2396, %v2398
      %v2417 = vsel %vm2178, %v2398, %v2400
      %v2418 = vsel %vm2178, %v2400, %v2402
      %2435 = vst [vmem:[#allocation2 + $0x200] sm:$0xf] %v2403
      %2436 = vst [vmem:[#allocation2 + $0x208] sm:$0xf] %v2404
      %2437 = vst [vmem:[#allocation2 + $0x210] sm:$0xf] %v2405
      %2438 = vst [vmem:[#allocation2 + $0x218] sm:$0xf] %v2406
      %2439 = vst [vmem:[#allocation2 + $0x220] sm:$0xf] %v2407
      %2440 = vst [vmem:[#allocation2 + $0x228] sm:$0xf] %v2408
      %2441 = vst [vmem:[#allocation2 + $0x230] sm:$0xf] %v2409
      %2442 = vst [vmem:[#allocation2 + $0x238] sm:$0xf] %v2410
      %2443 = vst [vmem:[#allocation2 + $0x240] sm:$0xf] %v2411
      %2444 = vst [vmem:[#allocation2 + $0x248] sm:$0xf] %v2412
      %2445 = vst [vmem:[#allocation2 + $0x250] sm:$0xf] %v2413
      %2446 = vst [vmem:[#allocation2 + $0x258] sm:$0xf] %v2414
      %2447 = vst [vmem:[#allocation2 + $0x260] sm:$0xf] %v2415
      %2448 = vst [vmem:[#allocation2 + $0x268] sm:$0xf] %v2416
      %2449 = vst [vmem:[#allocation2 + $0x270] sm:$0xf] %v2417
      %2450 = vst [vmem:[#allocation2 + $0x278] sm:$0xf] %v2418
      %v2451 = vld [vmem:[%s138 + $0x8] sm:$0xff]
      %v2452 = vld [vmem:[%s138 + $0x10] sm:$0xff]
      %v2453 = vld [vmem:[%s138 + $0x18] sm:$0xff]
      %v2454 = vld [vmem:[%s138 + $0x20] sm:$0xff]
      %v2455 = vld [vmem:[%s138 + $0x28] sm:$0xff]
      %v2456 = vld [vmem:[%s138 + $0x30] sm:$0xff]
      %v2457 = vld [vmem:[%s138 + $0x38] sm:$0xff]
      %v2458 = vld [vmem:[%s138 + $0x40] sm:$0xff]
      %v2459 = vld [vmem:[%s138 + $0x48] sm:$0xff]
      %v2460 = vld [vmem:[%s138 + $0x50] sm:$0xff]
      %v2461 = vld [vmem:[%s138 + $0x58] sm:$0xff]
      %s2471 = scalar_lea.vmem [#allocation1], 1
      %2472 = vst [vmem:[%s2471] ss:$2 sm:$0xff] %v2451
      %s2473 = scalar_lea.vmem [#allocation1], 17
      %2474 = vst [vmem:[%s2473] ss:$2 sm:$0xff] %v2452
      %s2475 = scalar_lea.vmem [#allocation1], 33
      %2476 = vst [vmem:[%s2475] ss:$2 sm:$0xff] %v2453
      %s2477 = scalar_lea.vmem [#allocation1], 49
      %2478 = vst [vmem:[%s2477] ss:$2 sm:$0xff] %v2454
      %v2479 = vld.sshfl [vmem:[#allocation1] sm:$0xff pattern:$0x75316420]
      %v2480 = vld.sshfl [vmem:[#allocation1 + $0x8] sm:$0xff pattern:$0x75316420]
      %v2481 = vld.sshfl [vmem:[#allocation1 + $0x10] sm:$0xff pattern:$0x75316420]
      %v2482 = vld.sshfl [vmem:[#allocation1 + $0x18] sm:$0xff pattern:$0x75316420]
      %v2483 = vld.sshfl [vmem:[#allocation1 + $0x20] sm:$0xff pattern:$0x75316420]
      %v2484 = vld.sshfl [vmem:[#allocation1 + $0x28] sm:$0xff pattern:$0x75316420]
      %v2485 = vld.sshfl [vmem:[#allocation1 + $0x30] sm:$0xff pattern:$0x75316420]
      %v2486 = vld.sshfl [vmem:[#allocation1 + $0x38] sm:$0xff pattern:$0x75316420]
      %2487 = vst [vmem:[%s2471] ss:$2 sm:$0xff] %v2455
      %2488 = vst [vmem:[%s2473] ss:$2 sm:$0xff] %v2456
      %2489 = vst [vmem:[%s2475] ss:$2 sm:$0xff] %v2457
      %2490 = vst [vmem:[%s2477] ss:$2 sm:$0xff] %v2458
      %v2491 = vld.sshfl [vmem:[#allocation1] sm:$0xff pattern:$0x75316420]
      %v2492 = vld.sshfl [vmem:[#allocation1 + $0x8] sm:$0xff pattern:$0x75316420]
      %v2493 = vld.sshfl [vmem:[#allocation1 + $0x10] sm:$0xff pattern:$0x75316420]
      %v2494 = vld.sshfl [vmem:[#allocation1 + $0x18] sm:$0xff pattern:$0x75316420]
      %v2495 = vld.sshfl [vmem:[#allocation1 + $0x20] sm:$0xff pattern:$0x75316420]
      %v2496 = vld.sshfl [vmem:[#allocation1 + $0x28] sm:$0xff pattern:$0x75316420]
      %v2497 = vld.sshfl [vmem:[#allocation1 + $0x30] sm:$0xff pattern:$0x75316420]
      %v2498 = vld.sshfl [vmem:[#allocation1 + $0x38] sm:$0xff pattern:$0x75316420]
      %2499 = vst [vmem:[%s2471] ss:$2 sm:$0xff] %v2459
      %v2500 = vld.sshfl [vmem:[#allocation1] sm:$0xff pattern:$0x75316420]
      %2501 = vrot.lane.b32.xlu0 %v2479, 122
      %v2502 = vpop.permute.xlu0 %2501
      %2503 = vrot.lane.b32.xlu0 %v2480, 122
      %v2504 = vpop.permute.xlu0 %2503
      %2505 = vrot.lane.b32.xlu0 %v2481, 122
      %v2506 = vpop.permute.xlu0 %2505
      %2507 = vrot.lane.b32.xlu0 %v2482, 122
      %v2508 = vpop.permute.xlu0 %2507
      %2509 = vrot.lane.b32.xlu0 %v2483, 122
      %v2510 = vpop.permute.xlu0 %2509
      %2511 = vrot.lane.b32.xlu0 %v2484, 122
      %v2512 = vpop.permute.xlu0 %2511
      %2513 = vrot.lane.b32.xlu0 %v2485, 122
      %v2514 = vpop.permute.xlu0 %2513
      %2515 = vrot.lane.b32.xlu0 %v2486, 122
      %v2516 = vpop.permute.xlu0 %2515
      %2517 = vrot.lane.b32.xlu0 %v2491, 122
      %v2518 = vpop.permute.xlu0 %2517
      %2519 = vrot.lane.b32.xlu0 %v2492, 122
      %v2520 = vpop.permute.xlu0 %2519
      %2521 = vrot.lane.b32.xlu0 %v2493, 122
      %v2522 = vpop.permute.xlu0 %2521
      %2523 = vrot.lane.b32.xlu0 %v2494, 122
      %v2524 = vpop.permute.xlu0 %2523
      %2525 = vrot.lane.b32.xlu0 %v2495, 122
      %v2526 = vpop.permute.xlu0 %2525
      %2527 = vrot.lane.b32.xlu0 %v2496, 122
      %v2528 = vpop.permute.xlu0 %2527
      %2529 = vrot.lane.b32.xlu0 %v2497, 122
      %v2530 = vpop.permute.xlu0 %2529
      %2531 = vrot.lane.b32.xlu0 %v2498, 122
      %v2532 = vpop.permute.xlu0 %2531
      %2533 = vrot.lane.b32.xlu0 %v2500, 122
      %v2534 = vpop.permute.xlu0 %2533
      %vm2535 = vcmask 998400
      %v2536 = vsel %vm2535, %v2502, %v2504
      %v2537 = vsel %vm2535, %v2504, %v2506
      %v2538 = vsel %vm2535, %v2506, %v2508
      %v2539 = vsel %vm2535, %v2508, %v2510
      %v2540 = vsel %vm2535, %v2510, %v2512
      %v2541 = vsel %vm2535, %v2512, %v2514
      %v2542 = vsel %vm2535, %v2514, %v2516
      %v2543 = vsel %vm2535, %v2516, %v2518
      %v2544 = vsel %vm2535, %v2518, %v2520
      %v2545 = vsel %vm2535, %v2520, %v2522
      %v2546 = vsel %vm2535, %v2522, %v2524
      %v2547 = vsel %vm2535, %v2524, %v2526
      %v2548 = vsel %vm2535, %v2526, %v2528
      %v2549 = vsel %vm2535, %v2528, %v2530
      %v2550 = vsel %vm2535, %v2530, %v2532
      %v2551 = vsel %vm2535, %v2532, %v2534
      %2568 = vst [vmem:[#allocation2 + $0x280] sm:$0xf0] %v2536
      %2569 = vst [vmem:[#allocation2 + $0x288] sm:$0xf0] %v2537
      %2570 = vst [vmem:[#allocation2 + $0x290] sm:$0xf0] %v2538
      %2571 = vst [vmem:[#allocation2 + $0x298] sm:$0xf0] %v2539
      %2572 = vst [vmem:[#allocation2 + $0x2a0] sm:$0xf0] %v2540
      %2573 = vst [vmem:[#allocation2 + $0x2a8] sm:$0xf0] %v2541
      %2574 = vst [vmem:[#allocation2 + $0x2b0] sm:$0xf0] %v2542
      %2575 = vst [vmem:[#allocation2 + $0x2b8] sm:$0xf0] %v2543
      %2576 = vst [vmem:[#allocation2 + $0x2c0] sm:$0xf0] %v2544
      %2577 = vst [vmem:[#allocation2 + $0x2c8] sm:$0xf0] %v2545
      %2578 = vst [vmem:[#allocation2 + $0x2d0] sm:$0xf0] %v2546
      %2579 = vst [vmem:[#allocation2 + $0x2d8] sm:$0xf0] %v2547
      %2580 = vst [vmem:[#allocation2 + $0x2e0] sm:$0xf0] %v2548
      %2581 = vst [vmem:[#allocation2 + $0x2e8] sm:$0xf0] %v2549
      %2582 = vst [vmem:[#allocation2 + $0x2f0] sm:$0xf0] %v2550
      %2583 = vst [vmem:[#allocation2 + $0x2f8] sm:$0xf0] %v2551
      %2585 = vst [vmem:[#allocation1] ss:$2 sm:$0xff] %v2452
      %s2586 = scalar_lea.vmem [#allocation1], 16
      %2587 = vst [vmem:[%s2586] ss:$2 sm:$0xff] %v2453
      %s2588 = scalar_lea.vmem [#allocation1], 32
      %2589 = vst [vmem:[%s2588] ss:$2 sm:$0xff] %v2454
      %s2590 = scalar_lea.vmem [#allocation1], 48
      %2591 = vst [vmem:[%s2590] ss:$2 sm:$0xff] %v2455
      %v2592 = vld.sshfl [vmem:[#allocation1] sm:$0xff pattern:$0x75316420]
      %v2593 = vld.sshfl [vmem:[#allocation1 + $0x8] sm:$0xff pattern:$0x75316420]
      %v2594 = vld.sshfl [vmem:[#allocation1 + $0x10] sm:$0xff pattern:$0x75316420]
      %v2595 = vld.sshfl [vmem:[#allocation1 + $0x18] sm:$0xff pattern:$0x75316420]
      %v2596 = vld.sshfl [vmem:[#allocation1 + $0x20] sm:$0xff pattern:$0x75316420]
      %v2597 = vld.sshfl [vmem:[#allocation1 + $0x28] sm:$0xff pattern:$0x75316420]
      %v2598 = vld.sshfl [vmem:[#allocation1 + $0x30] sm:$0xff pattern:$0x75316420]
      %v2599 = vld.sshfl [vmem:[#allocation1 + $0x38] sm:$0xff pattern:$0x75316420]
      %2600 = vst [vmem:[#allocation1] ss:$2 sm:$0xff] %v2456
      %2601 = vst [vmem:[%s2586] ss:$2 sm:$0xff] %v2457
      %2602 = vst [vmem:[%s2588] ss:$2 sm:$0xff] %v2458
      %2603 = vst [vmem:[%s2590] ss:$2 sm:$0xff] %v2459
      %v2604 = vld.sshfl [vmem:[#allocation1] sm:$0xff pattern:$0x75316420]
      %v2605 = vld.sshfl [vmem:[#allocation1 + $0x8] sm:$0xff pattern:$0x75316420]
      %v2606 = vld.sshfl [vmem:[#allocation1 + $0x10] sm:$0xff pattern:$0x75316420]
      %v2607 = vld.sshfl [vmem:[#allocation1 + $0x18] sm:$0xff pattern:$0x75316420]
      %v2608 = vld.sshfl [vmem:[#allocation1 + $0x20] sm:$0xff pattern:$0x75316420]
      %v2609 = vld.sshfl [vmem:[#allocation1 + $0x28] sm:$0xff pattern:$0x75316420]
      %v2610 = vld.sshfl [vmem:[#allocation1 + $0x30] sm:$0xff pattern:$0x75316420]
      %v2611 = vld.sshfl [vmem:[#allocation1 + $0x38] sm:$0xff pattern:$0x75316420]
      %2612 = vst [vmem:[#allocation1] ss:$2 sm:$0xff] %v2460
      %v2613 = vld.sshfl [vmem:[#allocation1] sm:$0xff pattern:$0x75316420]
      %2614 = vrot.lane.b32.xlu0 %v2592, 122
      %v2615 = vpop.permute.xlu0 %2614
      %2616 = vrot.lane.b32.xlu0 %v2593, 122
      %v2617 = vpop.permute.xlu0 %2616
      %2618 = vrot.lane.b32.xlu0 %v2594, 122
      %v2619 = vpop.permute.xlu0 %2618
      %2620 = vrot.lane.b32.xlu0 %v2595, 122
      %v2621 = vpop.permute.xlu0 %2620
      %2622 = vrot.lane.b32.xlu0 %v2596, 122
      %v2623 = vpop.permute.xlu0 %2622
      %2624 = vrot.lane.b32.xlu0 %v2597, 122
      %v2625 = vpop.permute.xlu0 %2624
      %2626 = vrot.lane.b32.xlu0 %v2598, 122
      %v2627 = vpop.permute.xlu0 %2626
      %2628 = vrot.lane.b32.xlu0 %v2599, 122
      %v2629 = vpop.permute.xlu0 %2628
      %2630 = vrot.lane.b32.xlu0 %v2604, 122
      %v2631 = vpop.permute.xlu0 %2630
      %2632 = vrot.lane.b32.xlu0 %v2605, 122
      %v2633 = vpop.permute.xlu0 %2632
      %2634 = vrot.lane.b32.xlu0 %v2606, 122
      %v2635 = vpop.permute.xlu0 %2634
      %2636 = vrot.lane.b32.xlu0 %v2607, 122
      %v2637 = vpop.permute.xlu0 %2636
      %2638 = vrot.lane.b32.xlu0 %v2608, 122
      %v2639 = vpop.permute.xlu0 %2638
      %2640 = vrot.lane.b32.xlu0 %v2609, 122
      %v2641 = vpop.permute.xlu0 %2640
      %2642 = vrot.lane.b32.xlu0 %v2610, 122
      %v2643 = vpop.permute.xlu0 %2642
      %2644 = vrot.lane.b32.xlu0 %v2611, 122
      %v2645 = vpop.permute.xlu0 %2644
      %2646 = vrot.lane.b32.xlu0 %v2613, 122
      %v2647 = vpop.permute.xlu0 %2646
      %v2648 = vsel %vm2535, %v2615, %v2617
      %v2649 = vsel %vm2535, %v2617, %v2619
      %v2650 = vsel %vm2535, %v2619, %v2621
      %v2651 = vsel %vm2535, %v2621, %v2623
      %v2652 = vsel %vm2535, %v2623, %v2625
      %v2653 = vsel %vm2535, %v2625, %v2627
      %v2654 = vsel %vm2535, %v2627, %v2629
      %v2655 = vsel %vm2535, %v2629, %v2631
      %v2656 = vsel %vm2535, %v2631, %v2633
      %v2657 = vsel %vm2535, %v2633, %v2635
      %v2658 = vsel %vm2535, %v2635, %v2637
      %v2659 = vsel %vm2535, %v2637, %v2639
      %v2660 = vsel %vm2535, %v2639, %v2641
      %v2661 = vsel %vm2535, %v2641, %v2643
      %v2662 = vsel %vm2535, %v2643, %v2645
      %v2663 = vsel %vm2535, %v2645, %v2647
      %2680 = vst [vmem:[#allocation2 + $0x380] sm:$0xf] %v2648
      %2681 = vst [vmem:[#allocation2 + $0x388] sm:$0xf] %v2649
      %2682 = vst [vmem:[#allocation2 + $0x390] sm:$0xf] %v2650
      %2683 = vst [vmem:[#allocation2 + $0x398] sm:$0xf] %v2651
      %2684 = vst [vmem:[#allocation2 + $0x3a0] sm:$0xf] %v2652
      %2685 = vst [vmem:[#allocation2 + $0x3a8] sm:$0xf] %v2653
      %2686 = vst [vmem:[#allocation2 + $0x3b0] sm:$0xf] %v2654
      %2687 = vst [vmem:[#allocation2 + $0x3b8] sm:$0xf] %v2655
      %2688 = vst [vmem:[#allocation2 + $0x3c0] sm:$0xf] %v2656
      %2689 = vst [vmem:[#allocation2 + $0x3c8] sm:$0xf] %v2657
      %2690 = vst [vmem:[#allocation2 + $0x3d0] sm:$0xf] %v2658
      %2691 = vst [vmem:[#allocation2 + $0x3d8] sm:$0xf] %v2659
      %2692 = vst [vmem:[#allocation2 + $0x3e0] sm:$0xf] %v2660
      %2693 = vst [vmem:[#allocation2 + $0x3e8] sm:$0xf] %v2661
      %2694 = vst [vmem:[#allocation2 + $0x3f0] sm:$0xf] %v2662
      %2695 = vst [vmem:[#allocation2 + $0x3f8] sm:$0xf] %v2663
      %s2697 = scalar_lea.vmem [#allocation1], 1
      %2698 = vst [vmem:[%s2697] ss:$2 sm:$0xff] %v2453
      %s2699 = scalar_lea.vmem [#allocation1], 17
      %2700 = vst [vmem:[%s2699] ss:$2 sm:$0xff] %v2454
      %s2701 = scalar_lea.vmem [#allocation1], 33
      %2702 = vst [vmem:[%s2701] ss:$2 sm:$0xff] %v2455
      %s2703 = scalar_lea.vmem [#allocation1], 49
      %2704 = vst [vmem:[%s2703] ss:$2 sm:$0xff] %v2456
      %v2705 = vld.sshfl [vmem:[#allocation1] sm:$0xff pattern:$0x75316420]
      %v2706 = vld.sshfl [vmem:[#allocation1 + $0x8] sm:$0xff pattern:$0x75316420]
      %v2707 = vld.sshfl [vmem:[#allocation1 + $0x10] sm:$0xff pattern:$0x75316420]
      %v2708 = vld.sshfl [vmem:[#allocation1 + $0x18] sm:$0xff pattern:$0x75316420]
      %v2709 = vld.sshfl [vmem:[#allocation1 + $0x20] sm:$0xff pattern:$0x75316420]
      %v2710 = vld.sshfl [vmem:[#allocation1 + $0x28] sm:$0xff pattern:$0x75316420]
      %v2711 = vld.sshfl [vmem:[#allocation1 + $0x30] sm:$0xff pattern:$0x75316420]
      %v2712 = vld.sshfl [vmem:[#allocation1 + $0x38] sm:$0xff pattern:$0x75316420]
      %2713 = vst [vmem:[%s2697] ss:$2 sm:$0xff] %v2457
      %2714 = vst [vmem:[%s2699] ss:$2 sm:$0xff] %v2458
      %2715 = vst [vmem:[%s2701] ss:$2 sm:$0xff] %v2459
      %2716 = vst [vmem:[%s2703] ss:$2 sm:$0xff] %v2460
      %v2717 = vld.sshfl [vmem:[#allocation1] sm:$0xff pattern:$0x75316420]
      %v2718 = vld.sshfl [vmem:[#allocation1 + $0x8] sm:$0xff pattern:$0x75316420]
      %v2719 = vld.sshfl [vmem:[#allocation1 + $0x10] sm:$0xff pattern:$0x75316420]
      %v2720 = vld.sshfl [vmem:[#allocation1 + $0x18] sm:$0xff pattern:$0x75316420]
      %v2721 = vld.sshfl [vmem:[#allocation1 + $0x20] sm:$0xff pattern:$0x75316420]
      %v2722 = vld.sshfl [vmem:[#allocation1 + $0x28] sm:$0xff pattern:$0x75316420]
      %v2723 = vld.sshfl [vmem:[#allocation1 + $0x30] sm:$0xff pattern:$0x75316420]
      %v2724 = vld.sshfl [vmem:[#allocation1 + $0x38] sm:$0xff pattern:$0x75316420]
      %2725 = vst [vmem:[%s2697] ss:$2 sm:$0xff] %v2461
      %v2726 = vld.sshfl [vmem:[#allocation1] sm:$0xff pattern:$0x75316420]
      %2727 = vrot.lane.b32.xlu0 %v2705, 122
      %v2728 = vpop.permute.xlu0 %2727
      %2729 = vrot.lane.b32.xlu0 %v2706, 122
      %v2730 = vpop.permute.xlu0 %2729
      %2731 = vrot.lane.b32.xlu0 %v2707, 122
      %v2732 = vpop.permute.xlu0 %2731
      %2733 = vrot.lane.b32.xlu0 %v2708, 122
      %v2734 = vpop.permute.xlu0 %2733
      %2735 = vrot.lane.b32.xlu0 %v2709, 122
      %v2736 = vpop.permute.xlu0 %2735
      %2737 = vrot.lane.b32.xlu0 %v2710, 122
      %v2738 = vpop.permute.xlu0 %2737
      %2739 = vrot.lane.b32.xlu0 %v2711, 122
      %v2740 = vpop.permute.xlu0 %2739
      %2741 = vrot.lane.b32.xlu0 %v2712, 122
      %v2742 = vpop.permute.xlu0 %2741
      %2743 = vrot.lane.b32.xlu0 %v2717, 122
      %v2744 = vpop.permute.xlu0 %2743
      %2745 = vrot.lane.b32.xlu0 %v2718, 122
      %v2746 = vpop.permute.xlu0 %2745
      %2747 = vrot.lane.b32.xlu0 %v2719, 122
      %v2748 = vpop.permute.xlu0 %2747
      %2749 = vrot.lane.b32.xlu0 %v2720, 122
      %v2750 = vpop.permute.xlu0 %2749
      %2751 = vrot.lane.b32.xlu0 %v2721, 122
      %v2752 = vpop.permute.xlu0 %2751
      %2753 = vrot.lane.b32.xlu0 %v2722, 122
      %v2754 = vpop.permute.xlu0 %2753
      %2755 = vrot.lane.b32.xlu0 %v2723, 122
      %v2756 = vpop.permute.xlu0 %2755
      %2757 = vrot.lane.b32.xlu0 %v2724, 122
      %v2758 = vpop.permute.xlu0 %2757
      %2759 = vrot.lane.b32.xlu0 %v2726, 122
      %v2760 = vpop.permute.xlu0 %2759
      %v2761 = vsel %vm2535, %v2728, %v2730
      %v2762 = vsel %vm2535, %v2730, %v2732
      %v2763 = vsel %vm2535, %v2732, %v2734
      %v2764 = vsel %vm2535, %v2734, %v2736
      %v2765 = vsel %vm2535, %v2736, %v2738
      %v2766 = vsel %vm2535, %v2738, %v2740
      %v2767 = vsel %vm2535, %v2740, %v2742
      %v2768 = vsel %vm2535, %v2742, %v2744
      %v2769 = vsel %vm2535, %v2744, %v2746
      %v2770 = vsel %vm2535, %v2746, %v2748
      %v2771 = vsel %vm2535, %v2748, %v2750
      %v2772 = vsel %vm2535, %v2750, %v2752
      %v2773 = vsel %vm2535, %v2752, %v2754
      %v2774 = vsel %vm2535, %v2754, %v2756
      %v2775 = vsel %vm2535, %v2756, %v2758
      %v2776 = vsel %vm2535, %v2758, %v2760
      %2793 = vst [vmem:[#allocation2 + $0x400] sm:$0xf0] %v2761
      %2794 = vst [vmem:[#allocation2 + $0x408] sm:$0xf0] %v2762
      %2795 = vst [vmem:[#allocation2 + $0x410] sm:$0xf0] %v2763
      %2796 = vst [vmem:[#allocation2 + $0x418] sm:$0xf0] %v2764
      %2797 = vst [vmem:[#allocation2 + $0x420] sm:$0xf0] %v2765
      %2798 = vst [vmem:[#allocation2 + $0x428] sm:$0xf0] %v2766
      %2799 = vst [vmem:[#allocation2 + $0x430] sm:$0xf0] %v2767
      %2800 = vst [vmem:[#allocation2 + $0x438] sm:$0xf0] %v2768
      %2801 = vst [vmem:[#allocation2 + $0x440] sm:$0xf0] %v2769
      %2802 = vst [vmem:[#allocation2 + $0x448] sm:$0xf0] %v2770
      %2803 = vst [vmem:[#allocation2 + $0x450] sm:$0xf0] %v2771
      %2804 = vst [vmem:[#allocation2 + $0x458] sm:$0xf0] %v2772
      %2805 = vst [vmem:[#allocation2 + $0x460] sm:$0xf0] %v2773
      %2806 = vst [vmem:[#allocation2 + $0x468] sm:$0xf0] %v2774
      %2807 = vst [vmem:[#allocation2 + $0x470] sm:$0xf0] %v2775
      %2808 = vst [vmem:[#allocation2 + $0x478] sm:$0xf0] %v2776
      %v2809 = vld [vmem:[%s138] sm:$0xff]
      %v2810 = vld [vmem:[%s138 + $0x8] sm:$0xff]
      %v2811 = vld [vmem:[%s138 + $0x10] sm:$0xff]
      %v2812 = vld [vmem:[%s138 + $0x18] sm:$0xff]
      %v2813 = vld [vmem:[%s138 + $0x20] sm:$0xff]
      %v2814 = vld [vmem:[%s138 + $0x28] sm:$0xff]
      %v2815 = vld [vmem:[%s138 + $0x30] sm:$0xff]
      %v2816 = vld [vmem:[%s138 + $0x38] sm:$0xff]
      %v2817 = vld [vmem:[%s138 + $0x40] sm:$0xff]
      %v2818 = vld [vmem:[%s138 + $0x48] sm:$0xff]
      %v2819 = vld [vmem:[%s138 + $0x50] sm:$0xff]
      %v2820 = vld [vmem:[%s138 + $0x58] sm:$0xff]
      %v2821 = vld [vmem:[%s138 + $0x60] sm:$0xf]
      %2831 = vst [vmem:[#allocation1] ss:$2 sm:$0xff] %v2809
      %s2832 = scalar_lea.vmem [#allocation1], 16
      %2833 = vst [vmem:[%s2832] ss:$2 sm:$0xff] %v2810
      %s2834 = scalar_lea.vmem [#allocation1], 32
      %2835 = vst [vmem:[%s2834] ss:$2 sm:$0xff] %v2811
      %s2836 = scalar_lea.vmem [#allocation1], 48
      %2837 = vst [vmem:[%s2836] ss:$2 sm:$0xff] %v2812
      %v2838 = vld.sshfl [vmem:[#allocation1] sm:$0xff pattern:$0x75316420]
      %v2839 = vld.sshfl [vmem:[#allocation1 + $0x8] sm:$0xff pattern:$0x75316420]
      %v2840 = vld.sshfl [vmem:[#allocation1 + $0x10] sm:$0xff pattern:$0x75316420]
      %v2841 = vld.sshfl [vmem:[#allocation1 + $0x18] sm:$0xff pattern:$0x75316420]
      %v2842 = vld.sshfl [vmem:[#allocation1 + $0x20] sm:$0xff pattern:$0x75316420]
      %v2843 = vld.sshfl [vmem:[#allocation1 + $0x28] sm:$0xff pattern:$0x75316420]
      %v2844 = vld.sshfl [vmem:[#allocation1 + $0x30] sm:$0xff pattern:$0x75316420]
      %v2845 = vld.sshfl [vmem:[#allocation1 + $0x38] sm:$0xff pattern:$0x75316420]
      %2846 = vst [vmem:[#allocation1] ss:$2 sm:$0xff] %v2813
      %2847 = vst [vmem:[%s2832] ss:$2 sm:$0xff] %v2814
      %2848 = vst [vmem:[%s2834] ss:$2 sm:$0xff] %v2815
      %2849 = vst [vmem:[%s2836] ss:$2 sm:$0xff] %v2816
      %v2850 = vld.sshfl [vmem:[#allocation1] sm:$0xff pattern:$0x75316420]
      %v2851 = vld.sshfl [vmem:[#allocation1 + $0x8] sm:$0xff pattern:$0x75316420]
      %v2852 = vld.sshfl [vmem:[#allocation1 + $0x10] sm:$0xff pattern:$0x75316420]
      %v2853 = vld.sshfl [vmem:[#allocation1 + $0x18] sm:$0xff pattern:$0x75316420]
      %v2854 = vld.sshfl [vmem:[#allocation1 + $0x20] sm:$0xff pattern:$0x75316420]
      %v2855 = vld.sshfl [vmem:[#allocation1 + $0x28] sm:$0xff pattern:$0x75316420]
      %v2856 = vld.sshfl [vmem:[#allocation1 + $0x30] sm:$0xff pattern:$0x75316420]
      %v2857 = vld.sshfl [vmem:[#allocation1 + $0x38] sm:$0xff pattern:$0x75316420]
      %2858 = vst [vmem:[#allocation1] ss:$2 sm:$0xff] %v2817
      %v2859 = vld.sshfl [vmem:[#allocation1] sm:$0xff pattern:$0x75316420]
      %2860 = vrot.lane.b32.xlu0 %v2838, 120
      %v2861 = vpop.permute.xlu0 %2860
      %2862 = vrot.lane.b32.xlu0 %v2839, 120
      %v2863 = vpop.permute.xlu0 %2862
      %2864 = vrot.lane.b32.xlu0 %v2840, 120
      %v2865 = vpop.permute.xlu0 %2864
      %2866 = vrot.lane.b32.xlu0 %v2841, 120
      %v2867 = vpop.permute.xlu0 %2866
      %2868 = vrot.lane.b32.xlu0 %v2842, 120
      %v2869 = vpop.permute.xlu0 %2868
      %2870 = vrot.lane.b32.xlu0 %v2843, 120
      %v2871 = vpop.permute.xlu0 %2870
      %2872 = vrot.lane.b32.xlu0 %v2844, 120
      %v2873 = vpop.permute.xlu0 %2872
      %2874 = vrot.lane.b32.xlu0 %v2845, 120
      %v2875 = vpop.permute.xlu0 %2874
      %2876 = vrot.lane.b32.xlu0 %v2850, 120
      %v2877 = vpop.permute.xlu0 %2876
      %2878 = vrot.lane.b32.xlu0 %v2851, 120
      %v2879 = vpop.permute.xlu0 %2878
      %2880 = vrot.lane.b32.xlu0 %v2852, 120
      %v2881 = vpop.permute.xlu0 %2880
      %2882 = vrot.lane.b32.xlu0 %v2853, 120
      %v2883 = vpop.permute.xlu0 %2882
      %2884 = vrot.lane.b32.xlu0 %v2854, 120
      %v2885 = vpop.permute.xlu0 %2884
      %2886 = vrot.lane.b32.xlu0 %v2855, 120
      %v2887 = vpop.permute.xlu0 %2886
      %2888 = vrot.lane.b32.xlu0 %v2856, 120
      %v2889 = vpop.permute.xlu0 %2888
      %2890 = vrot.lane.b32.xlu0 %v2857, 120
      %v2891 = vpop.permute.xlu0 %2890
      %2892 = vrot.lane.b32.xlu0 %v2859, 120
      %v2893 = vpop.permute.xlu0 %2892
      %vm2894 = vcmask 982016
      %v2895 = vsel %vm2894, %v2861, %v2863
      %v2896 = vsel %vm2894, %v2863, %v2865
      %v2897 = vsel %vm2894, %v2865, %v2867
      %v2898 = vsel %vm2894, %v2867, %v2869
      %v2899 = vsel %vm2894, %v2869, %v2871
      %v2900 = vsel %vm2894, %v2871, %v2873
      %v2901 = vsel %vm2894, %v2873, %v2875
      %v2902 = vsel %vm2894, %v2875, %v2877
      %v2903 = vsel %vm2894, %v2877, %v2879
      %v2904 = vsel %vm2894, %v2879, %v2881
      %v2905 = vsel %vm2894, %v2881, %v2883
      %v2906 = vsel %vm2894, %v2883, %v2885
      %v2907 = vsel %vm2894, %v2885, %v2887
      %v2908 = vsel %vm2894, %v2887, %v2889
      %v2909 = vsel %vm2894, %v2889, %v2891
      %v2910 = vsel %vm2894, %v2891, %v2893
      %2927 = vst [vmem:[#allocation2 + $0x500] sm:$0xf] %v2895
      %2928 = vst [vmem:[#allocation2 + $0x508] sm:$0xf] %v2896
      %2929 = vst [vmem:[#allocation2 + $0x510] sm:$0xf] %v2897
      %2930 = vst [vmem:[#allocation2 + $0x518] sm:$0xf] %v2898
      %2931 = vst [vmem:[#allocation2 + $0x520] sm:$0xf] %v2899
      %2932 = vst [vmem:[#allocation2 + $0x528] sm:$0xf] %v2900
      %2933 = vst [vmem:[#allocation2 + $0x530] sm:$0xf] %v2901
      %2934 = vst [vmem:[#allocation2 + $0x538] sm:$0xf] %v2902
      %2935 = vst [vmem:[#allocation2 + $0x540] sm:$0xf] %v2903
      %2936 = vst [vmem:[#allocation2 + $0x548] sm:$0xf] %v2904
      %2937 = vst [vmem:[#allocation2 + $0x550] sm:$0xf] %v2905
      %2938 = vst [vmem:[#allocation2 + $0x558] sm:$0xf] %v2906
      %2939 = vst [vmem:[#allocation2 + $0x560] sm:$0xf] %v2907
      %2940 = vst [vmem:[#allocation2 + $0x568] sm:$0xf] %v2908
      %2941 = vst [vmem:[#allocation2 + $0x570] sm:$0xf] %v2909
      %2942 = vst [vmem:[#allocation2 + $0x578] sm:$0xf] %v2910
      %s2945 = scalar_lea.vmem [#allocation1], 1
      %2946 = vst [vmem:[%s2945] ss:$2 sm:$0xff] %v2811
      %s2947 = scalar_lea.vmem [#allocation1], 17
      %2948 = vst [vmem:[%s2947] ss:$2 sm:$0xff] %v2812
      %s2949 = scalar_lea.vmem [#allocation1], 33
      %2950 = vst [vmem:[%s2949] ss:$2 sm:$0xff] %v2813
      %s2951 = scalar_lea.vmem [#allocation1], 49
      %2952 = vst [vmem:[%s2951] ss:$2 sm:$0xff] %v2814
      %v2953 = vld.sshfl [vmem:[#allocation1] sm:$0xff pattern:$0x75316420]
      %v2954 = vld.sshfl [vmem:[#allocation1 + $0x8] sm:$0xff pattern:$0x75316420]
      %v2955 = vld.sshfl [vmem:[#allocation1 + $0x10] sm:$0xff pattern:$0x75316420]
      %v2956 = vld.sshfl [vmem:[#allocation1 + $0x18] sm:$0xff pattern:$0x75316420]
      %v2957 = vld.sshfl [vmem:[#allocation1 + $0x20] sm:$0xff pattern:$0x75316420]
      %v2958 = vld.sshfl [vmem:[#allocation1 + $0x28] sm:$0xff pattern:$0x75316420]
      %v2959 = vld.sshfl [vmem:[#allocation1 + $0x30] sm:$0xff pattern:$0x75316420]
      %v2960 = vld.sshfl [vmem:[#allocation1 + $0x38] sm:$0xff pattern:$0x75316420]
      %2961 = vst [vmem:[%s2945] ss:$2 sm:$0xff] %v2815
      %2962 = vst [vmem:[%s2947] ss:$2 sm:$0xff] %v2816
      %2963 = vst [vmem:[%s2949] ss:$2 sm:$0xff] %v2817
      %2964 = vst [vmem:[%s2951] ss:$2 sm:$0xff] %v2818
      %v2965 = vld.sshfl [vmem:[#allocation1] sm:$0xff pattern:$0x75316420]
      %v2966 = vld.sshfl [vmem:[#allocation1 + $0x8] sm:$0xff pattern:$0x75316420]
      %v2967 = vld.sshfl [vmem:[#allocation1 + $0x10] sm:$0xff pattern:$0x75316420]
      %v2968 = vld.sshfl [vmem:[#allocation1 + $0x18] sm:$0xff pattern:$0x75316420]
      %v2969 = vld.sshfl [vmem:[#allocation1 + $0x20] sm:$0xff pattern:$0x75316420]
      %v2970 = vld.sshfl [vmem:[#allocation1 + $0x28] sm:$0xff pattern:$0x75316420]
      %v2971 = vld.sshfl [vmem:[#allocation1 + $0x30] sm:$0xff pattern:$0x75316420]
      %v2972 = vld.sshfl [vmem:[#allocation1 + $0x38] sm:$0xff pattern:$0x75316420]
      %2973 = vst [vmem:[%s2945] ss:$2 sm:$0xff] %v2819
      %v2974 = vld.sshfl [vmem:[#allocation1] sm:$0xff pattern:$0x75316420]
      %2975 = vrot.lane.b32.xlu0 %v2953, 120
      %v2976 = vpop.permute.xlu0 %2975
      %2977 = vrot.lane.b32.xlu0 %v2954, 120
      %v2978 = vpop.permute.xlu0 %2977
      %2979 = vrot.lane.b32.xlu0 %v2955, 120
      %v2980 = vpop.permute.xlu0 %2979
      %2981 = vrot.lane.b32.xlu0 %v2956, 120
      %v2982 = vpop.permute.xlu0 %2981
      %2983 = vrot.lane.b32.xlu0 %v2957, 120
      %v2984 = vpop.permute.xlu0 %2983
      %2985 = vrot.lane.b32.xlu0 %v2958, 120
      %v2986 = vpop.permute.xlu0 %2985
      %2987 = vrot.lane.b32.xlu0 %v2959, 120
      %v2988 = vpop.permute.xlu0 %2987
      %2989 = vrot.lane.b32.xlu0 %v2960, 120
      %v2990 = vpop.permute.xlu0 %2989
      %2991 = vrot.lane.b32.xlu0 %v2965, 120
      %v2992 = vpop.permute.xlu0 %2991
      %2993 = vrot.lane.b32.xlu0 %v2966, 120
      %v2994 = vpop.permute.xlu0 %2993
      %2995 = vrot.lane.b32.xlu0 %v2967, 120
      %v2996 = vpop.permute.xlu0 %2995
      %2997 = vrot.lane.b32.xlu0 %v2968, 120
      %v2998 = vpop.permute.xlu0 %2997
      %2999 = vrot.lane.b32.xlu0 %v2969, 120
      %v3000 = vpop.permute.xlu0 %2999
      %3001 = vrot.lane.b32.xlu0 %v2970, 120
      %v3002 = vpop.permute.xlu0 %3001
      %3003 = vrot.lane.b32.xlu0 %v2971, 120
      %v3004 = vpop.permute.xlu0 %3003
      %3005 = vrot.lane.b32.xlu0 %v2972, 120
      %v3006 = vpop.permute.xlu0 %3005
      %3007 = vrot.lane.b32.xlu0 %v2974, 120
      %v3008 = vpop.permute.xlu0 %3007
      %v3009 = vsel %vm2894, %v2976, %v2978
      %v3010 = vsel %vm2894, %v2978, %v2980
      %v3011 = vsel %vm2894, %v2980, %v2982
      %v3012 = vsel %vm2894, %v2982, %v2984
      %v3013 = vsel %vm2894, %v2984, %v2986
      %v3014 = vsel %vm2894, %v2986, %v2988
      %v3015 = vsel %vm2894, %v2988, %v2990
      %v3016 = vsel %vm2894, %v2990, %v2992
      %v3017 = vsel %vm2894, %v2992, %v2994
      %v3018 = vsel %vm2894, %v2994, %v2996
      %v3019 = vsel %vm2894, %v2996, %v2998
      %v3020 = vsel %vm2894, %v2998, %v3000
      %v3021 = vsel %vm2894, %v3000, %v3002
      %v3022 = vsel %vm2894, %v3002, %v3004
      %v3023 = vsel %vm2894, %v3004, %v3006
      %v3024 = vsel %vm2894, %v3006, %v3008
      %3041 = vst [vmem:[#allocation2 + $0x580] sm:$0xf0] %v3009
      %3042 = vst [vmem:[#allocation2 + $0x588] sm:$0xf0] %v3010
      %3043 = vst [vmem:[#allocation2 + $0x590] sm:$0xf0] %v3011
      %3044 = vst [vmem:[#allocation2 + $0x598] sm:$0xf0] %v3012
      %3045 = vst [vmem:[#allocation2 + $0x5a0] sm:$0xf0] %v3013
      %3046 = vst [vmem:[#allocation2 + $0x5a8] sm:$0xf0] %v3014
      %3047 = vst [vmem:[#allocation2 + $0x5b0] sm:$0xf0] %v3015
      %3048 = vst [vmem:[#allocation2 + $0x5b8] sm:$0xf0] %v3016
      %3049 = vst [vmem:[#allocation2 + $0x5c0] sm:$0xf0] %v3017
      %3050 = vst [vmem:[#allocation2 + $0x5c8] sm:$0xf0] %v3018
      %3051 = vst [vmem:[#allocation2 + $0x5d0] sm:$0xf0] %v3019
      %3052 = vst [vmem:[#allocation2 + $0x5d8] sm:$0xf0] %v3020
      %3053 = vst [vmem:[#allocation2 + $0x5e0] sm:$0xf0] %v3021
      %3054 = vst [vmem:[#allocation2 + $0x5e8] sm:$0xf0] %v3022
      %3055 = vst [vmem:[#allocation2 + $0x5f0] sm:$0xf0] %v3023
      %3056 = vst [vmem:[#allocation2 + $0x5f8] sm:$0xf0] %v3024
      %3059 = vst [vmem:[#allocation1] ss:$2 sm:$0xff] %v2813
      %s3060 = scalar_lea.vmem [#allocation1], 16
      %3061 = vst [vmem:[%s3060] ss:$2 sm:$0xff] %v2814
      %s3062 = scalar_lea.vmem [#allocation1], 32
      %3063 = vst [vmem:[%s3062] ss:$2 sm:$0xff] %v2815
      %s3064 = scalar_lea.vmem [#allocation1], 48
      %3065 = vst [vmem:[%s3064] ss:$2 sm:$0xff] %v2816
      %v3066 = vld.sshfl [vmem:[#allocation1] sm:$0xff pattern:$0x75316420]
      %v3067 = vld.sshfl [vmem:[#allocation1 + $0x8] sm:$0xff pattern:$0x75316420]
      %v3068 = vld.sshfl [vmem:[#allocation1 + $0x10] sm:$0xff pattern:$0x75316420]
      %v3069 = vld.sshfl [vmem:[#allocation1 + $0x18] sm:$0xff pattern:$0x75316420]
      %v3070 = vld.sshfl [vmem:[#allocation1 + $0x20] sm:$0xff pattern:$0x75316420]
      %v3071 = vld.sshfl [vmem:[#allocation1 + $0x28] sm:$0xff pattern:$0x75316420]
      %v3072 = vld.sshfl [vmem:[#allocation1 + $0x30] sm:$0xff pattern:$0x75316420]
      %v3073 = vld.sshfl [vmem:[#allocation1 + $0x38] sm:$0xff pattern:$0x75316420]
      %3074 = vst [vmem:[#allocation1] ss:$2 sm:$0xff] %v2817
      %3075 = vst [vmem:[%s3060] ss:$2 sm:$0xff] %v2818
      %3076 = vst [vmem:[%s3062] ss:$2 sm:$0xff] %v2819
      %3077 = vst [vmem:[%s3064] ss:$2 sm:$0xff] %v2820
      %v3078 = vld.sshfl [vmem:[#allocation1] sm:$0xff pattern:$0x75316420]
      %v3079 = vld.sshfl [vmem:[#allocation1 + $0x8] sm:$0xff pattern:$0x75316420]
      %v3080 = vld.sshfl [vmem:[#allocation1 + $0x10] sm:$0xff pattern:$0x75316420]
      %v3081 = vld.sshfl [vmem:[#allocation1 + $0x18] sm:$0xff pattern:$0x75316420]
      %v3082 = vld.sshfl [vmem:[#allocation1 + $0x20] sm:$0xff pattern:$0x75316420]
      %v3083 = vld.sshfl [vmem:[#allocation1 + $0x28] sm:$0xff pattern:$0x75316420]
      %v3084 = vld.sshfl [vmem:[#allocation1 + $0x30] sm:$0xff pattern:$0x75316420]
      %v3085 = vld.sshfl [vmem:[#allocation1 + $0x38] sm:$0xff pattern:$0x75316420]
      %3086 = vst [vmem:[#allocation1] ss:$2 sm:$0xff] %v2821
      %v3087 = vld.sshfl [vmem:[#allocation1] sm:$0xff pattern:$0x75316420]
      %3088 = vrot.lane.b32.xlu0 %v3066, 120
      %v3089 = vpop.permute.xlu0 %3088
      %3090 = vrot.lane.b32.xlu0 %v3067, 120
      %v3091 = vpop.permute.xlu0 %3090
      %3092 = vrot.lane.b32.xlu0 %v3068, 120
      %v3093 = vpop.permute.xlu0 %3092
      %3094 = vrot.lane.b32.xlu0 %v3069, 120
      %v3095 = vpop.permute.xlu0 %3094
      %3096 = vrot.lane.b32.xlu0 %v3070, 120
      %v3097 = vpop.permute.xlu0 %3096
      %3098 = vrot.lane.b32.xlu0 %v3071, 120
      %v3099 = vpop.permute.xlu0 %3098
      %3100 = vrot.lane.b32.xlu0 %v3072, 120
      %v3101 = vpop.permute.xlu0 %3100
      %3102 = vrot.lane.b32.xlu0 %v3073, 120
      %v3103 = vpop.permute.xlu0 %3102
      %3104 = vrot.lane.b32.xlu0 %v3078, 120
      %v3105 = vpop.permute.xlu0 %3104
      %3106 = vrot.lane.b32.xlu0 %v3079, 120
      %v3107 = vpop.permute.xlu0 %3106
      %3108 = vrot.lane.b32.xlu0 %v3080, 120
      %v3109 = vpop.permute.xlu0 %3108
      %3110 = vrot.lane.b32.xlu0 %v3081, 120
      %v3111 = vpop.permute.xlu0 %3110
      %3112 = vrot.lane.b32.xlu0 %v3082, 120
      %v3113 = vpop.permute.xlu0 %3112
      %3114 = vrot.lane.b32.xlu0 %v3083, 120
      %v3115 = vpop.permute.xlu0 %3114
      %3116 = vrot.lane.b32.xlu0 %v3084, 120
      %v3117 = vpop.permute.xlu0 %3116
      %3118 = vrot.lane.b32.xlu0 %v3085, 120
      %v3119 = vpop.permute.xlu0 %3118
      %3120 = vrot.lane.b32.xlu0 %v3087, 120
      %v3121 = vpop.permute.xlu0 %3120
      %v3122 = vsel %vm2894, %v3089, %v3091
      %v3123 = vsel %vm2894, %v3091, %v3093
      %v3124 = vsel %vm2894, %v3093, %v3095
      %v3125 = vsel %vm2894, %v3095, %v3097
      %v3126 = vsel %vm2894, %v3097, %v3099
      %v3127 = vsel %vm2894, %v3099, %v3101
      %v3128 = vsel %vm2894, %v3101, %v3103
      %v3129 = vsel %vm2894, %v3103, %v3105
      %v3130 = vsel %vm2894, %v3105, %v3107
      %v3131 = vsel %vm2894, %v3107, %v3109
      %v3132 = vsel %vm2894, %v3109, %v3111
      %v3133 = vsel %vm2894, %v3111, %v3113
      %v3134 = vsel %vm2894, %v3113, %v3115
      %v3135 = vsel %vm2894, %v3115, %v3117
      %v3136 = vsel %vm2894, %v3117, %v3119
      %v3137 = vsel %vm2894, %v3119, %v3121
      %3154 = vst [vmem:[#allocation2 + $0x680] sm:$0xf] %v3122
      %3155 = vst [vmem:[#allocation2 + $0x688] sm:$0xf] %v3123
      %3156 = vst [vmem:[#allocation2 + $0x690] sm:$0xf] %v3124
      %3157 = vst [vmem:[#allocation2 + $0x698] sm:$0xf] %v3125
      %3158 = vst [vmem:[#allocation2 + $0x6a0] sm:$0xf] %v3126
      %3159 = vst [vmem:[#allocation2 + $0x6a8] sm:$0xf] %v3127
      %3160 = vst [vmem:[#allocation2 + $0x6b0] sm:$0xf] %v3128
      %3161 = vst [vmem:[#allocation2 + $0x6b8] sm:$0xf] %v3129
      %3162 = vst [vmem:[#allocation2 + $0x6c0] sm:$0xf] %v3130
      %3163 = vst [vmem:[#allocation2 + $0x6c8] sm:$0xf] %v3131
      %3164 = vst [vmem:[#allocation2 + $0x6d0] sm:$0xf] %v3132
      %3165 = vst [vmem:[#allocation2 + $0x6d8] sm:$0xf] %v3133
      %3166 = vst [vmem:[#allocation2 + $0x6e0] sm:$0xf] %v3134
      %3167 = vst [vmem:[#allocation2 + $0x6e8] sm:$0xf] %v3135
      %3168 = vst [vmem:[#allocation2 + $0x6f0] sm:$0xf] %v3136
      %3169 = vst [vmem:[#allocation2 + $0x6f8] sm:$0xf] %v3137
      %v3170 = vld [vmem:[%s1] sm:$0xf]
      %v3171 = vld [vmem:[#allocation2] sm:$0xff]
      %v3172 = vld [vmem:[#allocation2 + $0x8] sm:$0xff]
      %v3173 = vld [vmem:[#allocation2 + $0x10] sm:$0xff]
      %v3174 = vld [vmem:[#allocation2 + $0x18] sm:$0xff]
      %v3175 = vld [vmem:[#allocation2 + $0x20] sm:$0xff]
      %v3176 = vld [vmem:[#allocation2 + $0x28] sm:$0xff]
      %v3177 = vld [vmem:[#allocation2 + $0x30] sm:$0xff]
      %v3178 = vld [vmem:[#allocation2 + $0x38] sm:$0xff]
      %v3179 = vld [vmem:[#allocation2 + $0x40] sm:$0xff]
      %v3180 = vld [vmem:[#allocation2 + $0x48] sm:$0xff]
      %v3181 = vld [vmem:[#allocation2 + $0x50] sm:$0xff]
      %v3182 = vld [vmem:[#allocation2 + $0x58] sm:$0xff]
      %v3183 = vld [vmem:[#allocation2 + $0x60] sm:$0xff]
      %v3184 = vld [vmem:[#allocation2 + $0x68] sm:$0xff]
      %v3185 = vld [vmem:[#allocation2 + $0x70] sm:$0xff]
      %v3186 = vld [vmem:[#allocation2 + $0x78] sm:$0xff]
      %v3187 = vld [vmem:[#allocation2 + $0x80] sm:$0xff]
      %v3188 = vld [vmem:[#allocation2 + $0x88] sm:$0xff]
      %v3189 = vld [vmem:[#allocation2 + $0x90] sm:$0xff]
      %v3190 = vld [vmem:[#allocation2 + $0x98] sm:$0xff]
      %v3191 = vld [vmem:[#allocation2 + $0xa0] sm:$0xff]
      %v3192 = vld [vmem:[#allocation2 + $0xa8] sm:$0xff]
      %v3193 = vld [vmem:[#allocation2 + $0xb0] sm:$0xff]
      %v3194 = vld [vmem:[#allocation2 + $0xb8] sm:$0xff]
      %v3195 = vld [vmem:[#allocation2 + $0xc0] sm:$0xff]
      %v3196 = vld [vmem:[#allocation2 + $0xc8] sm:$0xff]
      %v3197 = vld [vmem:[#allocation2 + $0xd0] sm:$0xff]
      %v3198 = vld [vmem:[#allocation2 + $0xd8] sm:$0xff]
      %v3199 = vld [vmem:[#allocation2 + $0xe0] sm:$0xff]
      %v3200 = vld [vmem:[#allocation2 + $0xe8] sm:$0xff]
      %v3201 = vld [vmem:[#allocation2 + $0xf0] sm:$0xff]
      %v3202 = vld [vmem:[#allocation2 + $0xf8] sm:$0xff]
      %v3203 = vld [vmem:[#allocation2 + $0x100] sm:$0xff]
      %v3204 = vld [vmem:[#allocation2 + $0x108] sm:$0xff]
      %v3205 = vld [vmem:[#allocation2 + $0x110] sm:$0xff]
      %v3206 = vld [vmem:[#allocation2 + $0x118] sm:$0xff]
      %v3207 = vld [vmem:[#allocation2 + $0x120] sm:$0xff]
      %v3208 = vld [vmem:[#allocation2 + $0x128] sm:$0xff]
      %v3209 = vld [vmem:[#allocation2 + $0x130] sm:$0xff]
      %v3210 = vld [vmem:[#allocation2 + $0x138] sm:$0xff]
      %v3211 = vld [vmem:[#allocation2 + $0x140] sm:$0xff]
      %v3212 = vld [vmem:[#allocation2 + $0x148] sm:$0xff]
      %v3213 = vld [vmem:[#allocation2 + $0x150] sm:$0xff]
      %v3214 = vld [vmem:[#allocation2 + $0x158] sm:$0xff]
      %v3215 = vld [vmem:[#allocation2 + $0x160] sm:$0xff]
      %v3216 = vld [vmem:[#allocation2 + $0x168] sm:$0xff]
      %v3217 = vld [vmem:[#allocation2 + $0x170] sm:$0xff]
      %v3218 = vld [vmem:[#allocation2 + $0x178] sm:$0xff]
      %v3219 = vld [vmem:[#allocation2 + $0x180] sm:$0xff]
      %v3220 = vld [vmem:[#allocation2 + $0x188] sm:$0xff]
      %v3221 = vld [vmem:[#allocation2 + $0x190] sm:$0xff]
      %v3222 = vld [vmem:[#allocation2 + $0x198] sm:$0xff]
      %v3223 = vld [vmem:[#allocation2 + $0x1a0] sm:$0xff]
      %v3224 = vld [vmem:[#allocation2 + $0x1a8] sm:$0xff]
      %v3225 = vld [vmem:[#allocation2 + $0x1b0] sm:$0xff]
      %v3226 = vld [vmem:[#allocation2 + $0x1b8] sm:$0xff]
      %v3227 = vld [vmem:[#allocation2 + $0x1c0] sm:$0xff]
      %v3228 = vld [vmem:[#allocation2 + $0x1c8] sm:$0xff]
      %v3229 = vld [vmem:[#allocation2 + $0x1d0] sm:$0xff]
      %v3230 = vld [vmem:[#allocation2 + $0x1d8] sm:$0xff]
      %v3231 = vld [vmem:[#allocation2 + $0x1e0] sm:$0xff]
      %v3232 = vld [vmem:[#allocation2 + $0x1e8] sm:$0xff]
      %v3233 = vld [vmem:[#allocation2 + $0x1f0] sm:$0xff]
      %v3234 = vld [vmem:[#allocation2 + $0x1f8] sm:$0xff]
      %v3235 = vld [vmem:[#allocation2 + $0x200] sm:$0xff]
      %v3236 = vld [vmem:[#allocation2 + $0x208] sm:$0xff]
      %v3237 = vld [vmem:[#allocation2 + $0x210] sm:$0xff]
      %v3238 = vld [vmem:[#allocation2 + $0x218] sm:$0xff]
      %v3239 = vld [vmem:[#allocation2 + $0x220] sm:$0xff]
      %v3240 = vld [vmem:[#allocation2 + $0x228] sm:$0xff]
      %v3241 = vld [vmem:[#allocation2 + $0x230] sm:$0xff]
      %v3242 = vld [vmem:[#allocation2 + $0x238] sm:$0xff]
      %v3243 = vld [vmem:[#allocation2 + $0x240] sm:$0xff]
      %v3244 = vld [vmem:[#allocation2 + $0x248] sm:$0xff]
      %v3245 = vld [vmem:[#allocation2 + $0x250] sm:$0xff]
      %v3246 = vld [vmem:[#allocation2 + $0x258] sm:$0xff]
      %v3247 = vld [vmem:[#allocation2 + $0x260] sm:$0xff]
      %v3248 = vld [vmem:[#allocation2 + $0x268] sm:$0xff]
      %v3249 = vld [vmem:[#allocation2 + $0x270] sm:$0xff]
      %v3250 = vld [vmem:[#allocation2 + $0x278] sm:$0xff]
      %v3251 = vld [vmem:[#allocation2 + $0x280] sm:$0xff]
      %v3252 = vld [vmem:[#allocation2 + $0x288] sm:$0xff]
      %v3253 = vld [vmem:[#allocation2 + $0x290] sm:$0xff]
      %v3254 = vld [vmem:[#allocation2 + $0x298] sm:$0xff]
      %v3255 = vld [vmem:[#allocation2 + $0x2a0] sm:$0xff]
      %v3256 = vld [vmem:[#allocation2 + $0x2a8] sm:$0xff]
      %v3257 = vld [vmem:[#allocation2 + $0x2b0] sm:$0xff]
      %v3258 = vld [vmem:[#allocation2 + $0x2b8] sm:$0xff]
      %v3259 = vld [vmem:[#allocation2 + $0x2c0] sm:$0xff]
      %v3260 = vld [vmem:[#allocation2 + $0x2c8] sm:$0xff]
      %v3261 = vld [vmem:[#allocation2 + $0x2d0] sm:$0xff]
      %v3262 = vld [vmem:[#allocation2 + $0x2d8] sm:$0xff]
      %v3263 = vld [vmem:[#allocation2 + $0x2e0] sm:$0xff]
      %v3264 = vld [vmem:[#allocation2 + $0x2e8] sm:$0xff]
      %v3265 = vld [vmem:[#allocation2 + $0x2f0] sm:$0xff]
      %v3266 = vld [vmem:[#allocation2 + $0x2f8] sm:$0xff]
      %v3267 = vld [vmem:[#allocation2 + $0x300] sm:$0xff]
      %v3268 = vld [vmem:[#allocation2 + $0x308] sm:$0xff]
      %v3269 = vld [vmem:[#allocation2 + $0x310] sm:$0xff]
      %v3270 = vld [vmem:[#allocation2 + $0x318] sm:$0xff]
      %v3271 = vld [vmem:[#allocation2 + $0x320] sm:$0xff]
      %v3272 = vld [vmem:[#allocation2 + $0x328] sm:$0xff]
      %v3273 = vld [vmem:[#allocation2 + $0x330] sm:$0xff]
      %v3274 = vld [vmem:[#allocation2 + $0x338] sm:$0xff]
      %v3275 = vld [vmem:[#allocation2 + $0x340] sm:$0xff]
      %v3276 = vld [vmem:[#allocation2 + $0x348] sm:$0xff]
      %v3277 = vld [vmem:[#allocation2 + $0x350] sm:$0xff]
      %v3278 = vld [vmem:[#allocation2 + $0x358] sm:$0xff]
      %v3279 = vld [vmem:[#allocation2 + $0x360] sm:$0xff]
      %v3280 = vld [vmem:[#allocation2 + $0x368] sm:$0xff]
      %v3281 = vld [vmem:[#allocation2 + $0x370] sm:$0xff]
      %v3282 = vld [vmem:[#allocation2 + $0x378] sm:$0xff]
      %v3283 = vld [vmem:[#allocation2 + $0x380] sm:$0xff]
      %v3284 = vld [vmem:[#allocation2 + $0x388] sm:$0xff]
      %v3285 = vld [vmem:[#allocation2 + $0x390] sm:$0xff]
      %v3286 = vld [vmem:[#allocation2 + $0x398] sm:$0xff]
      %v3287 = vld [vmem:[#allocation2 + $0x3a0] sm:$0xff]
      %v3288 = vld [vmem:[#allocation2 + $0x3a8] sm:$0xff]
      %v3289 = vld [vmem:[#allocation2 + $0x3b0] sm:$0xff]
      %v3290 = vld [vmem:[#allocation2 + $0x3b8] sm:$0xff]
      %v3291 = vld [vmem:[#allocation2 + $0x3c0] sm:$0xff]
      %v3292 = vld [vmem:[#allocation2 + $0x3c8] sm:$0xff]
      %v3293 = vld [vmem:[#allocation2 + $0x3d0] sm:$0xff]
      %v3294 = vld [vmem:[#allocation2 + $0x3d8] sm:$0xff]
      %v3295 = vld [vmem:[#allocation2 + $0x3e0] sm:$0xff]
      %v3296 = vld [vmem:[#allocation2 + $0x3e8] sm:$0xff]
      %v3297 = vld [vmem:[#allocation2 + $0x3f0] sm:$0xff]
      %v3298 = vld [vmem:[#allocation2 + $0x3f8] sm:$0xff]
      %v3299 = vld [vmem:[#allocation2 + $0x400] sm:$0xff]
      %v3300 = vld [vmem:[#allocation2 + $0x408] sm:$0xff]
      %v3301 = vld [vmem:[#allocation2 + $0x410] sm:$0xff]
      %v3302 = vld [vmem:[#allocation2 + $0x418] sm:$0xff]
      %v3303 = vld [vmem:[#allocation2 + $0x420] sm:$0xff]
      %v3304 = vld [vmem:[#allocation2 + $0x428] sm:$0xff]
      %v3305 = vld [vmem:[#allocation2 + $0x430] sm:$0xff]
      %v3306 = vld [vmem:[#allocation2 + $0x438] sm:$0xff]
      %v3307 = vld [vmem:[#allocation2 + $0x440] sm:$0xff]
      %v3308 = vld [vmem:[#allocation2 + $0x448] sm:$0xff]
      %v3309 = vld [vmem:[#allocation2 + $0x450] sm:$0xff]
      %v3310 = vld [vmem:[#allocation2 + $0x458] sm:$0xff]
      %v3311 = vld [vmem:[#allocation2 + $0x460] sm:$0xff]
      %v3312 = vld [vmem:[#allocation2 + $0x468] sm:$0xff]
      %v3313 = vld [vmem:[#allocation2 + $0x470] sm:$0xff]
      %v3314 = vld [vmem:[#allocation2 + $0x478] sm:$0xff]
      %v3315 = vld [vmem:[#allocation2 + $0x480] sm:$0xff]
      %v3316 = vld [vmem:[#allocation2 + $0x488] sm:$0xff]
      %v3317 = vld [vmem:[#allocation2 + $0x490] sm:$0xff]
      %v3318 = vld [vmem:[#allocation2 + $0x498] sm:$0xff]
      %v3319 = vld [vmem:[#allocation2 + $0x4a0] sm:$0xff]
      %v3320 = vld [vmem:[#allocation2 + $0x4a8] sm:$0xff]
      %v3321 = vld [vmem:[#allocation2 + $0x4b0] sm:$0xff]
      %v3322 = vld [vmem:[#allocation2 + $0x4b8] sm:$0xff]
      %v3323 = vld [vmem:[#allocation2 + $0x4c0] sm:$0xff]
      %v3324 = vld [vmem:[#allocation2 + $0x4c8] sm:$0xff]
      %v3325 = vld [vmem:[#allocation2 + $0x4d0] sm:$0xff]
      %v3326 = vld [vmem:[#allocation2 + $0x4d8] sm:$0xff]
      %v3327 = vld [vmem:[#allocation2 + $0x4e0] sm:$0xff]
      %v3328 = vld [vmem:[#allocation2 + $0x4e8] sm:$0xff]
      %v3329 = vld [vmem:[#allocation2 + $0x4f0] sm:$0xff]
      %v3330 = vld [vmem:[#allocation2 + $0x4f8] sm:$0xff]
      %v3331 = vld [vmem:[#allocation2 + $0x500] sm:$0xff]
      %v3332 = vld [vmem:[#allocation2 + $0x508] sm:$0xff]
      %v3333 = vld [vmem:[#allocation2 + $0x510] sm:$0xff]
      %v3334 = vld [vmem:[#allocation2 + $0x518] sm:$0xff]
      %v3335 = vld [vmem:[#allocation2 + $0x520] sm:$0xff]
      %v3336 = vld [vmem:[#allocation2 + $0x528] sm:$0xff]
      %v3337 = vld [vmem:[#allocation2 + $0x530] sm:$0xff]
      %v3338 = vld [vmem:[#allocation2 + $0x538] sm:$0xff]
      %v3339 = vld [vmem:[#allocation2 + $0x540] sm:$0xff]
      %v3340 = vld [vmem:[#allocation2 + $0x548] sm:$0xff]
      %v3341 = vld [vmem:[#allocation2 + $0x550] sm:$0xff]
      %v3342 = vld [vmem:[#allocation2 + $0x558] sm:$0xff]
      %v3343 = vld [vmem:[#allocation2 + $0x560] sm:$0xff]
      %v3344 = vld [vmem:[#allocation2 + $0x568] sm:$0xff]
      %v3345 = vld [vmem:[#allocation2 + $0x570] sm:$0xff]
      %v3346 = vld [vmem:[#allocation2 + $0x578] sm:$0xff]
      %v3347 = vld [vmem:[#allocation2 + $0x580] sm:$0xff]
      %v3348 = vld [vmem:[#allocation2 + $0x588] sm:$0xff]
      %v3349 = vld [vmem:[#allocation2 + $0x590] sm:$0xff]
      %v3350 = vld [vmem:[#allocation2 + $0x598] sm:$0xff]
      %v3351 = vld [vmem:[#allocation2 + $0x5a0] sm:$0xff]
      %v3352 = vld [vmem:[#allocation2 + $0x5a8] sm:$0xff]
      %v3353 = vld [vmem:[#allocation2 + $0x5b0] sm:$0xff]
      %v3354 = vld [vmem:[#allocation2 + $0x5b8] sm:$0xff]
      %v3355 = vld [vmem:[#allocation2 + $0x5c0] sm:$0xff]
      %v3356 = vld [vmem:[#allocation2 + $0x5c8] sm:$0xff]
      %v3357 = vld [vmem:[#allocation2 + $0x5d0] sm:$0xff]
      %v3358 = vld [vmem:[#allocation2 + $0x5d8] sm:$0xff]
      %v3359 = vld [vmem:[#allocation2 + $0x5e0] sm:$0xff]
      %v3360 = vld [vmem:[#allocation2 + $0x5e8] sm:$0xff]
      %v3361 = vld [vmem:[#allocation2 + $0x5f0] sm:$0xff]
      %v3362 = vld [vmem:[#allocation2 + $0x5f8] sm:$0xff]
      %v3363 = vld [vmem:[#allocation2 + $0x600] sm:$0xff]
      %v3364 = vld [vmem:[#allocation2 + $0x608] sm:$0xff]
      %v3365 = vld [vmem:[#allocation2 + $0x610] sm:$0xff]
      %v3366 = vld [vmem:[#allocation2 + $0x618] sm:$0xff]
      %v3367 = vld [vmem:[#allocation2 + $0x620] sm:$0xff]
      %v3368 = vld [vmem:[#allocation2 + $0x628] sm:$0xff]
      %v3369 = vld [vmem:[#allocation2 + $0x630] sm:$0xff]
      %v3370 = vld [vmem:[#allocation2 + $0x638] sm:$0xff]
      %v3371 = vld [vmem:[#allocation2 + $0x640] sm:$0xff]
      %v3372 = vld [vmem:[#allocation2 + $0x648] sm:$0xff]
      %v3373 = vld [vmem:[#allocation2 + $0x650] sm:$0xff]
      %v3374 = vld [vmem:[#allocation2 + $0x658] sm:$0xff]
      %v3375 = vld [vmem:[#allocation2 + $0x660] sm:$0xff]
      %v3376 = vld [vmem:[#allocation2 + $0x668] sm:$0xff]
      %v3377 = vld [vmem:[#allocation2 + $0x670] sm:$0xff]
      %v3378 = vld [vmem:[#allocation2 + $0x678] sm:$0xff]
      %v3379 = vld [vmem:[#allocation2 + $0x680] sm:$0x1f]
      %v3380 = vld [vmem:[#allocation2 + $0x688] sm:$0x1f]
      %v3381 = vld [vmem:[#allocation2 + $0x690] sm:$0x1f]
      %v3382 = vld [vmem:[#allocation2 + $0x698] sm:$0x1f]
      %v3383 = vld [vmem:[#allocation2 + $0x6a0] sm:$0x1f]
      %v3384 = vld [vmem:[#allocation2 + $0x6a8] sm:$0x1f]
      %v3385 = vld [vmem:[#allocation2 + $0x6b0] sm:$0x1f]
      %v3386 = vld [vmem:[#allocation2 + $0x6b8] sm:$0x1f]
      %v3387 = vld [vmem:[#allocation2 + $0x6c0] sm:$0x1f]
      %v3388 = vld [vmem:[#allocation2 + $0x6c8] sm:$0x1f]
      %v3389 = vld [vmem:[#allocation2 + $0x6d0] sm:$0x1f]
      %v3390 = vld [vmem:[#allocation2 + $0x6d8] sm:$0x1f]
      %v3391 = vld [vmem:[#allocation2 + $0x6e0] sm:$0x1f]
      %v3392 = vld [vmem:[#allocation2 + $0x6e8] sm:$0x1f]
      %v3393 = vld [vmem:[#allocation2 + $0x6f0] sm:$0x1f]
      %v3394 = vld [vmem:[#allocation2 + $0x6f8] sm:$0x1f]
      %vm3395 = vcmask 891904
      %v3397 = vsel %vm3395, %v3170, 0
      %vm3399 = vcmask 1044480
      %v3401 = vsel %vm3399, %v3379, 0
      %v3404 = vsel %vm3399, %v3380, 0
      %v3407 = vsel %vm3399, %v3381, 0
      %v3410 = vsel %vm3399, %v3382, 0
      %v3413 = vsel %vm3399, %v3383, 0
      %v3416 = vsel %vm3399, %v3384, 0
      %v3419 = vsel %vm3399, %v3385, 0
      %v3422 = vsel %vm3399, %v3386, 0
      %v3425 = vsel %vm3399, %v3387, 0
      %v3428 = vsel %vm3399, %v3388, 0
      %v3431 = vsel %vm3399, %v3389, 0
      %v3434 = vsel %vm3399, %v3390, 0
      %v3437 = vsel %vm3399, %v3391, 0
      %v3440 = vsel %vm3399, %v3392, 0
      %v3443 = vsel %vm3399, %v3393, 0
      %v3446 = vsel %vm3399, %v3394, 0
      %3448 = vmatpush.msra.mxu0 0.0
      %3449 = vmatpush.msra.mxu0 0.0
      %3450 = vmatpush.msra.mxu0 %v3401
      %3451 = vmatpush.msra.mxu0 %v3363
      %3452 = vmatpush.msra.mxu0 %v3347
      %3453 = vmatpush.msra.mxu0 %v3331
      %3454 = vmatpush.msra.mxu0 %v3315
      %3455 = vmatpush.msra.mxu0 %v3299
      %3456 = vmatpush.msra.mxu0 %v3283
      %3457 = vmatpush.msra.mxu0 %v3267
      %3458 = vmatpush.msra.mxu0 %v3251
      %3459 = vmatpush.msra.mxu0 %v3235
      %3460 = vmatpush.msra.mxu0 %v3219
      %3461 = vmatpush.msra.mxu0 %v3203
      %3462 = vmatpush.msra.mxu0 %v3187
      %3463 = vmatpush.msra.mxu0 %v3171
      %3464 = vmatmul.f32.gmra.mxu0 %v3397
      %v3465 = vpop.f32.mrf.mxu0
      %v3466 = vadd.f32 0.0, %v3465
      %3467 = vdwg.mxu0
      %3468 = vmatpush.msra.mxu0 0.0
      %3469 = vmatpush.msra.mxu0 0.0
      %3470 = vmatpush.msra.mxu0 %v3404
      %3471 = vmatpush.msra.mxu0 %v3364
      %3472 = vmatpush.msra.mxu0 %v3348
      %3473 = vmatpush.msra.mxu0 %v3332
      %3474 = vmatpush.msra.mxu0 %v3316
      %3475 = vmatpush.msra.mxu0 %v3300
      %3476 = vmatpush.msra.mxu0 %v3284
      %3477 = vmatpush.msra.mxu0 %v3268
      %3478 = vmatpush.msra.mxu0 %v3252
      %3479 = vmatpush.msra.mxu0 %v3236
      %3480 = vmatpush.msra.mxu0 %v3220
      %3481 = vmatpush.msra.mxu0 %v3204
      %3482 = vmatpush.msra.mxu0 %v3188
      %3483 = vmatpush.msra.mxu0 %v3172
      %3484 = vmatmul.f32.gmra.mxu0 %v3397
      %v3485 = vpop.f32.mrf.mxu0
      %v3486 = vadd.f32 0.0, %v3485
      %3487 = vdwg.mxu0
      %3488 = vmatpush.msra.mxu0 0.0
      %3489 = vmatpush.msra.mxu0 0.0
      %3490 = vmatpush.msra.mxu0 %v3407
      %3491 = vmatpush.msra.mxu0 %v3365
      %3492 = vmatpush.msra.mxu0 %v3349
      %3493 = vmatpush.msra.mxu0 %v3333
      %3494 = vmatpush.msra.mxu0 %v3317
      %3495 = vmatpush.msra.mxu0 %v3301
      %3496 = vmatpush.msra.mxu0 %v3285
      %3497 = vmatpush.msra.mxu0 %v3269
      %3498 = vmatpush.msra.mxu0 %v3253
      %3499 = vmatpush.msra.mxu0 %v3237
      %3500 = vmatpush.msra.mxu0 %v3221
      %3501 = vmatpush.msra.mxu0 %v3205
      %3502 = vmatpush.msra.mxu0 %v3189
      %3503 = vmatpush.msra.mxu0 %v3173
      %3504 = vmatmul.f32.gmra.mxu0 %v3397
      %v3505 = vpop.f32.mrf.mxu0
      %v3506 = vadd.f32 0.0, %v3505
      %3507 = vdwg.mxu0
      %3508 = vmatpush.msra.mxu0 0.0
      %3509 = vmatpush.msra.mxu0 0.0
      %3510 = vmatpush.msra.mxu0 %v3410
      %3511 = vmatpush.msra.mxu0 %v3366
      %3512 = vmatpush.msra.mxu0 %v3350
      %3513 = vmatpush.msra.mxu0 %v3334
      %3514 = vmatpush.msra.mxu0 %v3318
      %3515 = vmatpush.msra.mxu0 %v3302
      %3516 = vmatpush.msra.mxu0 %v3286
      %3517 = vmatpush.msra.mxu0 %v3270
      %3518 = vmatpush.msra.mxu0 %v3254
      %3519 = vmatpush.msra.mxu0 %v3238
      %3520 = vmatpush.msra.mxu0 %v3222
      %3521 = vmatpush.msra.mxu0 %v3206
      %3522 = vmatpush.msra.mxu0 %v3190
      %3523 = vmatpush.msra.mxu0 %v3174
      %3524 = vmatmul.f32.gmra.mxu0 %v3397
      %v3525 = vpop.f32.mrf.mxu0
      %v3526 = vadd.f32 0.0, %v3525
      %3527 = vdwg.mxu0
      %3528 = vmatpush.msra.mxu0 0.0
      %3529 = vmatpush.msra.mxu0 0.0
      %3530 = vmatpush.msra.mxu0 %v3413
      %3531 = vmatpush.msra.mxu0 %v3367
      %3532 = vmatpush.msra.mxu0 %v3351
      %3533 = vmatpush.msra.mxu0 %v3335
      %3534 = vmatpush.msra.mxu0 %v3319
      %3535 = vmatpush.msra.mxu0 %v3303
      %3536 = vmatpush.msra.mxu0 %v3287
      %3537 = vmatpush.msra.mxu0 %v3271
      %3538 = vmatpush.msra.mxu0 %v3255
      %3539 = vmatpush.msra.mxu0 %v3239
      %3540 = vmatpush.msra.mxu0 %v3223
      %3541 = vmatpush.msra.mxu0 %v3207
      %3542 = vmatpush.msra.mxu0 %v3191
      %3543 = vmatpush.msra.mxu0 %v3175
      %3544 = vmatmul.f32.gmra.mxu0 %v3397
      %v3545 = vpop.f32.mrf.mxu0
      %v3546 = vadd.f32 0.0, %v3545
      %3547 = vdwg.mxu0
      %3548 = vmatpush.msra.mxu0 0.0
      %3549 = vmatpush.msra.mxu0 0.0
      %3550 = vmatpush.msra.mxu0 %v3416
      %3551 = vmatpush.msra.mxu0 %v3368
      %3552 = vmatpush.msra.mxu0 %v3352
      %3553 = vmatpush.msra.mxu0 %v3336
      %3554 = vmatpush.msra.mxu0 %v3320
      %3555 = vmatpush.msra.mxu0 %v3304
      %3556 = vmatpush.msra.mxu0 %v3288
      %3557 = vmatpush.msra.mxu0 %v3272
      %3558 = vmatpush.msra.mxu0 %v3256
      %3559 = vmatpush.msra.mxu0 %v3240
      %3560 = vmatpush.msra.mxu0 %v3224
      %3561 = vmatpush.msra.mxu0 %v3208
      %3562 = vmatpush.msra.mxu0 %v3192
      %3563 = vmatpush.msra.mxu0 %v3176
      %3564 = vmatmul.f32.gmra.mxu0 %v3397
      %v3565 = vpop.f32.mrf.mxu0
      %v3566 = vadd.f32 0.0, %v3565
      %3567 = vdwg.mxu0
      %3568 = vmatpush.msra.mxu0 0.0
      %3569 = vmatpush.msra.mxu0 0.0
      %3570 = vmatpush.msra.mxu0 %v3419
      %3571 = vmatpush.msra.mxu0 %v3369
      %3572 = vmatpush.msra.mxu0 %v3353
      %3573 = vmatpush.msra.mxu0 %v3337
      %3574 = vmatpush.msra.mxu0 %v3321
      %3575 = vmatpush.msra.mxu0 %v3305
      %3576 = vmatpush.msra.mxu0 %v3289
      %3577 = vmatpush.msra.mxu0 %v3273
      %3578 = vmatpush.msra.mxu0 %v3257
      %3579 = vmatpush.msra.mxu0 %v3241
      %3580 = vmatpush.msra.mxu0 %v3225
      %3581 = vmatpush.msra.mxu0 %v3209
      %3582 = vmatpush.msra.mxu0 %v3193
      %3583 = vmatpush.msra.mxu0 %v3177
      %3584 = vmatmul.f32.gmra.mxu0 %v3397
      %v3585 = vpop.f32.mrf.mxu0
      %v3586 = vadd.f32 0.0, %v3585
      %3587 = vdwg.mxu0
      %3588 = vmatpush.msra.mxu0 0.0
      %3589 = vmatpush.msra.mxu0 0.0
      %3590 = vmatpush.msra.mxu0 %v3422
      %3591 = vmatpush.msra.mxu0 %v3370
      %3592 = vmatpush.msra.mxu0 %v3354
      %3593 = vmatpush.msra.mxu0 %v3338
      %3594 = vmatpush.msra.mxu0 %v3322
      %3595 = vmatpush.msra.mxu0 %v3306
      %3596 = vmatpush.msra.mxu0 %v3290
      %3597 = vmatpush.msra.mxu0 %v3274
      %3598 = vmatpush.msra.mxu0 %v3258
      %3599 = vmatpush.msra.mxu0 %v3242
      %3600 = vmatpush.msra.mxu0 %v3226
      %3601 = vmatpush.msra.mxu0 %v3210
      %3602 = vmatpush.msra.mxu0 %v3194
      %3603 = vmatpush.msra.mxu0 %v3178
      %3604 = vmatmul.f32.gmra.mxu0 %v3397
      %v3605 = vpop.f32.mrf.mxu0
      %v3606 = vadd.f32 0.0, %v3605
      %3607 = vdwg.mxu0
      %3608 = vmatpush.msra.mxu0 0.0
      %3609 = vmatpush.msra.mxu0 0.0
      %3610 = vmatpush.msra.mxu0 %v3425
      %3611 = vmatpush.msra.mxu0 %v3371
      %3612 = vmatpush.msra.mxu0 %v3355
      %3613 = vmatpush.msra.mxu0 %v3339
      %3614 = vmatpush.msra.mxu0 %v3323
      %3615 = vmatpush.msra.mxu0 %v3307
      %3616 = vmatpush.msra.mxu0 %v3291
      %3617 = vmatpush.msra.mxu0 %v3275
      %3618 = vmatpush.msra.mxu0 %v3259
      %3619 = vmatpush.msra.mxu0 %v3243
      %3620 = vmatpush.msra.mxu0 %v3227
      %3621 = vmatpush.msra.mxu0 %v3211
      %3622 = vmatpush.msra.mxu0 %v3195
      %3623 = vmatpush.msra.mxu0 %v3179
      %3624 = vmatmul.f32.gmra.mxu0 %v3397
      %v3625 = vpop.f32.mrf.mxu0
      %v3626 = vadd.f32 0.0, %v3625
      %3627 = vdwg.mxu0
      %3628 = vmatpush.msra.mxu0 0.0
      %3629 = vmatpush.msra.mxu0 0.0
      %3630 = vmatpush.msra.mxu0 %v3428
      %3631 = vmatpush.msra.mxu0 %v3372
      %3632 = vmatpush.msra.mxu0 %v3356
      %3633 = vmatpush.msra.mxu0 %v3340
      %3634 = vmatpush.msra.mxu0 %v3324
      %3635 = vmatpush.msra.mxu0 %v3308
      %3636 = vmatpush.msra.mxu0 %v3292
      %3637 = vmatpush.msra.mxu0 %v3276
      %3638 = vmatpush.msra.mxu0 %v3260
      %3639 = vmatpush.msra.mxu0 %v3244
      %3640 = vmatpush.msra.mxu0 %v3228
      %3641 = vmatpush.msra.mxu0 %v3212
      %3642 = vmatpush.msra.mxu0 %v3196
      %3643 = vmatpush.msra.mxu0 %v3180
      %3644 = vmatmul.f32.gmra.mxu0 %v3397
      %v3645 = vpop.f32.mrf.mxu0
      %v3646 = vadd.f32 0.0, %v3645
      %3647 = vdwg.mxu0
      %3648 = vmatpush.msra.mxu0 0.0
      %3649 = vmatpush.msra.mxu0 0.0
      %3650 = vmatpush.msra.mxu0 %v3431
      %3651 = vmatpush.msra.mxu0 %v3373
      %3652 = vmatpush.msra.mxu0 %v3357
      %3653 = vmatpush.msra.mxu0 %v3341
      %3654 = vmatpush.msra.mxu0 %v3325
      %3655 = vmatpush.msra.mxu0 %v3309
      %3656 = vmatpush.msra.mxu0 %v3293
      %3657 = vmatpush.msra.mxu0 %v3277
      %3658 = vmatpush.msra.mxu0 %v3261
      %3659 = vmatpush.msra.mxu0 %v3245
      %3660 = vmatpush.msra.mxu0 %v3229
      %3661 = vmatpush.msra.mxu0 %v3213
      %3662 = vmatpush.msra.mxu0 %v3197
      %3663 = vmatpush.msra.mxu0 %v3181
      %3664 = vmatmul.f32.gmra.mxu0 %v3397
      %v3665 = vpop.f32.mrf.mxu0
      %v3666 = vadd.f32 0.0, %v3665
      %3667 = vdwg.mxu0
      %3668 = vmatpush.msra.mxu0 0.0
      %3669 = vmatpush.msra.mxu0 0.0
      %3670 = vmatpush.msra.mxu0 %v3434
      %3671 = vmatpush.msra.mxu0 %v3374
      %3672 = vmatpush.msra.mxu0 %v3358
      %3673 = vmatpush.msra.mxu0 %v3342
      %3674 = vmatpush.msra.mxu0 %v3326
      %3675 = vmatpush.msra.mxu0 %v3310
      %3676 = vmatpush.msra.mxu0 %v3294
      %3677 = vmatpush.msra.mxu0 %v3278
      %3678 = vmatpush.msra.mxu0 %v3262
      %3679 = vmatpush.msra.mxu0 %v3246
      %3680 = vmatpush.msra.mxu0 %v3230
      %3681 = vmatpush.msra.mxu0 %v3214
      %3682 = vmatpush.msra.mxu0 %v3198
      %3683 = vmatpush.msra.mxu0 %v3182
      %3684 = vmatmul.f32.gmra.mxu0 %v3397
      %v3685 = vpop.f32.mrf.mxu0
      %v3686 = vadd.f32 0.0, %v3685
      %3687 = vdwg.mxu0
      %3688 = vmatpush.msra.mxu0 0.0
      %3689 = vmatpush.msra.mxu0 0.0
      %3690 = vmatpush.msra.mxu0 %v3437
      %3691 = vmatpush.msra.mxu0 %v3375
      %3692 = vmatpush.msra.mxu0 %v3359
      %3693 = vmatpush.msra.mxu0 %v3343
      %3694 = vmatpush.msra.mxu0 %v3327
      %3695 = vmatpush.msra.mxu0 %v3311
      %3696 = vmatpush.msra.mxu0 %v3295
      %3697 = vmatpush.msra.mxu0 %v3279
      %3698 = vmatpush.msra.mxu0 %v3263
      %3699 = vmatpush.msra.mxu0 %v3247
      %3700 = vmatpush.msra.mxu0 %v3231
      %3701 = vmatpush.msra.mxu0 %v3215
      %3702 = vmatpush.msra.mxu0 %v3199
      %3703 = vmatpush.msra.mxu0 %v3183
      %3704 = vmatmul.f32.gmra.mxu0 %v3397
      %v3705 = vpop.f32.mrf.mxu0
      %v3706 = vadd.f32 0.0, %v3705
      %3707 = vdwg.mxu0
      %3708 = vmatpush.msra.mxu0 0.0
      %3709 = vmatpush.msra.mxu0 0.0
      %3710 = vmatpush.msra.mxu0 %v3440
      %3711 = vmatpush.msra.mxu0 %v3376
      %3712 = vmatpush.msra.mxu0 %v3360
      %3713 = vmatpush.msra.mxu0 %v3344
      %3714 = vmatpush.msra.mxu0 %v3328
      %3715 = vmatpush.msra.mxu0 %v3312
      %3716 = vmatpush.msra.mxu0 %v3296
      %3717 = vmatpush.msra.mxu0 %v3280
      %3718 = vmatpush.msra.mxu0 %v3264
      %3719 = vmatpush.msra.mxu0 %v3248
      %3720 = vmatpush.msra.mxu0 %v3232
      %3721 = vmatpush.msra.mxu0 %v3216
      %3722 = vmatpush.msra.mxu0 %v3200
      %3723 = vmatpush.msra.mxu0 %v3184
      %3724 = vmatmul.f32.gmra.mxu0 %v3397
      %v3725 = vpop.f32.mrf.mxu0
      %v3726 = vadd.f32 0.0, %v3725
      %3727 = vdwg.mxu0
      %3728 = vmatpush.msra.mxu0 0.0
      %3729 = vmatpush.msra.mxu0 0.0
      %3730 = vmatpush.msra.mxu0 %v3443
      %3731 = vmatpush.msra.mxu0 %v3377
      %3732 = vmatpush.msra.mxu0 %v3361
      %3733 = vmatpush.msra.mxu0 %v3345
      %3734 = vmatpush.msra.mxu0 %v3329
      %3735 = vmatpush.msra.mxu0 %v3313
      %3736 = vmatpush.msra.mxu0 %v3297
      %3737 = vmatpush.msra.mxu0 %v3281
      %3738 = vmatpush.msra.mxu0 %v3265
      %3739 = vmatpush.msra.mxu0 %v3249
      %3740 = vmatpush.msra.mxu0 %v3233
      %3741 = vmatpush.msra.mxu0 %v3217
      %3742 = vmatpush.msra.mxu0 %v3201
      %3743 = vmatpush.msra.mxu0 %v3185
      %3744 = vmatmul.f32.gmra.mxu0 %v3397
      %v3745 = vpop.f32.mrf.mxu0
      %v3746 = vadd.f32 0.0, %v3745
      %3747 = vdwg.mxu0
      %3748 = vmatpush.msra.mxu0 0.0
      %3749 = vmatpush.msra.mxu0 0.0
      %3750 = vmatpush.msra.mxu0 %v3446
      %3751 = vmatpush.msra.mxu0 %v3378
      %3752 = vmatpush.msra.mxu0 %v3362
      %3753 = vmatpush.msra.mxu0 %v3346
      %3754 = vmatpush.msra.mxu0 %v3330
      %3755 = vmatpush.msra.mxu0 %v3314
      %3756 = vmatpush.msra.mxu0 %v3298
      %3757 = vmatpush.msra.mxu0 %v3282
      %3758 = vmatpush.msra.mxu0 %v3266
      %3759 = vmatpush.msra.mxu0 %v3250
      %3760 = vmatpush.msra.mxu0 %v3234
      %3761 = vmatpush.msra.mxu0 %v3218
      %3762 = vmatpush.msra.mxu0 %v3202
      %3763 = vmatpush.msra.mxu0 %v3186
      %3764 = vmatmul.f32.gmra.mxu0 %v3397
      %v3765 = vpop.f32.mrf.mxu0
      %v3766 = vadd.f32 0.0, %v3765
      %3767 = vdwg.mxu0
      %v3784 = vrot.slane %v3486, 4
      %v3785 = vrot.slane %v3526, 4
      %v3786 = vrot.slane %v3566, 4
      %v3787 = vrot.slane %v3606, 4
      %v3788 = vrot.slane %v3646, 4
      %v3789 = vrot.slane %v3686, 4
      %v3790 = vrot.slane %v3726, 4
      %v3791 = vrot.slane %v3766, 4
      %vm3792 = vcmask 1043456
      %v3793 = vsel %vm3792, %v3466, %v3784
      %v3794 = vsel %vm3792, %v3506, %v3785
      %v3795 = vsel %vm3792, %v3546, %v3786
      %v3796 = vsel %vm3792, %v3586, %v3787
      %v3797 = vsel %vm3792, %v3626, %v3788
      %v3798 = vsel %vm3792, %v3666, %v3789
      %v3799 = vsel %vm3792, %v3706, %v3790
      %v3800 = vsel %vm3792, %v3746, %v3791
      %3809 = vst [vmem:[%s143] sm:$0xff] %v3793
      %3810 = vst [vmem:[%s143 + $0x8] sm:$0xff] %v3794
      %3811 = vst [vmem:[%s143 + $0x10] sm:$0xff] %v3795
      %3812 = vst [vmem:[%s143 + $0x18] sm:$0xff] %v3796
      %3813 = vst [vmem:[%s143 + $0x20] sm:$0xff] %v3797
      %3814 = vst [vmem:[%s143 + $0x28] sm:$0xff] %v3798
      %3815 = vst [vmem:[%s143 + $0x30] sm:$0xff] %v3799
      %3816 = vst [vmem:[%s143 + $0x38] sm:$0xff] %v3800
      %p3817 = scmp.lt.s32.totalorder %s13, 1
      %s3818 = scalar_select %p3817, %s13, 1
      %s3819 = smul.addr %s3818, 16
      %s3820 = smul.addr %s3819, 4
      %s3821 = scalar_lea.vmem %s2, %s3820
      // Predicated region
      $region29: #{_lambda_.1} parent=27 // pred_check
        %p3822 = pneg %p78
      $region30: #{_lambda_.1} parent=27 // pred_check_branch
        %3824 = sbr.rel (%p3822) target = $region32
      $region31: #{_lambda_.1} parent=27 // pred_region
        _
      $region32: #{_lambda_.1} parent=27 // pred_fallthru
        _
    $region28: #{_lambda_.1} parent=5 // pred_fallthru
      _
    %p3825 = scmp.le.s32.totalorder 2, %s8
    // Predicated region
    $region33: #{_lambda_.1} parent=5 // pred_check
      %p3826 = pneg %p3825
    $region34: #{_lambda_.1} parent=5 // pred_check_branch
      %3828 = sbr.rel (%p3826) target = $region36
    $region35: #{_lambda_.1} parent=5 // pred_region
      %s3829 = ssub.s32 %s8, 2
      // Predicated region
      $region37: #{_lambda_.1} parent=35 // pred_check
        %p3830 = pneg %p84
      $region38: #{_lambda_.1} parent=35 // pred_check_branch
        %3832 = sbr.rel (%p3830) target = $region40
      $region39: #{_lambda_.1} parent=35 // pred_region
        %p3833 = scmp.lt.s32.totalorder %s14, 1
        %s3834 = scalar_select %p3833, %s14, 1
        %s3835 = smul.addr %s3834, 16
        %s3836 = smul.addr %s3835, 4
        %s3837 = scalar_lea.vmem %s2, %s3836
      $region40: #{_lambda_.1} parent=35 // pred_fallthru
        _
    $region36: #{_lambda_.1} parent=5 // pred_fallthru
      _
  $region6: #{_lambda_.1} parent=0 // loop_footer
    %s12 = sadd.s32 1, %s8
  $region7: #{_lambda_.1} parent=0 // loop_footer_branch
    %7 = sbr.rel target = $region3
  $region8: #{_lambda_.1} parent=0 // loop_exit
    _

</llo_original>
